<compile_context>
chip_gen: v6e
topology: v6e:2x2x1
jax: 0.10.0
libtpu: 0.0.40
codegen_flags: <defaults>
</compile_context>

<pallas_src>
import functools

import jax
import jax.numpy as jnp
from jax import lax
from jax.experimental import pallas as pl
from jax.experimental.pallas import tpu as pltpu


def _round_up(x, m):
    return (x + m - 1) // m * m


def _codebook_kernel(z_ref, cb_ref, cbsq_ref, zq_ref, code_ref, sse_ref,
                     *, matmul_dtype):
    # z_ref   : (tR, D)  row tile of the flattened (B*T, D) input
    # cb_ref  : (K, D)   full codebook (constant block index -> stays resident)
    # cbsq_ref: (1, K)   precomputed codebook row norms sum(cb*cb, axis=-1)
    # zq_ref  : (tR, D)  quantized rows
    # code_ref: (1, tR)  int32 code indices (lane-dense store)
    # sse_ref : (1, tR)  per-row sum of squared error (lane-dense store)
    z = z_ref[...]                       # (tR, D) f32
    cb = cb_ref[...]                     # (K, D)  f32
    tR = z.shape[0]
    K = cb.shape[0]

    # argmin_k |z - cb_k|^2 == argmin_k (|cb_k|^2 - 2 z.cb_k); |z|^2 is a
    # per-row constant and is dropped (same argmin as the PyTorch dist.min(1)).
    cross = lax.dot_general(
        z.astype(matmul_dtype), cb.astype(matmul_dtype),
        dimension_numbers=(((1,), (1,)), ((), ())),
        preferred_element_type=jnp.float32)               # (tR, K) on the MXU
    score = cbsq_ref[...] - 2.0 * cross                    # (tR, K) VPU
    idx = jnp.argmin(score, axis=1).astype(jnp.int32)      # (tR,)  XLU lane reduce

    # De-quantize via one-hot matmul (exact row gather, MXU-friendly; for
    # moderate K this is ~free next to the cross-matmul above).
    # TODO(synk): for very large codebooks (K >~ 4k, v7x 64 MiB VMEM) stream
    # the codebook over a K grid axis with an online running argmin so only a
    # (tK, D) slice is resident.
    onehot = (lax.broadcasted_iota(jnp.int32, (tR, K), 1) == idx[:, None])
    zq = jnp.dot(onehot.astype(cb.dtype), cb,
                 preferred_element_type=jnp.float32)        # (tR, D)

    zq_ref[...] = zq.astype(zq_ref.dtype)
    code_ref[...] = idx.reshape(1, tR)

    # Direct per-row SSE (numerically robust vs. the expanded-distance form).
    diff = zq - z
    sse_ref[...] = jnp.sum(diff * diff, axis=1).reshape(1, tR)


@functools.partial(jax.jit, static_argnames=("row_tile", "bf16_matmul"))
def codebook_forward(z_e, codebook, *, row_tile=256, bf16_matmul=False):
    """Eval-mode Codebook forward: (z_q, code, codebook_loss, commitment_loss).

    row_tile:    rows of flattened (B*T, D) per grid step.  256 works well on
                 v5e/v6e/v7x; must be a multiple of 128 whenever B*T exceeds it
                 (keeps code/SSE stores lane-dense / unmasked).
    bf16_matmul: optionally run the distance cross-matmul in bf16 (v6e/v7x MXU
                 native); may flip near-tie argmins, so off by default.
    """
    B, T, D = z_e.shape
    K, Dc = codebook.shape
    assert Dc == D
    BT = B * T

    # Row tile: multiple of 8 (sublane granularity); when there is more than
    # one tile, row_tile (multiple of 128) keeps code/SSE stores unmasked.
    tR = min(row_tile, _round_up(BT, 8))
    BT_pad = _round_up(BT, tR)
    n_tiles = BT_pad // tR

    z_flat = z_e.reshape(BT, D)
    if BT_pad != BT:
        z_flat = jnp.pad(z_flat, ((0, BT_pad - BT), (0, 0)))

    # Hoisted: codebook row norms computed once in the wrapper, not per step.
    cb_sq = jnp.sum(codebook * codebook, axis=1)[None, :]        # (1, K)

    kernel = functools.partial(
        _codebook_kernel,
        matmul_dtype=jnp.bfloat16 if bf16_matmul else jnp.float32)

    zq_flat, code2, sse2 = pl.pallas_call(
        kernel,
        out_shape=(
            jax.ShapeDtypeStruct((BT_pad, D), z_e.dtype),
            jax.ShapeDtypeStruct((1, BT_pad), jnp.int32),
            jax.ShapeDtypeStruct((1, BT_pad), jnp.float32),
        ),
        grid_spec=pltpu.PrefetchScalarGridSpec(
            num_scalar_prefetch=0,
            grid=(n_tiles,),
            in_specs=[
                pl.BlockSpec((tR, D), lambda i: (i, 0)),
                pl.BlockSpec((K, D), lambda i: (0, 0)),
                pl.BlockSpec((1, K), lambda i: (0, 0)),
            ],
            out_specs=[
                pl.BlockSpec((tR, D), lambda i: (i, 0)),
                pl.BlockSpec((1, tR), lambda i: (0, i)),
                pl.BlockSpec((1, tR), lambda i: (0, i)),
            ],
        ),
        compiler_params=pltpu.CompilerParams(
            dimension_semantics=("parallel",)),
    )(z_flat, codebook, cb_sq)

    zq = zq_flat[:BT].reshape(B, T, D)
    code = code2[0, :BT].reshape(B, T)
    sse = sse2[0, :BT].reshape(B, T)
    loss = jnp.sum(sse, axis=1) / jnp.float32(T * D)   # per-batch MSE over (T, D)

    # Eval mode: commitment_loss == codebook_loss (they only differ in grads).
    # TODO(synk): training-mode straight-through estimator and the distinct
    # commitment/codebook gradients are autograd semantics, not forward compute.
    # TODO(synk): l2norm=True variant (normalize z and codebook before the
    # distance, gather from the raw codebook) is not wired up; module default
    # (l2norm=False) is covered.
    return zq, code, loss, loss


def _reference_forward(z_e, codebook):
    """Pure-JAX reference mirroring the PyTorch module (eval mode)."""
    B, T, D = z_e.shape
    z_flat = z_e.reshape(B * T, D)
    cb_sq = jnp.sum(codebook ** 2, axis=1)[None, :]
    # |z|^2 is a per-row constant -> same argmin as the module's full distance.
    cross = jnp.dot(z_flat, codebook.T, precision=lax.Precision.HIGHEST)
    score = cb_sq - 2.0 * cross
    idx = jnp.argmin(score, axis=1).astype(jnp.int32).reshape(B, T)
    z_q = codebook[idx]
    loss = jnp.mean((z_q - z_e) ** 2, axis=(1, 2))
    return z_q, idx, loss, loss


if __name__ == "__main__":
    # Small deterministic shapes consistent with the module's forward.
    # T=200 makes B*T=400 a non-multiple of the row tile, exercising both the
    # multi-tile path (BT_pad=512, 2 grid steps) and the padding path.
    B, T, D, K = 2, 200, 128, 256

    key = jax.random.PRNGKey(0)
    k_emb, k_z = jax.random.split(key)

    # nn.init.kaiming_normal_ on (K, D): std = sqrt(2 / fan_in) = sqrt(2 / D)
    codebook = jax.random.normal(k_emb, (K, D), dtype=jnp.float32) * jnp.sqrt(2.0 / D)
    z_e = jax.random.normal(k_z, (B, T, D), dtype=jnp.float32)

    out = codebook_forward(z_e, codebook)
    jax.block_until_ready(out)
    z_q, code, codebook_loss, commitment_loss = out

    # Sanity-check against the pure-JAX reference.
    z_q_r, code_r, loss_r, _ = _reference_forward(z_e, codebook)
    assert z_q.shape == (B, T, D) and code.shape == (B, T)
    assert codebook_loss.shape == (B,) and commitment_loss.shape == (B,)
    assert jnp.array_equal(code, code_r)
    assert jnp.allclose(z_q, z_q_r, atol=1e-5, rtol=1e-5)
    assert jnp.allclose(codebook_loss, loss_r, atol=1e-5, rtol=1e-5)
    assert jnp.allclose(commitment_loss, loss_r, atol=1e-5, rtol=1e-5)

    print("KERNEL_OK")
</pallas_src>

<mosaic_0001>
module attributes {stable_mosaic.version = 11 : i64} {
  func.func @_codebook_kernel(%arg0: i32, %arg1: memref<256x128xf32, #tpu.memory_space<vmem>>, %arg2: memref<256x128xf32, #tpu.memory_space<vmem>>, %arg3: memref<1x256xf32, #tpu.memory_space<vmem>>, %arg4: memref<256x128xf32, #tpu.memory_space<vmem>>, %arg5: memref<1x256xi32, #tpu.memory_space<vmem>>, %arg6: memref<1x256xf32, #tpu.memory_space<vmem>>) attributes {dimension_semantics = [#tpu.dimension_semantics<parallel>], iteration_bounds = array<i64: 2>, scalar_prefetch = 0 : i64, scratch_operands = 0 : i64, tpu.core_type = #tpu.core_type<tc>, window_params = [{transform_indices = @transform_0, window_bounds = array<i64: 256, 128>}, {pipeline_mode = #tpu.pipeline_mode<synchronous>, transform_indices = @transform_1, window_bounds = array<i64: 256, 128>}, {pipeline_mode = #tpu.pipeline_mode<synchronous>, transform_indices = @transform_2, window_bounds = array<i64: 1, 256>}, {transform_indices = @transform_3, window_bounds = array<i64: 256, 128>}, {transform_indices = @transform_4, window_bounds = array<i64: 1, 256>}, {transform_indices = @transform_5, window_bounds = array<i64: 1, 256>}]} {
    %c0 = arith.constant 0 : index
    %c0_0 = arith.constant 0 : index
    %0 = vector.load %arg1[%c0, %c0_0] : memref<256x128xf32, #tpu.memory_space<vmem>>, vector<256x128xf32>
    %c0_1 = arith.constant 0 : index
    %c0_2 = arith.constant 0 : index
    %1 = vector.load %arg2[%c0_1, %c0_2] : memref<256x128xf32, #tpu.memory_space<vmem>>, vector<256x128xf32>
    %cst = arith.constant dense<0.000000e+00> : vector<256x256xf32>
    %2 = tpu.matmul %0, %1, %cst {dimension_numbers = #tpu.dot_dimension_numbers<[1], [1], [0], [0], [0, 0, 1, 0], [], []>} : vector<256x128xf32>, vector<256x128xf32>, vector<256x256xf32> -> vector<256x256xf32>
    %c0_3 = arith.constant 0 : index
    %c0_4 = arith.constant 0 : index
    %3 = vector.load %arg3[%c0_3, %c0_4] : memref<1x256xf32, #tpu.memory_space<vmem>>, vector<1x256xf32>
    %cst_5 = arith.constant 2.000000e+00 : f32
    %4 = vector.broadcast %cst_5 : f32 to vector<256x256xf32>
    %5 = arith.mulf %4, %2 : vector<256x256xf32>
    %6 = vector.broadcast %3 : vector<1x256xf32> to vector<256x256xf32>
    %7 = arith.subf %6, %5 : vector<256x256xf32>
    %8 = tpu.reduce_index %7 {axis = 1 : i32, kind = #tpu.reduction_kind<arg_min>} : vector<256x256xf32> -> vector<256xi32>
    %9 = tpu.iota {dimensions = array<i32: 1>} : vector<256x256xi32>
    %10 = vector.shape_cast %8 : vector<256xi32> to vector<256x1xi32>
    %11 = vector.broadcast %10 : vector<256x1xi32> to vector<256x256xi32>
    %12 = arith.cmpi eq, %9, %11 : vector<256x256xi32>
    %13 = arith.extui %12 : vector<256x256xi1> to vector<256x256xi32>
    %14 = arith.sitofp %13 : vector<256x256xi32> to vector<256x256xf32>
    %cst_6 = arith.constant dense<0.000000e+00> : vector<256x128xf32>
    %15 = tpu.matmul %14, %1, %cst_6 {dimension_numbers = #tpu.dot_dimension_numbers<[1], [0], [0], [1], [0, 0, 1, 1], [], []>} : vector<256x256xf32>, vector<256x128xf32>, vector<256x128xf32> -> vector<256x128xf32>
    %c0_7 = arith.constant 0 : index
    %c0_8 = arith.constant 0 : index
    %16 = vector.load %arg4[%c0_7, %c0_8] : memref<256x128xf32, #tpu.memory_space<vmem>>, vector<256x128xf32>
    tpu.vector_store %arg4[%c0_7, %c0_8], %15 {strides = array<i32>} : memref<256x128xf32, #tpu.memory_space<vmem>>, vector<256x128xf32>,
    %17 = vector.shape_cast %8 : vector<256xi32> to vector<1x256xi32>
    %c0_9 = arith.constant 0 : index
    %c0_10 = arith.constant 0 : index
    %18 = vector.load %arg5[%c0_9, %c0_10] : memref<1x256xi32, #tpu.memory_space<vmem>>, vector<1x256xi32>
    tpu.vector_store %arg5[%c0_9, %c0_10], %17 {strides = array<i32>} : memref<1x256xi32, #tpu.memory_space<vmem>>, vector<1x256xi32>,
    %19 = arith.subf %15, %0 : vector<256x128xf32>
    %20 = arith.mulf %19, %19 : vector<256x128xf32>
    %cst_11 = arith.constant dense<0.000000e+00> : vector<256xf32>
    %21 = vector.multi_reduction <add>, %20, %cst_11 [1] : vector<256x128xf32> to vector<256xf32>
    %22 = vector.shape_cast %21 : vector<256xf32> to vector<1x256xf32>
    %c0_12 = arith.constant 0 : index
    %c0_13 = arith.constant 0 : index
    %23 = vector.load %arg6[%c0_12, %c0_13] : memref<1x256xf32, #tpu.memory_space<vmem>>, vector<1x256xf32>
    tpu.vector_store %arg6[%c0_12, %c0_13], %22 {strides = array<i32>} : memref<1x256xf32, #tpu.memory_space<vmem>>, vector<1x256xf32>,
    return
  }
  func.func @transform_0(%arg0: i32) -> (i32, i32) {
    %c0_i32 = arith.constant 0 : i32
    %c0_i32_0 = arith.constant 0 : i32
    return %arg0, %c0_i32 : i32, i32
  }
  func.func @transform_1(%arg0: i32) -> (i32, i32) {
    %c0_i32 = arith.constant 0 : i32
    %c0_i32_0 = arith.constant 0 : i32
    %c0_i32_1 = arith.constant 0 : i32
    return %c0_i32, %c0_i32_0 : i32, i32
  }
  func.func @transform_2(%arg0: i32) -> (i32, i32) {
    %c0_i32 = arith.constant 0 : i32
    %c0_i32_0 = arith.constant 0 : i32
    %c0_i32_1 = arith.constant 0 : i32
    return %c0_i32, %c0_i32_0 : i32, i32
  }
  func.func @transform_3(%arg0: i32) -> (i32, i32) {
    %c0_i32 = arith.constant 0 : i32
    %c0_i32_0 = arith.constant 0 : i32
    return %arg0, %c0_i32 : i32, i32
  }
  func.func @transform_4(%arg0: i32) -> (i32, i32) {
    %c0_i32 = arith.constant 0 : i32
    %c0_i32_0 = arith.constant 0 : i32
    return %c0_i32, %arg0 : i32, i32
  }
  func.func @transform_5(%arg0: i32) -> (i32, i32) {
    %c0_i32 = arith.constant 0 : i32
    %c0_i32_0 = arith.constant 0 : i32
    return %c0_i32, %arg0 : i32, i32
  }
}

</mosaic_0001>

<llo_original>
// kernel: squeeze.3
$region0: #{squeeze.3}
  %s0 = inlined_call_operand.vmem [shape: f32[400], index: 0, kind: input, shape index: {}]
  %s1 = inlined_call_operand.vmem [shape: f32[2,200], index: 1, kind: output, shape index: {}]
  $region1: #{squeeze.3} parent=0
    #allocation0 [shape = 'u8[8192]{0}', space=vmem, size = 0x2000, scoped, tag = 'scoped mem for output reshape']
    #allocation1 [shape = 'u8[4096]{0}', space=vmem, size = 0x1000, scoped, tag = 'scoped mem for input reshape']
    %s3 = sshll.u32 1, 4
    %s4 = ssub.s32 %s3, 1
    %v5 = vld [vmem:[%s0] sm:%s4]
    %6 = vst [vmem:[#allocation1] sm:%s4] %v5
    %s7 = scalar_lea.vmem [#allocation1], 1
    %v8 = vld [vmem:[%s7] sm:$0x1]
    %vm9 = vcmask 588800
    %s10 = scalar_lea.vmem [#allocation0], 8
    %11 = vst.msk [vmem:[%s10] sm:$0x1] %vm9, %v8
    %v12 = vld [vmem:[#allocation1] sm:$0x1]
    %13 = vst [vmem:[#allocation0] sm:$0x1] %v12
    %s14 = scalar_lea.vmem [#allocation1], 1
    %v15 = vld [vmem:[%s14] sm:$0x3]
    %s16 = scalar_lea.vmem [#allocation1], 3
    %v17 = vld [vmem:[%s16] sm:$0x1]
    %vm18 = vcmask 588800
    %v19 = vsel %vm18, %v17, %v15
    %20 = vrot.lane.b32.xlu0 %v19, 56
    %v21 = vpop.permute.xlu0 %20
    %vm22 = vcmask 457728
    %s23 = scalar_lea.vmem [#allocation0], 1
    %24 = vst.msk [vmem:[%s23] ss:$8 sm:$0x3] %vm22, %v21
    %vm25 = vcmask 589248
    %s26 = scalar_lea.vmem [#allocation0], 9
    %27 = vst.msk [vmem:[%s26] sm:$0x1] %vm25, %v21
    %s28 = scalar_lea.vmem [#allocation1], 2
    %v29 = vld [vmem:[%s28] sm:$0x1]
    %30 = vrot.lane.b32.xlu0 %v29, 56
    %v31 = vpop.permute.xlu0 %30
    %vm32 = vcmask 1048000
    %s33 = scalar_lea.vmem [#allocation0], 1
    %34 = vst.msk [vmem:[%s33] sm:$0x1] %vm32, %v31
    %s36 = sshll.u32 1, 2
    %s37 = ssub.s32 %s36, 1
    %v39 = vld [vmem:[#allocation0] sm:%s37]
    %s40 = sshll.u32 1, 2
    %s41 = ssub.s32 %s40, 1
    %42 = vst [vmem:[%s1] sm:%s41] %v39
    %s43 = scalar_lea.vmem [#allocation0], 8
    %v44 = vld [vmem:[%s43] sm:%s37]
    %s45 = sshll.u32 1, 2
    %s46 = ssub.s32 %s45, 1
    %s47 = scalar_lea.vmem %s1, 2
    %48 = vst [vmem:[%s47] sm:%s46] %v44

// kernel: squeeze.2
$region0: #{squeeze.2}
  %s0 = inlined_call_operand.vmem [shape: s32[400], index: 0, kind: input, shape index: {}]
  %s1 = inlined_call_operand.hbm [shape: s32[2,200], index: 1, kind: output, shape index: {}]
  $region1: #{squeeze.2} parent=0
    #allocation0 [shape = 'u8[2048]{0}', space=vmem, size = 0x800, scoped, tag = 'operand span for operand 1']
    #allocation1 [shape = 's32[1]{0}', space=sflag, size = 0x4, scoped, tag = 'scoped memory for squeeze.2']
    #allocation2 [shape = 'u8[8192]{0}', space=vmem, size = 0x2000, scoped, tag = 'scoped mem for output reshape']
    #allocation3 [shape = 'u8[4096]{0}', space=vmem, size = 0x1000, scoped, tag = 'scoped mem for input reshape']
    %2 = vsyncpa [#allocation1], 0
    %s4 = sshll.u32 1, 4
    %s5 = ssub.s32 %s4, 1
    %v6 = vld [vmem:[%s0] sm:%s5]
    %7 = vst [vmem:[#allocation3] sm:%s5] %v6
    %s8 = scalar_lea.vmem [#allocation3], 1
    %v9 = vld [vmem:[%s8] sm:$0x1]
    %vm10 = vcmask 588800
    %s11 = scalar_lea.vmem [#allocation2], 8
    %12 = vst.msk [vmem:[%s11] sm:$0x1] %vm10, %v9
    %v13 = vld [vmem:[#allocation3] sm:$0x1]
    %14 = vst [vmem:[#allocation2] sm:$0x1] %v13
    %s15 = scalar_lea.vmem [#allocation3], 1
    %v16 = vld [vmem:[%s15] sm:$0x3]
    %s17 = scalar_lea.vmem [#allocation3], 3
    %v18 = vld [vmem:[%s17] sm:$0x1]
    %vm19 = vcmask 588800
    %v20 = vsel %vm19, %v18, %v16
    %21 = vrot.lane.b32.xlu0 %v20, 56
    %v22 = vpop.permute.xlu0 %21
    %vm23 = vcmask 457728
    %s24 = scalar_lea.vmem [#allocation2], 1
    %25 = vst.msk [vmem:[%s24] ss:$8 sm:$0x3] %vm23, %v22
    %vm26 = vcmask 589248
    %s27 = scalar_lea.vmem [#allocation2], 9
    %28 = vst.msk [vmem:[%s27] sm:$0x1] %vm26, %v22
    %s29 = scalar_lea.vmem [#allocation3], 2
    %v30 = vld [vmem:[%s29] sm:$0x1]
    %31 = vrot.lane.b32.xlu0 %v30, 56
    %v32 = vpop.permute.xlu0 %31
    %vm33 = vcmask 1048000
    %s34 = scalar_lea.vmem [#allocation2], 1
    %35 = vst.msk [vmem:[%s34] sm:$0x1] %vm33, %v32
    %s37 = sshll.u32 1, 2
    %s38 = ssub.s32 %s37, 1
    %v40 = vld [vmem:[#allocation2] sm:%s38]
    %s41 = sshll.u32 1, 2
    %s42 = ssub.s32 %s41, 1
    %43 = vst [vmem:[#allocation0] sm:%s42] %v40
    %s44 = scalar_lea.vmem [#allocation2], 8
    %v45 = vld [vmem:[%s44] sm:%s38]
    %s46 = sshll.u32 1, 2
    %s47 = ssub.s32 %s46, 1
    %s48 = scalar_lea.vmem [#allocation0], 2
    %49 = vst [vmem:[%s48] sm:%s47] %v45
    %s51 = ssub.s32 64, 64
    %52 = vsyncadd [#allocation1], %s51
    %s54 = sshll.u32 [#allocation0], 4
    %s55 = int_to_ptr.vmem [resolvable:$true] %s54
    %57 = dma.vmem_to_hbm [thread:$0]  %s55, 64, %s1, [#allocation1]
    %58 = dma.done [#allocation1], 64
    %59 = vsyncpa [#allocation1], 1

// kernel: codebook_forward.1
$region0: #{codebook_forward.1}
  #allocation0 [shape = 'u32[]', space=smem, size = 0x4, offset = 0x4, fixed_abs, tag = 'smem constant byte address 0x4 - core index']
  #allocation1 [shape = 'u32[144,128]{1,0:T(1,128)}', space=vmem, size = 0x12000, scoped, tag = 'internal scratch']
  %s0 = inlined_call_operand.vmem [shape: f32[512,128], index: 0, kind: input, shape index: {}]
  %s1 = inlined_call_operand.vmem [shape: f32[256,128], index: 1, kind: input, shape index: {}]
  %s2 = inlined_call_operand.vmem [shape: f32[1,256], index: 2, kind: input, shape index: {}]
  %s3 = inlined_call_operand.vmem [shape: f32[512,128], index: 3, kind: output, shape index: {0}]
  %s4 = inlined_call_operand.vmem [shape: s32[1,512], index: 4, kind: output, shape index: {1}]
  %s5 = inlined_call_operand.vmem [shape: f32[1,512], index: 5, kind: output, shape index: {2}]
  %6 = xla_tuple %s3, %s4, %s5
  %s7 = sld [smem:[#allocation0]]
  $region61: #{codebook_forward.1} parent=0
    _
  %s9 = ssub.s32 1, %s7
  %s10 = scalar_select 0, %s9, %s7
  loop: start=0, step=1, limit=4
  $region2: #{codebook_forward.1} parent=0 // loop_pre_header
    _
  $region3: #{codebook_forward.1} parent=0 // loop_header
    %s12 = sphi 0, %s16
    %p13 = scmp.ge.s32.totalorder %s12, 4
    %s22 = sphi 0, %s24
    %s25 = sphi 0, %s22
    %s26 = sphi 0, %s25
    %s42 = sphi 0, %s26
    %s46 = sphi 0, %s46
    %s48 = sphi 0, %s46
    %s49 = sphi 0, %s48
    %s63 = sphi 0, %s49
    %s67 = sphi 0, %s67
    %s69 = sphi 0, %s67
    %s70 = sphi 0, %s69
    %s84 = sphi 0, %s70
    %s90 = sphi 0, %s92
    %s93 = sphi 0, %s90
    %s94 = sphi 0, %s93
    %s110 = sphi 0, %s94
    %s116 = sphi 0, %s118
    %s119 = sphi 0, %s116
    %s120 = sphi 0, %s119
    %s136 = sphi 0, %s120
    %s142 = sphi 0, %s144
    %s145 = sphi 0, %s142
    %s146 = sphi 0, %s145
    %s162 = sphi 0, %s146
  $region4: #{codebook_forward.1} parent=0 // loop_header_branch
    %15 = sbr.rel (%p13) target = $region8
  $region5: #{codebook_forward.1} parent=0 // loop_body
    %s17 = ssub.s32 %s12, 1
    %s18 = ssub.s32 %s12, 2
    %s19 = sadd.s32 %s12, 1
    %s20 = ssub.s32 %s12, %s19
    %p21 = scmp.eq.s32.totalorder %s20, 0
    %s23 = sadd.s32 %s22, 1
    %s24 = scalar_select %p21, %s22, %s23
    %p27 = pneg %p21
    %p28 = scmp.eq.s32.totalorder %s12, 1
    %p29 = por %p27, %p28
    %p30 = scmp.ne.s32.totalorder %s22, %s25
    %p31 = scmp.eq.s32.totalorder %s12, 0
    %p32 = por %p30, %p31
    %p33 = scmp.ne.s32.totalorder %s22, %s25
    %p34 = scmp.eq.s32.totalorder %s17, 1
    %p35 = por %p33, %p34
    %p36 = scmp.ne.s32.totalorder %s25, %s26
    %p37 = scmp.eq.s32.totalorder %s17, 0
    %p38 = por %p36, %p37
    %p39 = scmp.ne.s32.totalorder %s25, %s26
    %p40 = scmp.eq.s32.totalorder %s18, 1
    %p41 = por %p39, %p40
    %p43 = scmp.ne.s32.totalorder %s26, %s42
    %p44 = scmp.eq.s32.totalorder %s18, 0
    %p45 = por %p43, %p44
    %s47 = sadd.s32 %s46, 1
    %p50 = scmp.eq.s32.totalorder %s12, 1
    %p51 = scmp.ne.s32.totalorder %s46, %s48
    %p52 = scmp.eq.s32.totalorder %s12, 0
    %p53 = por %p51, %p52
    %p54 = scmp.ne.s32.totalorder %s46, %s48
    %p55 = scmp.eq.s32.totalorder %s17, 1
    %p56 = por %p54, %p55
    %p57 = scmp.ne.s32.totalorder %s48, %s49
    %p58 = scmp.eq.s32.totalorder %s17, 0
    %p59 = por %p57, %p58
    %p60 = scmp.ne.s32.totalorder %s48, %s49
    %p61 = scmp.eq.s32.totalorder %s18, 1
    %p62 = por %p60, %p61
    %p64 = scmp.ne.s32.totalorder %s49, %s63
    %p65 = scmp.eq.s32.totalorder %s18, 0
    %p66 = por %p64, %p65
    %s68 = sadd.s32 %s67, 1
    %p71 = scmp.eq.s32.totalorder %s12, 1
    %p72 = scmp.ne.s32.totalorder %s67, %s69
    %p73 = scmp.eq.s32.totalorder %s12, 0
    %p74 = por %p72, %p73
    %p75 = scmp.ne.s32.totalorder %s67, %s69
    %p76 = scmp.eq.s32.totalorder %s17, 1
    %p77 = por %p75, %p76
    %p78 = scmp.ne.s32.totalorder %s69, %s70
    %p79 = scmp.eq.s32.totalorder %s17, 0
    %p80 = por %p78, %p79
    %p81 = scmp.ne.s32.totalorder %s69, %s70
    %p82 = scmp.eq.s32.totalorder %s18, 1
    %p83 = por %p81, %p82
    %p85 = scmp.ne.s32.totalorder %s70, %s84
    %p86 = scmp.eq.s32.totalorder %s18, 0
    %p87 = por %p85, %p86
    %s88 = ssub.s32 %s12, %s19
    %p89 = scmp.eq.s32.totalorder %s88, 0
    %s91 = sadd.s32 %s90, 1
    %s92 = scalar_select %p89, %s90, %s91
    %p95 = pneg %p89
    %p96 = scmp.eq.s32.totalorder %s12, 1
    %p97 = por %p95, %p96
    %p98 = scmp.ne.s32.totalorder %s90, %s93
    %p99 = scmp.eq.s32.totalorder %s12, 0
    %p100 = por %p98, %p99
    %p101 = scmp.ne.s32.totalorder %s90, %s93
    %p102 = scmp.eq.s32.totalorder %s17, 1
    %p103 = por %p101, %p102
    %p104 = scmp.ne.s32.totalorder %s93, %s94
    %p105 = scmp.eq.s32.totalorder %s17, 0
    %p106 = por %p104, %p105
    %p107 = scmp.ne.s32.totalorder %s93, %s94
    %p108 = scmp.eq.s32.totalorder %s18, 1
    %p109 = por %p107, %p108
    %p111 = scmp.ne.s32.totalorder %s94, %s110
    %p112 = scmp.eq.s32.totalorder %s18, 0
    %p113 = por %p111, %p112
    %s114 = ssub.s32 %s12, %s19
    %p115 = scmp.eq.s32.totalorder %s114, 0
    %s117 = sadd.s32 %s116, 1
    %s118 = scalar_select %p115, %s116, %s117
    %p121 = pneg %p115
    %p122 = scmp.eq.s32.totalorder %s12, 1
    %p123 = por %p121, %p122
    %p124 = scmp.ne.s32.totalorder %s116, %s119
    %p125 = scmp.eq.s32.totalorder %s12, 0
    %p126 = por %p124, %p125
    %p127 = scmp.ne.s32.totalorder %s116, %s119
    %p128 = scmp.eq.s32.totalorder %s17, 1
    %p129 = por %p127, %p128
    %p130 = scmp.ne.s32.totalorder %s119, %s120
    %p131 = scmp.eq.s32.totalorder %s17, 0
    %p132 = por %p130, %p131
    %p133 = scmp.ne.s32.totalorder %s119, %s120
    %p134 = scmp.eq.s32.totalorder %s18, 1
    %p135 = por %p133, %p134
    %p137 = scmp.ne.s32.totalorder %s120, %s136
    %p138 = scmp.eq.s32.totalorder %s18, 0
    %p139 = por %p137, %p138
    %s140 = ssub.s32 %s12, %s19
    %p141 = scmp.eq.s32.totalorder %s140, 0
    %s143 = sadd.s32 %s142, 1
    %s144 = scalar_select %p141, %s142, %s143
    %p147 = pneg %p141
    %p148 = scmp.eq.s32.totalorder %s12, 1
    %p149 = por %p147, %p148
    %p150 = scmp.ne.s32.totalorder %s142, %s145
    %p151 = scmp.eq.s32.totalorder %s12, 0
    %p152 = por %p150, %p151
    %p153 = scmp.ne.s32.totalorder %s142, %s145
    %p154 = scmp.eq.s32.totalorder %s17, 1
    %p155 = por %p153, %p154
    %p156 = scmp.ne.s32.totalorder %s145, %s146
    %p157 = scmp.eq.s32.totalorder %s17, 0
    %p158 = por %p156, %p157
    %p159 = scmp.ne.s32.totalorder %s145, %s146
    %p160 = scmp.eq.s32.totalorder %s18, 1
    %p161 = por %p159, %p160
    %p163 = scmp.ne.s32.totalorder %s146, %s162
    %p164 = scmp.eq.s32.totalorder %s18, 0
    %p165 = por %p163, %p164
    %p166 = scmp.le.s32.totalorder 1, %s12
    %p167 = scmp.lt.s32.totalorder %s12, 3
    %p168 = pnand %p166, %p167
    %p169 = pneg %p168
    // Predicated region
    $region9: #{codebook_forward.1} parent=5 // pred_check
      _
    $region10: #{codebook_forward.1} parent=5 // pred_check_branch
      %171 = sbr.rel (%p168) target = $region12
    $region11: #{codebook_forward.1} parent=5 // pred_region
      %s172 = ssub.s32 %s12, 1
      // Predicated region
      $region13: #{codebook_forward.1} parent=11 // pred_check
        %p173 = pneg %p59
      $region14: #{codebook_forward.1} parent=11 // pred_check_branch
        %175 = sbr.rel (%p173) target = $region16
      $region15: #{codebook_forward.1} parent=11 // pred_region
        _
      $region16: #{codebook_forward.1} parent=11 // pred_fallthru
        _
      // Predicated region
      $region17: #{codebook_forward.1} parent=11 // pred_check
        %p176 = pneg %p80
      $region18: #{codebook_forward.1} parent=11 // pred_check_branch
        %178 = sbr.rel (%p176) target = $region20
      $region19: #{codebook_forward.1} parent=11 // pred_region
        _
      $region20: #{codebook_forward.1} parent=11 // pred_fallthru
        _
    $region12: #{codebook_forward.1} parent=5 // pred_fallthru
      _
    %p179 = scmp.lt.s32.totalorder %s12, 2
    // Predicated region
    $region21: #{codebook_forward.1} parent=5 // pred_check
      %p180 = pneg %p179
    $region22: #{codebook_forward.1} parent=5 // pred_check_branch
      %182 = sbr.rel (%p180) target = $region24
    $region23: #{codebook_forward.1} parent=5 // pred_region
      // Predicated region
      $region25: #{codebook_forward.1} parent=23 // pred_check
        %p183 = pneg %p32
      $region26: #{codebook_forward.1} parent=23 // pred_check_branch
        %185 = sbr.rel (%p183) target = $region28
      $region27: #{codebook_forward.1} parent=23 // pred_region
        %s186 = smul.u32 32, %s12
        %p187 = scmp.lt.s32.totalorder %s186, 63
        %s188 = scalar_select %p187, %s186, 63
        %s189 = smul.addr %s188, 8
        %s190 = scalar_lea.vmem %s0, %s189
        %s191 = smul.u32 32, %s12
      $region28: #{codebook_forward.1} parent=23 // pred_fallthru
        _
    $region24: #{codebook_forward.1} parent=5 // pred_fallthru
      _
    %p192 = scmp.le.s32.totalorder 1, %s12
    %p193 = scmp.lt.s32.totalorder %s12, 3
    %p194 = pnand %p192, %p193
    %p195 = pneg %p194
    // Predicated region
    $region29: #{codebook_forward.1} parent=5 // pred_check
      _
    $region30: #{codebook_forward.1} parent=5 // pred_check_branch
      %197 = sbr.rel (%p194) target = $region32
    $region31: #{codebook_forward.1} parent=5 // pred_region
      %s198 = ssub.s32 %s12, 1
      %s199 = smul.u32 32, %s17
      %p200 = scmp.lt.s32.totalorder %s199, 63
      %s201 = scalar_select %p200, %s199, 63
      %s202 = smul.addr %s201, 8
      %s203 = scalar_lea.vmem %s0, %s202
      %p204 = pneg %p38
      %p205 = pneg %p35
      %p206 = pneg %p59
      %p207 = pneg %p56
      %p208 = pneg %p80
      %p209 = pneg %p77
      %p210 = pneg %p106
      %p211 = pneg %p103
      %s212 = smul.u32 32, %s17
      %p213 = scmp.lt.s32.totalorder %s212, 63
      %s214 = scalar_select %p213, %s212, 63
      %s215 = smul.addr %s214, 8
      %s216 = scalar_lea.vmem %s3, %s215
      %p217 = pneg %p132
      %p218 = pneg %p129
      %s219 = smul.u32 2, %s17
      %p220 = scmp.lt.s32.totalorder %s219, 3
      %s221 = scalar_select %p220, %s219, 3
      %s222 = scalar_lea.vmem %s4, %s221
      %p223 = pneg %p158
      %p224 = pneg %p155
      %s225 = smul.u32 2, %s17
      %p226 = scmp.lt.s32.totalorder %s225, 3
      %s227 = scalar_select %p226, %s225, 3
      %s228 = scalar_lea.vmem %s5, %s227
      %s229 = smul.u32 32, %s17
      %p230 = scmp.lt.s32.totalorder %s229, 63
      %s231 = scalar_select %p230, %s229, 63
      %s232 = smul.addr %s231, 8
      %s233 = scalar_lea.vmem %s0, %s232
      %s234 = smul.u32 32, %s17
      %s235 = smul.u32 32, %s17
      %p236 = scmp.lt.s32.totalorder %s235, 63
      %s237 = scalar_select %p236, %s235, 63
      %s238 = smul.addr %s237, 8
      %s239 = scalar_lea.vmem %s3, %s238
      %s240 = smul.u32 32, %s17
      %s241 = smul.u32 2, %s17
      %p242 = scmp.lt.s32.totalorder %s241, 3
      %s243 = scalar_select %p242, %s241, 3
      %s244 = scalar_lea.vmem %s4, %s243
      %s245 = smul.u32 2, %s17
      %s246 = smul.u32 2, %s17
      %p247 = scmp.lt.s32.totalorder %s246, 3
      %s248 = scalar_select %p247, %s246, 3
      %s249 = scalar_lea.vmem %s5, %s248
      %s250 = smul.u32 2, %s17
      %v251 = vld [vmem:[%s233] sm:$0xff]
      %v252 = vld [vmem:[%s233 + $0x8] sm:$0xff]
      %v253 = vld [vmem:[%s233 + $0x10] sm:$0xff]
      %v254 = vld [vmem:[%s233 + $0x18] sm:$0xff]
      %v255 = vld [vmem:[%s233 + $0x20] sm:$0xff]
      %v256 = vld [vmem:[%s233 + $0x28] sm:$0xff]
      %v257 = vld [vmem:[%s233 + $0x30] sm:$0xff]
      %v258 = vld [vmem:[%s233 + $0x38] sm:$0xff]
      %v259 = vld [vmem:[%s233 + $0x40] sm:$0xff]
      %v260 = vld [vmem:[%s233 + $0x48] sm:$0xff]
      %v261 = vld [vmem:[%s233 + $0x50] sm:$0xff]
      %v262 = vld [vmem:[%s233 + $0x58] sm:$0xff]
      %v263 = vld [vmem:[%s233 + $0x60] sm:$0xff]
      %v264 = vld [vmem:[%s233 + $0x68] sm:$0xff]
      %v265 = vld [vmem:[%s233 + $0x70] sm:$0xff]
      %v266 = vld [vmem:[%s233 + $0x78] sm:$0xff]
      %v267 = vld [vmem:[%s233 + $0x80] sm:$0xff]
      %v268 = vld [vmem:[%s233 + $0x88] sm:$0xff]
      %v269 = vld [vmem:[%s233 + $0x90] sm:$0xff]
      %v270 = vld [vmem:[%s233 + $0x98] sm:$0xff]
      %v271 = vld [vmem:[%s233 + $0xa0] sm:$0xff]
      %v272 = vld [vmem:[%s233 + $0xa8] sm:$0xff]
      %v273 = vld [vmem:[%s233 + $0xb0] sm:$0xff]
      %v274 = vld [vmem:[%s233 + $0xb8] sm:$0xff]
      %v275 = vld [vmem:[%s233 + $0xc0] sm:$0xff]
      %v276 = vld [vmem:[%s233 + $0xc8] sm:$0xff]
      %v277 = vld [vmem:[%s233 + $0xd0] sm:$0xff]
      %v278 = vld [vmem:[%s233 + $0xd8] sm:$0xff]
      %v279 = vld [vmem:[%s233 + $0xe0] sm:$0xff]
      %v280 = vld [vmem:[%s233 + $0xe8] sm:$0xff]
      %v281 = vld [vmem:[%s233 + $0xf0] sm:$0xff]
      %v282 = vld [vmem:[%s233 + $0xf8] sm:$0xff]
      %v283 = vld [vmem:[%s1] sm:$0xff]
      %v284 = vld [vmem:[%s1 + $0x8] sm:$0xff]
      %v285 = vld [vmem:[%s1 + $0x10] sm:$0xff]
      %v286 = vld [vmem:[%s1 + $0x18] sm:$0xff]
      %v287 = vld [vmem:[%s1 + $0x20] sm:$0xff]
      %v288 = vld [vmem:[%s1 + $0x28] sm:$0xff]
      %v289 = vld [vmem:[%s1 + $0x30] sm:$0xff]
      %v290 = vld [vmem:[%s1 + $0x38] sm:$0xff]
      %v291 = vld [vmem:[%s1 + $0x40] sm:$0xff]
      %v292 = vld [vmem:[%s1 + $0x48] sm:$0xff]
      %v293 = vld [vmem:[%s1 + $0x50] sm:$0xff]
      %v294 = vld [vmem:[%s1 + $0x58] sm:$0xff]
      %v295 = vld [vmem:[%s1 + $0x60] sm:$0xff]
      %v296 = vld [vmem:[%s1 + $0x68] sm:$0xff]
      %v297 = vld [vmem:[%s1 + $0x70] sm:$0xff]
      %v298 = vld [vmem:[%s1 + $0x78] sm:$0xff]
      %v299 = vld [vmem:[%s1 + $0x80] sm:$0xff]
      %v300 = vld [vmem:[%s1 + $0x88] sm:$0xff]
      %v301 = vld [vmem:[%s1 + $0x90] sm:$0xff]
      %v302 = vld [vmem:[%s1 + $0x98] sm:$0xff]
      %v303 = vld [vmem:[%s1 + $0xa0] sm:$0xff]
      %v304 = vld [vmem:[%s1 + $0xa8] sm:$0xff]
      %v305 = vld [vmem:[%s1 + $0xb0] sm:$0xff]
      %v306 = vld [vmem:[%s1 + $0xb8] sm:$0xff]
      %v307 = vld [vmem:[%s1 + $0xc0] sm:$0xff]
      %v308 = vld [vmem:[%s1 + $0xc8] sm:$0xff]
      %v309 = vld [vmem:[%s1 + $0xd0] sm:$0xff]
      %v310 = vld [vmem:[%s1 + $0xd8] sm:$0xff]
      %v311 = vld [vmem:[%s1 + $0xe0] sm:$0xff]
      %v312 = vld [vmem:[%s1 + $0xe8] sm:$0xff]
      %v313 = vld [vmem:[%s1 + $0xf0] sm:$0xff]
      %v314 = vld [vmem:[%s1 + $0xf8] sm:$0xff]
      %315 = vmatprep.subr.mxu0 0.0
      %316 = vmatpush1.xpose.msra.mxu0 %v298
      %317 = vmatprep.subr.mxu0 0.0
      %318 = vmatpush1.xpose.msra.mxu0 %v297
      %319 = vmatprep.subr.mxu0 0.0
      %320 = vmatpush1.xpose.msra.mxu0 %v296
      %321 = vmatprep.subr.mxu0 0.0
      %322 = vmatpush1.xpose.msra.mxu0 %v295
      %323 = vmatprep.subr.mxu0 0.0
      %324 = vmatpush1.xpose.msra.mxu0 %v294
      %325 = vmatprep.subr.mxu0 0.0
      %326 = vmatpush1.xpose.msra.mxu0 %v293
      %327 = vmatprep.subr.mxu0 0.0
      %328 = vmatpush1.xpose.msra.mxu0 %v292
      %329 = vmatprep.subr.mxu0 0.0
      %330 = vmatpush1.xpose.msra.mxu0 %v291
      %331 = vmatprep.subr.mxu0 0.0
      %332 = vmatpush1.xpose.msra.mxu0 %v290
      %333 = vmatprep.subr.mxu0 0.0
      %334 = vmatpush1.xpose.msra.mxu0 %v289
      %335 = vmatprep.subr.mxu0 0.0
      %336 = vmatpush1.xpose.msra.mxu0 %v288
      %337 = vmatprep.subr.mxu0 0.0
      %338 = vmatpush1.xpose.msra.mxu0 %v287
      %339 = vmatprep.subr.mxu0 0.0
      %340 = vmatpush1.xpose.msra.mxu0 %v286
      %341 = vmatprep.subr.mxu0 0.0
      %342 = vmatpush1.xpose.msra.mxu0 %v285
      %343 = vmatprep.subr.mxu0 0.0
      %344 = vmatpush1.xpose.msra.mxu0 %v284
      %345 = vmatprep.subr.mxu0 0.0
      %346 = vmatpush1.xpose.msra.mxu0 %v283
      %347 = vmatprep.subr.mxu0 0.0
      %348 = vmatpush2.xpose.msra.mxu0 %v314
      %349 = vmatprep.subr.mxu0 0.0
      %350 = vmatpush2.xpose.msra.mxu0 %v313
      %351 = vmatprep.subr.mxu0 0.0
      %352 = vmatpush2.xpose.msra.mxu0 %v312
      %353 = vmatprep.subr.mxu0 0.0
      %354 = vmatpush2.xpose.msra.mxu0 %v311
      %355 = vmatprep.subr.mxu0 0.0
      %356 = vmatpush2.xpose.msra.mxu0 %v310
      %357 = vmatprep.subr.mxu0 0.0
      %358 = vmatpush2.xpose.msra.mxu0 %v309
      %359 = vmatprep.subr.mxu0 0.0
      %360 = vmatpush2.xpose.msra.mxu0 %v308
      %361 = vmatprep.subr.mxu0 0.0
      %362 = vmatpush2.xpose.msra.mxu0 %v307
      %363 = vmatprep.subr.mxu0 0.0
      %364 = vmatpush2.xpose.msra.mxu0 %v306
      %365 = vmatprep.subr.mxu0 0.0
      %366 = vmatpush2.xpose.msra.mxu0 %v305
      %367 = vmatprep.subr.mxu0 0.0
      %368 = vmatpush2.xpose.msra.mxu0 %v304
      %369 = vmatprep.subr.mxu0 0.0
      %370 = vmatpush2.xpose.msra.mxu0 %v303
      %371 = vmatprep.subr.mxu0 0.0
      %372 = vmatpush2.xpose.msra.mxu0 %v302
      %373 = vmatprep.subr.mxu0 0.0
      %374 = vmatpush2.xpose.msra.mxu0 %v301
      %375 = vmatprep.subr.mxu0 0.0
      %376 = vmatpush2.xpose.msra.mxu0 %v300
      %377 = vmatprep.subr.mxu0 0.0
      %378 = vmatpush2.xpose.msra.mxu0 %v299
      %379 = vmatprep.mubr.f32.mxu0 0.0
      %380 = vmatmul.mubr.f32.gmra.mxu0 %v251
      %v381 = vpop.f32.mrf.mxu0
      %v382 = vadd.f32 0.0, %v381
      %v383 = vpop.f32.mrf.mxu0
      %v384 = vadd.f32 0.0, %v383
      %385 = vmatprep.mubr.f32.mxu0 0.0
      %386 = vmatmul.mubr.f32.gmra.mxu0 %v252
      %v387 = vpop.f32.mrf.mxu0
      %v388 = vadd.f32 0.0, %v387
      %v389 = vpop.f32.mrf.mxu0
      %v390 = vadd.f32 0.0, %v389
      %391 = vmatprep.mubr.f32.mxu0 0.0
      %392 = vmatmul.mubr.f32.gmra.mxu0 %v253
      %v393 = vpop.f32.mrf.mxu0
      %v394 = vadd.f32 0.0, %v393
      %v395 = vpop.f32.mrf.mxu0
      %v396 = vadd.f32 0.0, %v395
      %397 = vmatprep.mubr.f32.mxu0 0.0
      %398 = vmatmul.mubr.f32.gmra.mxu0 %v254
      %v399 = vpop.f32.mrf.mxu0
      %v400 = vadd.f32 0.0, %v399
      %v401 = vpop.f32.mrf.mxu0
      %v402 = vadd.f32 0.0, %v401
      %403 = vmatprep.mubr.f32.mxu0 0.0
      %404 = vmatmul.mubr.f32.gmra.mxu0 %v255
      %v405 = vpop.f32.mrf.mxu0
      %v406 = vadd.f32 0.0, %v405
      %v407 = vpop.f32.mrf.mxu0
      %v408 = vadd.f32 0.0, %v407
      %409 = vmatprep.mubr.f32.mxu0 0.0
      %410 = vmatmul.mubr.f32.gmra.mxu0 %v256
      %v411 = vpop.f32.mrf.mxu0
      %v412 = vadd.f32 0.0, %v411
      %v413 = vpop.f32.mrf.mxu0
      %v414 = vadd.f32 0.0, %v413
      %415 = vmatprep.mubr.f32.mxu0 0.0
      %416 = vmatmul.mubr.f32.gmra.mxu0 %v257
      %v417 = vpop.f32.mrf.mxu0
      %v418 = vadd.f32 0.0, %v417
      %v419 = vpop.f32.mrf.mxu0
      %v420 = vadd.f32 0.0, %v419
      %421 = vmatprep.mubr.f32.mxu0 0.0
      %422 = vmatmul.mubr.f32.gmra.mxu0 %v258
      %v423 = vpop.f32.mrf.mxu0
      %v424 = vadd.f32 0.0, %v423
      %v425 = vpop.f32.mrf.mxu0
      %v426 = vadd.f32 0.0, %v425
      %427 = vmatprep.mubr.f32.mxu0 0.0
      %428 = vmatmul.mubr.f32.gmra.mxu0 %v259
      %v429 = vpop.f32.mrf.mxu0
      %v430 = vadd.f32 0.0, %v429
      %v431 = vpop.f32.mrf.mxu0
      %v432 = vadd.f32 0.0, %v431
      %433 = vmatprep.mubr.f32.mxu0 0.0
      %434 = vmatmul.mubr.f32.gmra.mxu0 %v260
      %v435 = vpop.f32.mrf.mxu0
      %v436 = vadd.f32 0.0, %v435
      %v437 = vpop.f32.mrf.mxu0
      %v438 = vadd.f32 0.0, %v437
      %439 = vmatprep.mubr.f32.mxu0 0.0
      %440 = vmatmul.mubr.f32.gmra.mxu0 %v261
      %v441 = vpop.f32.mrf.mxu0
      %v442 = vadd.f32 0.0, %v441
      %v443 = vpop.f32.mrf.mxu0
      %v444 = vadd.f32 0.0, %v443
      %445 = vmatprep.mubr.f32.mxu0 0.0
      %446 = vmatmul.mubr.f32.gmra.mxu0 %v262
      %v447 = vpop.f32.mrf.mxu0
      %v448 = vadd.f32 0.0, %v447
      %v449 = vpop.f32.mrf.mxu0
      %v450 = vadd.f32 0.0, %v449
      %451 = vmatprep.mubr.f32.mxu0 0.0
      %452 = vmatmul.mubr.f32.gmra.mxu0 %v263
      %v453 = vpop.f32.mrf.mxu0
      %v454 = vadd.f32 0.0, %v453
      %v455 = vpop.f32.mrf.mxu0
      %v456 = vadd.f32 0.0, %v455
      %457 = vmatprep.mubr.f32.mxu0 0.0
      %458 = vmatmul.mubr.f32.gmra.mxu0 %v264
      %v459 = vpop.f32.mrf.mxu0
      %v460 = vadd.f32 0.0, %v459
      %v461 = vpop.f32.mrf.mxu0
      %v462 = vadd.f32 0.0, %v461
      %463 = vmatprep.mubr.f32.mxu0 0.0
      %464 = vmatmul.mubr.f32.gmra.mxu0 %v265
      %v465 = vpop.f32.mrf.mxu0
      %v466 = vadd.f32 0.0, %v465
      %v467 = vpop.f32.mrf.mxu0
      %v468 = vadd.f32 0.0, %v467
      %469 = vmatprep.mubr.f32.mxu0 0.0
      %470 = vmatmul.mubr.f32.gmra.mxu0 %v266
      %v471 = vpop.f32.mrf.mxu0
      %v472 = vadd.f32 0.0, %v471
      %v473 = vpop.f32.mrf.mxu0
      %v474 = vadd.f32 0.0, %v473
      %475 = vmatprep.mubr.f32.mxu0 0.0
      %476 = vmatmul.mubr.f32.gmra.mxu0 %v267
      %v477 = vpop.f32.mrf.mxu0
      %v478 = vadd.f32 0.0, %v477
      %v479 = vpop.f32.mrf.mxu0
      %v480 = vadd.f32 0.0, %v479
      %481 = vmatprep.mubr.f32.mxu0 0.0
      %482 = vmatmul.mubr.f32.gmra.mxu0 %v268
      %v483 = vpop.f32.mrf.mxu0
      %v484 = vadd.f32 0.0, %v483
      %v485 = vpop.f32.mrf.mxu0
      %v486 = vadd.f32 0.0, %v485
      %487 = vmatprep.mubr.f32.mxu0 0.0
      %488 = vmatmul.mubr.f32.gmra.mxu0 %v269
      %v489 = vpop.f32.mrf.mxu0
      %v490 = vadd.f32 0.0, %v489
      %v491 = vpop.f32.mrf.mxu0
      %v492 = vadd.f32 0.0, %v491
      %493 = vmatprep.mubr.f32.mxu0 0.0
      %494 = vmatmul.mubr.f32.gmra.mxu0 %v270
      %v495 = vpop.f32.mrf.mxu0
      %v496 = vadd.f32 0.0, %v495
      %v497 = vpop.f32.mrf.mxu0
      %v498 = vadd.f32 0.0, %v497
      %499 = vmatprep.mubr.f32.mxu0 0.0
      %500 = vmatmul.mubr.f32.gmra.mxu0 %v271
      %v501 = vpop.f32.mrf.mxu0
      %v502 = vadd.f32 0.0, %v501
      %v503 = vpop.f32.mrf.mxu0
      %v504 = vadd.f32 0.0, %v503
      %505 = vmatprep.mubr.f32.mxu0 0.0
      %506 = vmatmul.mubr.f32.gmra.mxu0 %v272
      %v507 = vpop.f32.mrf.mxu0
      %v508 = vadd.f32 0.0, %v507
      %v509 = vpop.f32.mrf.mxu0
      %v510 = vadd.f32 0.0, %v509
      %511 = vmatprep.mubr.f32.mxu0 0.0
      %512 = vmatmul.mubr.f32.gmra.mxu0 %v273
      %v513 = vpop.f32.mrf.mxu0
      %v514 = vadd.f32 0.0, %v513
      %v515 = vpop.f32.mrf.mxu0
      %v516 = vadd.f32 0.0, %v515
      %517 = vmatprep.mubr.f32.mxu0 0.0
      %518 = vmatmul.mubr.f32.gmra.mxu0 %v274
      %v519 = vpop.f32.mrf.mxu0
      %v520 = vadd.f32 0.0, %v519
      %v521 = vpop.f32.mrf.mxu0
      %v522 = vadd.f32 0.0, %v521
      %523 = vmatprep.mubr.f32.mxu0 0.0
      %524 = vmatmul.mubr.f32.gmra.mxu0 %v275
      %v525 = vpop.f32.mrf.mxu0
      %v526 = vadd.f32 0.0, %v525
      %v527 = vpop.f32.mrf.mxu0
      %v528 = vadd.f32 0.0, %v527
      %529 = vmatprep.mubr.f32.mxu0 0.0
      %530 = vmatmul.mubr.f32.gmra.mxu0 %v276
      %v531 = vpop.f32.mrf.mxu0
      %v532 = vadd.f32 0.0, %v531
      %v533 = vpop.f32.mrf.mxu0
      %v534 = vadd.f32 0.0, %v533
      %535 = vmatprep.mubr.f32.mxu0 0.0
      %536 = vmatmul.mubr.f32.gmra.mxu0 %v277
      %v537 = vpop.f32.mrf.mxu0
      %v538 = vadd.f32 0.0, %v537
      %v539 = vpop.f32.mrf.mxu0
      %v540 = vadd.f32 0.0, %v539
      %541 = vmatprep.mubr.f32.mxu0 0.0
      %542 = vmatmul.mubr.f32.gmra.mxu0 %v278
      %v543 = vpop.f32.mrf.mxu0
      %v544 = vadd.f32 0.0, %v543
      %v545 = vpop.f32.mrf.mxu0
      %v546 = vadd.f32 0.0, %v545
      %547 = vmatprep.mubr.f32.mxu0 0.0
      %548 = vmatmul.mubr.f32.gmra.mxu0 %v279
      %v549 = vpop.f32.mrf.mxu0
      %v550 = vadd.f32 0.0, %v549
      %v551 = vpop.f32.mrf.mxu0
      %v552 = vadd.f32 0.0, %v551
      %553 = vmatprep.mubr.f32.mxu0 0.0
      %554 = vmatmul.mubr.f32.gmra.mxu0 %v280
      %v555 = vpop.f32.mrf.mxu0
      %v556 = vadd.f32 0.0, %v555
      %v557 = vpop.f32.mrf.mxu0
      %v558 = vadd.f32 0.0, %v557
      %559 = vmatprep.mubr.f32.mxu0 0.0
      %560 = vmatmul.mubr.f32.gmra.mxu0 %v281
      %v561 = vpop.f32.mrf.mxu0
      %v562 = vadd.f32 0.0, %v561
      %v563 = vpop.f32.mrf.mxu0
      %v564 = vadd.f32 0.0, %v563
      %565 = vmatprep.mubr.f32.mxu0 0.0
      %566 = vmatmul.mubr.f32.gmra.mxu0 %v282
      %v567 = vpop.f32.mrf.mxu0
      %v568 = vadd.f32 0.0, %v567
      %v569 = vpop.f32.mrf.mxu0
      %v570 = vadd.f32 0.0, %v569
      %571 = vdwg.mxu0
      %v572 = vld [vmem:[%s2] sm:$0x3]
      %v573 = vmul.f32 %v382, 2.0
      %v574 = vmul.f32 %v384, 2.0
      %v575 = vmul.f32 %v388, 2.0
      %v576 = vmul.f32 %v390, 2.0
      %v577 = vmul.f32 %v394, 2.0
      %v578 = vmul.f32 %v396, 2.0
      %v579 = vmul.f32 %v400, 2.0
      %v580 = vmul.f32 %v402, 2.0
      %v581 = vmul.f32 %v406, 2.0
      %v582 = vmul.f32 %v408, 2.0
      %v583 = vmul.f32 %v412, 2.0
      %v584 = vmul.f32 %v414, 2.0
      %v585 = vmul.f32 %v418, 2.0
      %v586 = vmul.f32 %v420, 2.0
      %v587 = vmul.f32 %v424, 2.0
      %v588 = vmul.f32 %v426, 2.0
      %v589 = vmul.f32 %v430, 2.0
      %v590 = vmul.f32 %v432, 2.0
      %v591 = vmul.f32 %v436, 2.0
      %v592 = vmul.f32 %v438, 2.0
      %v593 = vmul.f32 %v442, 2.0
      %v594 = vmul.f32 %v444, 2.0
      %v595 = vmul.f32 %v448, 2.0
      %v596 = vmul.f32 %v450, 2.0
      %v597 = vmul.f32 %v454, 2.0
      %v598 = vmul.f32 %v456, 2.0
      %v599 = vmul.f32 %v460, 2.0
      %v600 = vmul.f32 %v462, 2.0
      %v601 = vmul.f32 %v466, 2.0
      %v602 = vmul.f32 %v468, 2.0
      %v603 = vmul.f32 %v472, 2.0
      %v604 = vmul.f32 %v474, 2.0
      %v605 = vmul.f32 %v478, 2.0
      %v606 = vmul.f32 %v480, 2.0
      %v607 = vmul.f32 %v484, 2.0
      %v608 = vmul.f32 %v486, 2.0
      %v609 = vmul.f32 %v490, 2.0
      %v610 = vmul.f32 %v492, 2.0
      %v611 = vmul.f32 %v496, 2.0
      %v612 = vmul.f32 %v498, 2.0
      %v613 = vmul.f32 %v502, 2.0
      %v614 = vmul.f32 %v504, 2.0
      %v615 = vmul.f32 %v508, 2.0
      %v616 = vmul.f32 %v510, 2.0
      %v617 = vmul.f32 %v514, 2.0
      %v618 = vmul.f32 %v516, 2.0
      %v619 = vmul.f32 %v520, 2.0
      %v620 = vmul.f32 %v522, 2.0
      %v621 = vmul.f32 %v526, 2.0
      %v622 = vmul.f32 %v528, 2.0
      %v623 = vmul.f32 %v532, 2.0
      %v624 = vmul.f32 %v534, 2.0
      %v625 = vmul.f32 %v538, 2.0
      %v626 = vmul.f32 %v540, 2.0
      %v627 = vmul.f32 %v544, 2.0
      %v628 = vmul.f32 %v546, 2.0
      %v629 = vmul.f32 %v550, 2.0
      %v630 = vmul.f32 %v552, 2.0
      %v631 = vmul.f32 %v556, 2.0
      %v632 = vmul.f32 %v558, 2.0
      %v633 = vmul.f32 %v562, 2.0
      %v634 = vmul.f32 %v564, 2.0
      %v635 = vmul.f32 %v568, 2.0
      %v636 = vmul.f32 %v570, 2.0
      %v638 = vlaneseq
      %v639 = vshrl.u32 %v638, 7
      %v640 = vsub.s32 0, %v639
      %v641 = vrot.slane %v572, %v640
      %v642 = vlaneseq
      %v643 = vshrl.u32 %v642, 7
      %v644 = vsub.s32 1, %v643
      %v645 = vrot.slane %v572, %v644
      %v648 = vsub.f32 %v641, %v573
      %v649 = vsub.f32 %v645, %v574
      %v650 = vsub.f32 %v641, %v575
      %v651 = vsub.f32 %v645, %v576
      %v652 = vsub.f32 %v641, %v577
      %v653 = vsub.f32 %v645, %v578
      %v654 = vsub.f32 %v641, %v579
      %v655 = vsub.f32 %v645, %v580
      %v656 = vsub.f32 %v641, %v581
      %v657 = vsub.f32 %v645, %v582
      %v658 = vsub.f32 %v641, %v583
      %v659 = vsub.f32 %v645, %v584
      %v660 = vsub.f32 %v641, %v585
      %v661 = vsub.f32 %v645, %v586
      %v662 = vsub.f32 %v641, %v587
      %v663 = vsub.f32 %v645, %v588
      %v664 = vsub.f32 %v641, %v589
      %v665 = vsub.f32 %v645, %v590
      %v666 = vsub.f32 %v641, %v591
      %v667 = vsub.f32 %v645, %v592
      %v668 = vsub.f32 %v641, %v593
      %v669 = vsub.f32 %v645, %v594
      %v670 = vsub.f32 %v641, %v595
      %v671 = vsub.f32 %v645, %v596
      %v672 = vsub.f32 %v641, %v597
      %v673 = vsub.f32 %v645, %v598
      %v674 = vsub.f32 %v641, %v599
      %v675 = vsub.f32 %v645, %v600
      %v676 = vsub.f32 %v641, %v601
      %v677 = vsub.f32 %v645, %v602
      %v678 = vsub.f32 %v641, %v603
      %v679 = vsub.f32 %v645, %v604
      %v680 = vsub.f32 %v641, %v605
      %v681 = vsub.f32 %v645, %v606
      %v682 = vsub.f32 %v641, %v607
      %v683 = vsub.f32 %v645, %v608
      %v684 = vsub.f32 %v641, %v609
      %v685 = vsub.f32 %v645, %v610
      %v686 = vsub.f32 %v641, %v611
      %v687 = vsub.f32 %v645, %v612
      %v688 = vsub.f32 %v641, %v613
      %v689 = vsub.f32 %v645, %v614
      %v690 = vsub.f32 %v641, %v615
      %v691 = vsub.f32 %v645, %v616
      %v692 = vsub.f32 %v641, %v617
      %v693 = vsub.f32 %v645, %v618
      %v694 = vsub.f32 %v641, %v619
      %v695 = vsub.f32 %v645, %v620
      %v696 = vsub.f32 %v641, %v621
      %v697 = vsub.f32 %v645, %v622
      %v698 = vsub.f32 %v641, %v623
      %v699 = vsub.f32 %v645, %v624
      %v700 = vsub.f32 %v641, %v625
      %v701 = vsub.f32 %v645, %v626
      %v702 = vsub.f32 %v641, %v627
      %v703 = vsub.f32 %v645, %v628
      %v704 = vsub.f32 %v641, %v629
      %v705 = vsub.f32 %v645, %v630
      %v706 = vsub.f32 %v641, %v631
      %v707 = vsub.f32 %v645, %v632
      %v708 = vsub.f32 %v641, %v633
      %v709 = vsub.f32 %v645, %v634
      %v710 = vsub.f32 %v641, %v635
      %v711 = vsub.f32 %v645, %v636
      %v712 = vlaneseq
      %v713 = vand.u32 %v712, 127
      %v714 = vadd.s32 %v713, 128
      %vm715 = vcmp.le.f32.partialorder %v648, %v649
      %v716 = vsel %vm715, %v648, %v649
      %v717 = vsel %vm715, %v713, %v714
      %718 = vmin.index.xlane.f32.xlu0 %v716
      %v719 = vpop.xlane.xlu0 %718
      %720 = vset.pattern.permute.xlu0 %v719
      %721 = vperm.xlu0 %720, %v717
      %v722 = vpop.permute.xlu0 %721
      %vm723 = vcmp.le.f32.partialorder %v650, %v651
      %v724 = vsel %vm723, %v650, %v651
      %v725 = vsel %vm723, %v713, %v714
      %726 = vmin.index.xlane.f32.xlu0 %v724
      %v727 = vpop.xlane.xlu0 %726
      %728 = vset.pattern.permute.xlu0 %v727
      %729 = vperm.xlu0 %728, %v725
      %v730 = vpop.permute.xlu0 %729
      %vm731 = vcmp.le.f32.partialorder %v652, %v653
      %v732 = vsel %vm731, %v652, %v653
      %v733 = vsel %vm731, %v713, %v714
      %734 = vmin.index.xlane.f32.xlu0 %v732
      %v735 = vpop.xlane.xlu0 %734
      %736 = vset.pattern.permute.xlu0 %v735
      %737 = vperm.xlu0 %736, %v733
      %v738 = vpop.permute.xlu0 %737
      %vm739 = vcmp.le.f32.partialorder %v654, %v655
      %v740 = vsel %vm739, %v654, %v655
      %v741 = vsel %vm739, %v713, %v714
      %742 = vmin.index.xlane.f32.xlu0 %v740
      %v743 = vpop.xlane.xlu0 %742
      %744 = vset.pattern.permute.xlu0 %v743
      %745 = vperm.xlu0 %744, %v741
      %v746 = vpop.permute.xlu0 %745
      %vm747 = vcmp.le.f32.partialorder %v656, %v657
      %v748 = vsel %vm747, %v656, %v657
      %v749 = vsel %vm747, %v713, %v714
      %750 = vmin.index.xlane.f32.xlu0 %v748
      %v751 = vpop.xlane.xlu0 %750
      %752 = vset.pattern.permute.xlu0 %v751
      %753 = vperm.xlu0 %752, %v749
      %v754 = vpop.permute.xlu0 %753
      %vm755 = vcmp.le.f32.partialorder %v658, %v659
      %v756 = vsel %vm755, %v658, %v659
      %v757 = vsel %vm755, %v713, %v714
      %758 = vmin.index.xlane.f32.xlu0 %v756
      %v759 = vpop.xlane.xlu0 %758
      %760 = vset.pattern.permute.xlu0 %v759
      %761 = vperm.xlu0 %760, %v757
      %v762 = vpop.permute.xlu0 %761
      %vm763 = vcmp.le.f32.partialorder %v660, %v661
      %v764 = vsel %vm763, %v660, %v661
      %v765 = vsel %vm763, %v713, %v714
      %766 = vmin.index.xlane.f32.xlu0 %v764
      %v767 = vpop.xlane.xlu0 %766
      %768 = vset.pattern.permute.xlu0 %v767
      %769 = vperm.xlu0 %768, %v765
      %v770 = vpop.permute.xlu0 %769
      %vm771 = vcmp.le.f32.partialorder %v662, %v663
      %v772 = vsel %vm771, %v662, %v663
      %v773 = vsel %vm771, %v713, %v714
      %774 = vmin.index.xlane.f32.xlu0 %v772
      %v775 = vpop.xlane.xlu0 %774
      %776 = vset.pattern.permute.xlu0 %v775
      %777 = vperm.xlu0 %776, %v773
      %v778 = vpop.permute.xlu0 %777
      %vm779 = vcmp.le.f32.partialorder %v664, %v665
      %v780 = vsel %vm779, %v664, %v665
      %v781 = vsel %vm779, %v713, %v714
      %782 = vmin.index.xlane.f32.xlu0 %v780
      %v783 = vpop.xlane.xlu0 %782
      %784 = vset.pattern.permute.xlu0 %v783
      %785 = vperm.xlu0 %784, %v781
      %v786 = vpop.permute.xlu0 %785
      %vm787 = vcmp.le.f32.partialorder %v666, %v667
      %v788 = vsel %vm787, %v666, %v667
      %v789 = vsel %vm787, %v713, %v714
      %790 = vmin.index.xlane.f32.xlu0 %v788
      %v791 = vpop.xlane.xlu0 %790
      %792 = vset.pattern.permute.xlu0 %v791
      %793 = vperm.xlu0 %792, %v789
      %v794 = vpop.permute.xlu0 %793
      %vm795 = vcmp.le.f32.partialorder %v668, %v669
      %v796 = vsel %vm795, %v668, %v669
      %v797 = vsel %vm795, %v713, %v714
      %798 = vmin.index.xlane.f32.xlu0 %v796
      %v799 = vpop.xlane.xlu0 %798
      %800 = vset.pattern.permute.xlu0 %v799
      %801 = vperm.xlu0 %800, %v797
      %v802 = vpop.permute.xlu0 %801
      %vm803 = vcmp.le.f32.partialorder %v670, %v671
      %v804 = vsel %vm803, %v670, %v671
      %v805 = vsel %vm803, %v713, %v714
      %806 = vmin.index.xlane.f32.xlu0 %v804
      %v807 = vpop.xlane.xlu0 %806
      %808 = vset.pattern.permute.xlu0 %v807
      %809 = vperm.xlu0 %808, %v805
      %v810 = vpop.permute.xlu0 %809
      %vm811 = vcmp.le.f32.partialorder %v672, %v673
      %v812 = vsel %vm811, %v672, %v673
      %v813 = vsel %vm811, %v713, %v714
      %814 = vmin.index.xlane.f32.xlu0 %v812
      %v815 = vpop.xlane.xlu0 %814
      %816 = vset.pattern.permute.xlu0 %v815
      %817 = vperm.xlu0 %816, %v813
      %v818 = vpop.permute.xlu0 %817
      %vm819 = vcmp.le.f32.partialorder %v674, %v675
      %v820 = vsel %vm819, %v674, %v675
      %v821 = vsel %vm819, %v713, %v714
      %822 = vmin.index.xlane.f32.xlu0 %v820
      %v823 = vpop.xlane.xlu0 %822
      %824 = vset.pattern.permute.xlu0 %v823
      %825 = vperm.xlu0 %824, %v821
      %v826 = vpop.permute.xlu0 %825
      %vm827 = vcmp.le.f32.partialorder %v676, %v677
      %v828 = vsel %vm827, %v676, %v677
      %v829 = vsel %vm827, %v713, %v714
      %830 = vmin.index.xlane.f32.xlu0 %v828
      %v831 = vpop.xlane.xlu0 %830
      %832 = vset.pattern.permute.xlu0 %v831
      %833 = vperm.xlu0 %832, %v829
      %v834 = vpop.permute.xlu0 %833
      %vm835 = vcmp.le.f32.partialorder %v678, %v679
      %v836 = vsel %vm835, %v678, %v679
      %v837 = vsel %vm835, %v713, %v714
      %838 = vmin.index.xlane.f32.xlu0 %v836
      %v839 = vpop.xlane.xlu0 %838
      %840 = vset.pattern.permute.xlu0 %v839
      %841 = vperm.xlu0 %840, %v837
      %v842 = vpop.permute.xlu0 %841
      %vm843 = vcmp.le.f32.partialorder %v680, %v681
      %v844 = vsel %vm843, %v680, %v681
      %v845 = vsel %vm843, %v713, %v714
      %846 = vmin.index.xlane.f32.xlu0 %v844
      %v847 = vpop.xlane.xlu0 %846
      %848 = vset.pattern.permute.xlu0 %v847
      %849 = vperm.xlu0 %848, %v845
      %v850 = vpop.permute.xlu0 %849
      %vm851 = vcmp.le.f32.partialorder %v682, %v683
      %v852 = vsel %vm851, %v682, %v683
      %v853 = vsel %vm851, %v713, %v714
      %854 = vmin.index.xlane.f32.xlu0 %v852
      %v855 = vpop.xlane.xlu0 %854
      %856 = vset.pattern.permute.xlu0 %v855
      %857 = vperm.xlu0 %856, %v853
      %v858 = vpop.permute.xlu0 %857
      %vm859 = vcmp.le.f32.partialorder %v684, %v685
      %v860 = vsel %vm859, %v684, %v685
      %v861 = vsel %vm859, %v713, %v714
      %862 = vmin.index.xlane.f32.xlu0 %v860
      %v863 = vpop.xlane.xlu0 %862
      %864 = vset.pattern.permute.xlu0 %v863
      %865 = vperm.xlu0 %864, %v861
      %v866 = vpop.permute.xlu0 %865
      %vm867 = vcmp.le.f32.partialorder %v686, %v687
      %v868 = vsel %vm867, %v686, %v687
      %v869 = vsel %vm867, %v713, %v714
      %870 = vmin.index.xlane.f32.xlu0 %v868
      %v871 = vpop.xlane.xlu0 %870
      %872 = vset.pattern.permute.xlu0 %v871
      %873 = vperm.xlu0 %872, %v869
      %v874 = vpop.permute.xlu0 %873
      %vm875 = vcmp.le.f32.partialorder %v688, %v689
      %v876 = vsel %vm875, %v688, %v689
      %v877 = vsel %vm875, %v713, %v714
      %878 = vmin.index.xlane.f32.xlu0 %v876
      %v879 = vpop.xlane.xlu0 %878
      %880 = vset.pattern.permute.xlu0 %v879
      %881 = vperm.xlu0 %880, %v877
      %v882 = vpop.permute.xlu0 %881
      %vm883 = vcmp.le.f32.partialorder %v690, %v691
      %v884 = vsel %vm883, %v690, %v691
      %v885 = vsel %vm883, %v713, %v714
      %886 = vmin.index.xlane.f32.xlu0 %v884
      %v887 = vpop.xlane.xlu0 %886
      %888 = vset.pattern.permute.xlu0 %v887
      %889 = vperm.xlu0 %888, %v885
      %v890 = vpop.permute.xlu0 %889
      %vm891 = vcmp.le.f32.partialorder %v692, %v693
      %v892 = vsel %vm891, %v692, %v693
      %v893 = vsel %vm891, %v713, %v714
      %894 = vmin.index.xlane.f32.xlu0 %v892
      %v895 = vpop.xlane.xlu0 %894
      %896 = vset.pattern.permute.xlu0 %v895
      %897 = vperm.xlu0 %896, %v893
      %v898 = vpop.permute.xlu0 %897
      %vm899 = vcmp.le.f32.partialorder %v694, %v695
      %v900 = vsel %vm899, %v694, %v695
      %v901 = vsel %vm899, %v713, %v714
      %902 = vmin.index.xlane.f32.xlu0 %v900
      %v903 = vpop.xlane.xlu0 %902
      %904 = vset.pattern.permute.xlu0 %v903
      %905 = vperm.xlu0 %904, %v901
      %v906 = vpop.permute.xlu0 %905
      %vm907 = vcmp.le.f32.partialorder %v696, %v697
      %v908 = vsel %vm907, %v696, %v697
      %v909 = vsel %vm907, %v713, %v714
      %910 = vmin.index.xlane.f32.xlu0 %v908
      %v911 = vpop.xlane.xlu0 %910
      %912 = vset.pattern.permute.xlu0 %v911
      %913 = vperm.xlu0 %912, %v909
      %v914 = vpop.permute.xlu0 %913
      %vm915 = vcmp.le.f32.partialorder %v698, %v699
      %v916 = vsel %vm915, %v698, %v699
      %v917 = vsel %vm915, %v713, %v714
      %918 = vmin.index.xlane.f32.xlu0 %v916
      %v919 = vpop.xlane.xlu0 %918
      %920 = vset.pattern.permute.xlu0 %v919
      %921 = vperm.xlu0 %920, %v917
      %v922 = vpop.permute.xlu0 %921
      %vm923 = vcmp.le.f32.partialorder %v700, %v701
      %v924 = vsel %vm923, %v700, %v701
      %v925 = vsel %vm923, %v713, %v714
      %926 = vmin.index.xlane.f32.xlu0 %v924
      %v927 = vpop.xlane.xlu0 %926
      %928 = vset.pattern.permute.xlu0 %v927
      %929 = vperm.xlu0 %928, %v925
      %v930 = vpop.permute.xlu0 %929
      %vm931 = vcmp.le.f32.partialorder %v702, %v703
      %v932 = vsel %vm931, %v702, %v703
      %v933 = vsel %vm931, %v713, %v714
      %934 = vmin.index.xlane.f32.xlu0 %v932
      %v935 = vpop.xlane.xlu0 %934
      %936 = vset.pattern.permute.xlu0 %v935
      %937 = vperm.xlu0 %936, %v933
      %v938 = vpop.permute.xlu0 %937
      %vm939 = vcmp.le.f32.partialorder %v704, %v705
      %v940 = vsel %vm939, %v704, %v705
      %v941 = vsel %vm939, %v713, %v714
      %942 = vmin.index.xlane.f32.xlu0 %v940
      %v943 = vpop.xlane.xlu0 %942
      %944 = vset.pattern.permute.xlu0 %v943
      %945 = vperm.xlu0 %944, %v941
      %v946 = vpop.permute.xlu0 %945
      %vm947 = vcmp.le.f32.partialorder %v706, %v707
      %v948 = vsel %vm947, %v706, %v707
      %v949 = vsel %vm947, %v713, %v714
      %950 = vmin.index.xlane.f32.xlu0 %v948
      %v951 = vpop.xlane.xlu0 %950
      %952 = vset.pattern.permute.xlu0 %v951
      %953 = vperm.xlu0 %952, %v949
      %v954 = vpop.permute.xlu0 %953
      %vm955 = vcmp.le.f32.partialorder %v708, %v709
      %v956 = vsel %vm955, %v708, %v709
      %v957 = vsel %vm955, %v713, %v714
      %958 = vmin.index.xlane.f32.xlu0 %v956
      %v959 = vpop.xlane.xlu0 %958
      %960 = vset.pattern.permute.xlu0 %v959
      %961 = vperm.xlu0 %960, %v957
      %v962 = vpop.permute.xlu0 %961
      %vm963 = vcmp.le.f32.partialorder %v710, %v711
      %v964 = vsel %vm963, %v710, %v711
      %v965 = vsel %vm963, %v713, %v714
      %966 = vmin.index.xlane.f32.xlu0 %v964
      %v967 = vpop.xlane.xlu0 %966
      %968 = vset.pattern.permute.xlu0 %v967
      %969 = vperm.xlu0 %968, %v965
      %v970 = vpop.permute.xlu0 %969
      %vm971 = vcmp.eq.s32.totalorder %v713, %v722
      %vm972 = vcmp.eq.s32.totalorder %v714, %v722
      %vm973 = vcmp.eq.s32.totalorder %v713, %v730
      %vm974 = vcmp.eq.s32.totalorder %v714, %v730
      %vm975 = vcmp.eq.s32.totalorder %v713, %v738
      %vm976 = vcmp.eq.s32.totalorder %v714, %v738
      %vm977 = vcmp.eq.s32.totalorder %v713, %v746
      %vm978 = vcmp.eq.s32.totalorder %v714, %v746
      %vm979 = vcmp.eq.s32.totalorder %v713, %v754
      %vm980 = vcmp.eq.s32.totalorder %v714, %v754
      %vm981 = vcmp.eq.s32.totalorder %v713, %v762
      %vm982 = vcmp.eq.s32.totalorder %v714, %v762
      %vm983 = vcmp.eq.s32.totalorder %v713, %v770
      %vm984 = vcmp.eq.s32.totalorder %v714, %v770
      %vm985 = vcmp.eq.s32.totalorder %v713, %v778
      %vm986 = vcmp.eq.s32.totalorder %v714, %v778
      %vm987 = vcmp.eq.s32.totalorder %v713, %v786
      %vm988 = vcmp.eq.s32.totalorder %v714, %v786
      %vm989 = vcmp.eq.s32.totalorder %v713, %v794
      %vm990 = vcmp.eq.s32.totalorder %v714, %v794
      %vm991 = vcmp.eq.s32.totalorder %v713, %v802
      %vm992 = vcmp.eq.s32.totalorder %v714, %v802
      %vm993 = vcmp.eq.s32.totalorder %v713, %v810
      %vm994 = vcmp.eq.s32.totalorder %v714, %v810
      %vm995 = vcmp.eq.s32.totalorder %v713, %v818
      %vm996 = vcmp.eq.s32.totalorder %v714, %v818
      %vm997 = vcmp.eq.s32.totalorder %v713, %v826
      %vm998 = vcmp.eq.s32.totalorder %v714, %v826
      %vm999 = vcmp.eq.s32.totalorder %v713, %v834
      %vm1000 = vcmp.eq.s32.totalorder %v714, %v834
      %vm1001 = vcmp.eq.s32.totalorder %v713, %v842
      %vm1002 = vcmp.eq.s32.totalorder %v714, %v842
      %vm1003 = vcmp.eq.s32.totalorder %v713, %v850
      %vm1004 = vcmp.eq.s32.totalorder %v714, %v850
      %vm1005 = vcmp.eq.s32.totalorder %v713, %v858
      %vm1006 = vcmp.eq.s32.totalorder %v714, %v858
      %vm1007 = vcmp.eq.s32.totalorder %v713, %v866
      %vm1008 = vcmp.eq.s32.totalorder %v714, %v866
      %vm1009 = vcmp.eq.s32.totalorder %v713, %v874
      %vm1010 = vcmp.eq.s32.totalorder %v714, %v874
      %vm1011 = vcmp.eq.s32.totalorder %v713, %v882
      %vm1012 = vcmp.eq.s32.totalorder %v714, %v882
      %vm1013 = vcmp.eq.s32.totalorder %v713, %v890
      %vm1014 = vcmp.eq.s32.totalorder %v714, %v890
      %vm1015 = vcmp.eq.s32.totalorder %v713, %v898
      %vm1016 = vcmp.eq.s32.totalorder %v714, %v898
      %vm1017 = vcmp.eq.s32.totalorder %v713, %v906
      %vm1018 = vcmp.eq.s32.totalorder %v714, %v906
      %vm1019 = vcmp.eq.s32.totalorder %v713, %v914
      %vm1020 = vcmp.eq.s32.totalorder %v714, %v914
      %vm1021 = vcmp.eq.s32.totalorder %v713, %v922
      %vm1022 = vcmp.eq.s32.totalorder %v714, %v922
      %vm1023 = vcmp.eq.s32.totalorder %v713, %v930
      %vm1024 = vcmp.eq.s32.totalorder %v714, %v930
      %vm1025 = vcmp.eq.s32.totalorder %v713, %v938
      %vm1026 = vcmp.eq.s32.totalorder %v714, %v938
      %vm1027 = vcmp.eq.s32.totalorder %v713, %v946
      %vm1028 = vcmp.eq.s32.totalorder %v714, %v946
      %vm1029 = vcmp.eq.s32.totalorder %v713, %v954
      %vm1030 = vcmp.eq.s32.totalorder %v714, %v954
      %vm1031 = vcmp.eq.s32.totalorder %v713, %v962
      %vm1032 = vcmp.eq.s32.totalorder %v714, %v962
      %vm1033 = vcmp.eq.s32.totalorder %v713, %v970
      %vm1034 = vcmp.eq.s32.totalorder %v714, %v970
      %v1035 = vsel %vm971, 1, 0
      %v1036 = vsel %vm972, 1, 0
      %v1037 = vsel %vm973, 1, 0
      %v1038 = vsel %vm974, 1, 0
      %v1039 = vsel %vm975, 1, 0
      %v1040 = vsel %vm976, 1, 0
      %v1041 = vsel %vm977, 1, 0
      %v1042 = vsel %vm978, 1, 0
      %v1043 = vsel %vm979, 1, 0
      %v1044 = vsel %vm980, 1, 0
      %v1045 = vsel %vm981, 1, 0
      %v1046 = vsel %vm982, 1, 0
      %v1047 = vsel %vm983, 1, 0
      %v1048 = vsel %vm984, 1, 0
      %v1049 = vsel %vm985, 1, 0
      %v1050 = vsel %vm986, 1, 0
      %v1051 = vsel %vm987, 1, 0
      %v1052 = vsel %vm988, 1, 0
      %v1053 = vsel %vm989, 1, 0
      %v1054 = vsel %vm990, 1, 0
      %v1055 = vsel %vm991, 1, 0
      %v1056 = vsel %vm992, 1, 0
      %v1057 = vsel %vm993, 1, 0
      %v1058 = vsel %vm994, 1, 0
      %v1059 = vsel %vm995, 1, 0
      %v1060 = vsel %vm996, 1, 0
      %v1061 = vsel %vm997, 1, 0
      %v1062 = vsel %vm998, 1, 0
      %v1063 = vsel %vm999, 1, 0
      %v1064 = vsel %vm1000, 1, 0
      %v1065 = vsel %vm1001, 1, 0
      %v1066 = vsel %vm1002, 1, 0
      %v1067 = vsel %vm1003, 1, 0
      %v1068 = vsel %vm1004, 1, 0
      %v1069 = vsel %vm1005, 1, 0
      %v1070 = vsel %vm1006, 1, 0
      %v1071 = vsel %vm1007, 1, 0
      %v1072 = vsel %vm1008, 1, 0
      %v1073 = vsel %vm1009, 1, 0
      %v1074 = vsel %vm1010, 1, 0
      %v1075 = vsel %vm1011, 1, 0
      %v1076 = vsel %vm1012, 1, 0
      %v1077 = vsel %vm1013, 1, 0
      %v1078 = vsel %vm1014, 1, 0
      %v1079 = vsel %vm1015, 1, 0
      %v1080 = vsel %vm1016, 1, 0
      %v1081 = vsel %vm1017, 1, 0
      %v1082 = vsel %vm1018, 1, 0
      %v1083 = vsel %vm1019, 1, 0
      %v1084 = vsel %vm1020, 1, 0
      %v1085 = vsel %vm1021, 1, 0
      %v1086 = vsel %vm1022, 1, 0
      %v1087 = vsel %vm1023, 1, 0
      %v1088 = vsel %vm1024, 1, 0
      %v1089 = vsel %vm1025, 1, 0
      %v1090 = vsel %vm1026, 1, 0
      %v1091 = vsel %vm1027, 1, 0
      %v1092 = vsel %vm1028, 1, 0
      %v1093 = vsel %vm1029, 1, 0
      %v1094 = vsel %vm1030, 1, 0
      %v1095 = vsel %vm1031, 1, 0
      %v1096 = vsel %vm1032, 1, 0
      %v1097 = vsel %vm1033, 1, 0
      %v1098 = vsel %vm1034, 1, 0
      %v1099 = vcvt.s32.f32 %v1035
      %v1100 = vcvt.s32.f32 %v1036
      %v1101 = vcvt.s32.f32 %v1037
      %v1102 = vcvt.s32.f32 %v1038
      %v1103 = vcvt.s32.f32 %v1039
      %v1104 = vcvt.s32.f32 %v1040
      %v1105 = vcvt.s32.f32 %v1041
      %v1106 = vcvt.s32.f32 %v1042
      %v1107 = vcvt.s32.f32 %v1043
      %v1108 = vcvt.s32.f32 %v1044
      %v1109 = vcvt.s32.f32 %v1045
      %v1110 = vcvt.s32.f32 %v1046
      %v1111 = vcvt.s32.f32 %v1047
      %v1112 = vcvt.s32.f32 %v1048
      %v1113 = vcvt.s32.f32 %v1049
      %v1114 = vcvt.s32.f32 %v1050
      %v1115 = vcvt.s32.f32 %v1051
      %v1116 = vcvt.s32.f32 %v1052
      %v1117 = vcvt.s32.f32 %v1053
      %v1118 = vcvt.s32.f32 %v1054
      %v1119 = vcvt.s32.f32 %v1055
      %v1120 = vcvt.s32.f32 %v1056
      %v1121 = vcvt.s32.f32 %v1057
      %v1122 = vcvt.s32.f32 %v1058
      %v1123 = vcvt.s32.f32 %v1059
      %v1124 = vcvt.s32.f32 %v1060
      %v1125 = vcvt.s32.f32 %v1061
      %v1126 = vcvt.s32.f32 %v1062
      %v1127 = vcvt.s32.f32 %v1063
      %v1128 = vcvt.s32.f32 %v1064
      %v1129 = vcvt.s32.f32 %v1065
      %v1130 = vcvt.s32.f32 %v1066
      %v1131 = vcvt.s32.f32 %v1067
      %v1132 = vcvt.s32.f32 %v1068
      %v1133 = vcvt.s32.f32 %v1069
      %v1134 = vcvt.s32.f32 %v1070
      %v1135 = vcvt.s32.f32 %v1071
      %v1136 = vcvt.s32.f32 %v1072
      %v1137 = vcvt.s32.f32 %v1073
      %v1138 = vcvt.s32.f32 %v1074
      %v1139 = vcvt.s32.f32 %v1075
      %v1140 = vcvt.s32.f32 %v1076
      %v1141 = vcvt.s32.f32 %v1077
      %v1142 = vcvt.s32.f32 %v1078
      %v1143 = vcvt.s32.f32 %v1079
      %v1144 = vcvt.s32.f32 %v1080
      %v1145 = vcvt.s32.f32 %v1081
      %v1146 = vcvt.s32.f32 %v1082
      %v1147 = vcvt.s32.f32 %v1083
      %v1148 = vcvt.s32.f32 %v1084
      %v1149 = vcvt.s32.f32 %v1085
      %v1150 = vcvt.s32.f32 %v1086
      %v1151 = vcvt.s32.f32 %v1087
      %v1152 = vcvt.s32.f32 %v1088
      %v1153 = vcvt.s32.f32 %v1089
      %v1154 = vcvt.s32.f32 %v1090
      %v1155 = vcvt.s32.f32 %v1091
      %v1156 = vcvt.s32.f32 %v1092
      %v1157 = vcvt.s32.f32 %v1093
      %v1158 = vcvt.s32.f32 %v1094
      %v1159 = vcvt.s32.f32 %v1095
      %v1160 = vcvt.s32.f32 %v1096
      %v1161 = vcvt.s32.f32 %v1097
      %v1162 = vcvt.s32.f32 %v1098
      %1163 = vmatprep.subr.mxu0 0.0
      %1164 = vmatpush1.msra.mxu0 %v298
      %1165 = vmatprep.subr.mxu0 0.0
      %1166 = vmatpush1.msra.mxu0 %v297
      %1167 = vmatprep.subr.mxu0 0.0
      %1168 = vmatpush1.msra.mxu0 %v296
      %1169 = vmatprep.subr.mxu0 0.0
      %1170 = vmatpush1.msra.mxu0 %v295
      %1171 = vmatprep.subr.mxu0 0.0
      %1172 = vmatpush1.msra.mxu0 %v294
      %1173 = vmatprep.subr.mxu0 0.0
      %1174 = vmatpush1.msra.mxu0 %v293
      %1175 = vmatprep.subr.mxu0 0.0
      %1176 = vmatpush1.msra.mxu0 %v292
      %1177 = vmatprep.subr.mxu0 0.0
      %1178 = vmatpush1.msra.mxu0 %v291
      %1179 = vmatprep.subr.mxu0 0.0
      %1180 = vmatpush1.msra.mxu0 %v290
      %1181 = vmatprep.subr.mxu0 0.0
      %1182 = vmatpush1.msra.mxu0 %v289
      %1183 = vmatprep.subr.mxu0 0.0
      %1184 = vmatpush1.msra.mxu0 %v288
      %1185 = vmatprep.subr.mxu0 0.0
      %1186 = vmatpush1.msra.mxu0 %v287
      %1187 = vmatprep.subr.mxu0 0.0
      %1188 = vmatpush1.msra.mxu0 %v286
      %1189 = vmatprep.subr.mxu0 0.0
      %1190 = vmatpush1.msra.mxu0 %v285
      %1191 = vmatprep.subr.mxu0 0.0
      %1192 = vmatpush1.msra.mxu0 %v284
      %1193 = vmatprep.subr.mxu0 0.0
      %1194 = vmatpush1.msra.mxu0 %v283
      %1195 = vmatprep.subr.mxu0 0.0
      %1196 = vmatpush2.msra.mxu0 %v314
      %1197 = vmatprep.subr.mxu0 0.0
      %1198 = vmatpush2.msra.mxu0 %v313
      %1199 = vmatprep.subr.mxu0 0.0
      %1200 = vmatpush2.msra.mxu0 %v312
      %1201 = vmatprep.subr.mxu0 0.0
      %1202 = vmatpush2.msra.mxu0 %v311
      %1203 = vmatprep.subr.mxu0 0.0
      %1204 = vmatpush2.msra.mxu0 %v310
      %1205 = vmatprep.subr.mxu0 0.0
      %1206 = vmatpush2.msra.mxu0 %v309
      %1207 = vmatprep.subr.mxu0 0.0
      %1208 = vmatpush2.msra.mxu0 %v308
      %1209 = vmatprep.subr.mxu0 0.0
      %1210 = vmatpush2.msra.mxu0 %v307
      %1211 = vmatprep.subr.mxu0 0.0
      %1212 = vmatpush2.msra.mxu0 %v306
      %1213 = vmatprep.subr.mxu0 0.0
      %1214 = vmatpush2.msra.mxu0 %v305
      %1215 = vmatprep.subr.mxu0 0.0
      %1216 = vmatpush2.msra.mxu0 %v304
      %1217 = vmatprep.subr.mxu0 0.0
      %1218 = vmatpush2.msra.mxu0 %v303
      %1219 = vmatprep.subr.mxu0 0.0
      %1220 = vmatpush2.msra.mxu0 %v302
      %1221 = vmatprep.subr.mxu0 0.0
      %1222 = vmatpush2.msra.mxu0 %v301
      %1223 = vmatprep.subr.mxu0 0.0
      %1224 = vmatpush2.msra.mxu0 %v300
      %1225 = vmatprep.subr.mxu0 0.0
      %1226 = vmatpush2.msra.mxu0 %v299
      %1227 = vmatprep.mubr.f32.mxu0 %v1100
      %1228 = vmatmul.mubr.f32.gmra.mxu0 %v1099
      %v1229 = vpop.f32.mrf.mxu0
      %v1230 = vadd.f32 0.0, %v1229
      %v1231 = vpop.f32.mrf.mxu0
      %1232 = vmatprep.mubr.f32.mxu0 %v1102
      %1233 = vmatmul.mubr.f32.gmra.mxu0 %v1101
      %v1234 = vpop.f32.mrf.mxu0
      %v1235 = vadd.f32 0.0, %v1234
      %v1236 = vpop.f32.mrf.mxu0
      %1237 = vmatprep.mubr.f32.mxu0 %v1104
      %1238 = vmatmul.mubr.f32.gmra.mxu0 %v1103
      %v1239 = vpop.f32.mrf.mxu0
      %v1240 = vadd.f32 0.0, %v1239
      %v1241 = vpop.f32.mrf.mxu0
      %1242 = vmatprep.mubr.f32.mxu0 %v1106
      %1243 = vmatmul.mubr.f32.gmra.mxu0 %v1105
      %v1244 = vpop.f32.mrf.mxu0
      %v1245 = vadd.f32 0.0, %v1244
      %v1246 = vpop.f32.mrf.mxu0
      %1247 = vmatprep.mubr.f32.mxu0 %v1108
      %1248 = vmatmul.mubr.f32.gmra.mxu0 %v1107
      %v1249 = vpop.f32.mrf.mxu0
      %v1250 = vadd.f32 0.0, %v1249
      %v1251 = vpop.f32.mrf.mxu0
      %1252 = vmatprep.mubr.f32.mxu0 %v1110
      %1253 = vmatmul.mubr.f32.gmra.mxu0 %v1109
      %v1254 = vpop.f32.mrf.mxu0
      %v1255 = vadd.f32 0.0, %v1254
      %v1256 = vpop.f32.mrf.mxu0
      %1257 = vmatprep.mubr.f32.mxu0 %v1112
      %1258 = vmatmul.mubr.f32.gmra.mxu0 %v1111
      %v1259 = vpop.f32.mrf.mxu0
      %v1260 = vadd.f32 0.0, %v1259
      %v1261 = vpop.f32.mrf.mxu0
      %1262 = vmatprep.mubr.f32.mxu0 %v1114
      %1263 = vmatmul.mubr.f32.gmra.mxu0 %v1113
      %v1264 = vpop.f32.mrf.mxu0
      %v1265 = vadd.f32 0.0, %v1264
      %v1266 = vpop.f32.mrf.mxu0
      %1267 = vmatprep.mubr.f32.mxu0 %v1116
      %1268 = vmatmul.mubr.f32.gmra.mxu0 %v1115
      %v1269 = vpop.f32.mrf.mxu0
      %v1270 = vadd.f32 0.0, %v1269
      %v1271 = vpop.f32.mrf.mxu0
      %1272 = vmatprep.mubr.f32.mxu0 %v1118
      %1273 = vmatmul.mubr.f32.gmra.mxu0 %v1117
      %v1274 = vpop.f32.mrf.mxu0
      %v1275 = vadd.f32 0.0, %v1274
      %v1276 = vpop.f32.mrf.mxu0
      %1277 = vmatprep.mubr.f32.mxu0 %v1120
      %1278 = vmatmul.mubr.f32.gmra.mxu0 %v1119
      %v1279 = vpop.f32.mrf.mxu0
      %v1280 = vadd.f32 0.0, %v1279
      %v1281 = vpop.f32.mrf.mxu0
      %1282 = vmatprep.mubr.f32.mxu0 %v1122
      %1283 = vmatmul.mubr.f32.gmra.mxu0 %v1121
      %v1284 = vpop.f32.mrf.mxu0
      %v1285 = vadd.f32 0.0, %v1284
      %v1286 = vpop.f32.mrf.mxu0
      %1287 = vmatprep.mubr.f32.mxu0 %v1124
      %1288 = vmatmul.mubr.f32.gmra.mxu0 %v1123
      %v1289 = vpop.f32.mrf.mxu0
      %v1290 = vadd.f32 0.0, %v1289
      %v1291 = vpop.f32.mrf.mxu0
      %1292 = vmatprep.mubr.f32.mxu0 %v1126
      %1293 = vmatmul.mubr.f32.gmra.mxu0 %v1125
      %v1294 = vpop.f32.mrf.mxu0
      %v1295 = vadd.f32 0.0, %v1294
      %v1296 = vpop.f32.mrf.mxu0
      %1297 = vmatprep.mubr.f32.mxu0 %v1128
      %1298 = vmatmul.mubr.f32.gmra.mxu0 %v1127
      %v1299 = vpop.f32.mrf.mxu0
      %v1300 = vadd.f32 0.0, %v1299
      %v1301 = vpop.f32.mrf.mxu0
      %1302 = vmatprep.mubr.f32.mxu0 %v1130
      %1303 = vmatmul.mubr.f32.gmra.mxu0 %v1129
      %v1304 = vpop.f32.mrf.mxu0
      %v1305 = vadd.f32 0.0, %v1304
      %v1306 = vpop.f32.mrf.mxu0
      %1307 = vmatprep.mubr.f32.mxu0 %v1132
      %1308 = vmatmul.mubr.f32.gmra.mxu0 %v1131
      %v1309 = vpop.f32.mrf.mxu0
      %v1310 = vadd.f32 0.0, %v1309
      %v1311 = vpop.f32.mrf.mxu0
      %1312 = vmatprep.mubr.f32.mxu0 %v1134
      %1313 = vmatmul.mubr.f32.gmra.mxu0 %v1133
      %v1314 = vpop.f32.mrf.mxu0
      %v1315 = vadd.f32 0.0, %v1314
      %v1316 = vpop.f32.mrf.mxu0
      %1317 = vmatprep.mubr.f32.mxu0 %v1136
      %1318 = vmatmul.mubr.f32.gmra.mxu0 %v1135
      %v1319 = vpop.f32.mrf.mxu0
      %v1320 = vadd.f32 0.0, %v1319
      %v1321 = vpop.f32.mrf.mxu0
      %1322 = vmatprep.mubr.f32.mxu0 %v1138
      %1323 = vmatmul.mubr.f32.gmra.mxu0 %v1137
      %v1324 = vpop.f32.mrf.mxu0
      %v1325 = vadd.f32 0.0, %v1324
      %v1326 = vpop.f32.mrf.mxu0
      %1327 = vmatprep.mubr.f32.mxu0 %v1140
      %1328 = vmatmul.mubr.f32.gmra.mxu0 %v1139
      %v1329 = vpop.f32.mrf.mxu0
      %v1330 = vadd.f32 0.0, %v1329
      %v1331 = vpop.f32.mrf.mxu0
      %1332 = vmatprep.mubr.f32.mxu0 %v1142
      %1333 = vmatmul.mubr.f32.gmra.mxu0 %v1141
      %v1334 = vpop.f32.mrf.mxu0
      %v1335 = vadd.f32 0.0, %v1334
      %v1336 = vpop.f32.mrf.mxu0
      %1337 = vmatprep.mubr.f32.mxu0 %v1144
      %1338 = vmatmul.mubr.f32.gmra.mxu0 %v1143
      %v1339 = vpop.f32.mrf.mxu0
      %v1340 = vadd.f32 0.0, %v1339
      %v1341 = vpop.f32.mrf.mxu0
      %1342 = vmatprep.mubr.f32.mxu0 %v1146
      %1343 = vmatmul.mubr.f32.gmra.mxu0 %v1145
      %v1344 = vpop.f32.mrf.mxu0
      %v1345 = vadd.f32 0.0, %v1344
      %v1346 = vpop.f32.mrf.mxu0
      %1347 = vmatprep.mubr.f32.mxu0 %v1148
      %1348 = vmatmul.mubr.f32.gmra.mxu0 %v1147
      %v1349 = vpop.f32.mrf.mxu0
      %v1350 = vadd.f32 0.0, %v1349
      %v1351 = vpop.f32.mrf.mxu0
      %1352 = vmatprep.mubr.f32.mxu0 %v1150
      %1353 = vmatmul.mubr.f32.gmra.mxu0 %v1149
      %v1354 = vpop.f32.mrf.mxu0
      %v1355 = vadd.f32 0.0, %v1354
      %v1356 = vpop.f32.mrf.mxu0
      %1357 = vmatprep.mubr.f32.mxu0 %v1152
      %1358 = vmatmul.mubr.f32.gmra.mxu0 %v1151
      %v1359 = vpop.f32.mrf.mxu0
      %v1360 = vadd.f32 0.0, %v1359
      %v1361 = vpop.f32.mrf.mxu0
      %1362 = vmatprep.mubr.f32.mxu0 %v1154
      %1363 = vmatmul.mubr.f32.gmra.mxu0 %v1153
      %v1364 = vpop.f32.mrf.mxu0
      %v1365 = vadd.f32 0.0, %v1364
      %v1366 = vpop.f32.mrf.mxu0
      %1367 = vmatprep.mubr.f32.mxu0 %v1156
      %1368 = vmatmul.mubr.f32.gmra.mxu0 %v1155
      %v1369 = vpop.f32.mrf.mxu0
      %v1370 = vadd.f32 0.0, %v1369
      %v1371 = vpop.f32.mrf.mxu0
      %1372 = vmatprep.mubr.f32.mxu0 %v1158
      %1373 = vmatmul.mubr.f32.gmra.mxu0 %v1157
      %v1374 = vpop.f32.mrf.mxu0
      %v1375 = vadd.f32 0.0, %v1374
      %v1376 = vpop.f32.mrf.mxu0
      %1377 = vmatprep.mubr.f32.mxu0 %v1160
      %1378 = vmatmul.mubr.f32.gmra.mxu0 %v1159
      %v1379 = vpop.f32.mrf.mxu0
      %v1380 = vadd.f32 0.0, %v1379
      %v1381 = vpop.f32.mrf.mxu0
      %1382 = vmatprep.mubr.f32.mxu0 %v1162
      %1383 = vmatmul.mubr.f32.gmra.mxu0 %v1161
      %v1384 = vpop.f32.mrf.mxu0
      %v1385 = vadd.f32 0.0, %v1384
      %v1386 = vpop.f32.mrf.mxu0
      %1387 = vdwg.mxu0
      %1388 = vst [vmem:[%s239] sm:$0xff] %v1230
      %1389 = vst [vmem:[%s239 + $0x8] sm:$0xff] %v1235
      %1390 = vst [vmem:[%s239 + $0x10] sm:$0xff] %v1240
      %1391 = vst [vmem:[%s239 + $0x18] sm:$0xff] %v1245
      %1392 = vst [vmem:[%s239 + $0x20] sm:$0xff] %v1250
      %1393 = vst [vmem:[%s239 + $0x28] sm:$0xff] %v1255
      %1394 = vst [vmem:[%s239 + $0x30] sm:$0xff] %v1260
      %1395 = vst [vmem:[%s239 + $0x38] sm:$0xff] %v1265
      %1396 = vst [vmem:[%s239 + $0x40] sm:$0xff] %v1270
      %1397 = vst [vmem:[%s239 + $0x48] sm:$0xff] %v1275
      %1398 = vst [vmem:[%s239 + $0x50] sm:$0xff] %v1280
      %1399 = vst [vmem:[%s239 + $0x58] sm:$0xff] %v1285
      %1400 = vst [vmem:[%s239 + $0x60] sm:$0xff] %v1290
      %1401 = vst [vmem:[%s239 + $0x68] sm:$0xff] %v1295
      %1402 = vst [vmem:[%s239 + $0x70] sm:$0xff] %v1300
      %1403 = vst [vmem:[%s239 + $0x78] sm:$0xff] %v1305
      %1404 = vst [vmem:[%s239 + $0x80] sm:$0xff] %v1310
      %1405 = vst [vmem:[%s239 + $0x88] sm:$0xff] %v1315
      %1406 = vst [vmem:[%s239 + $0x90] sm:$0xff] %v1320
      %1407 = vst [vmem:[%s239 + $0x98] sm:$0xff] %v1325
      %1408 = vst [vmem:[%s239 + $0xa0] sm:$0xff] %v1330
      %1409 = vst [vmem:[%s239 + $0xa8] sm:$0xff] %v1335
      %1410 = vst [vmem:[%s239 + $0xb0] sm:$0xff] %v1340
      %1411 = vst [vmem:[%s239 + $0xb8] sm:$0xff] %v1345
      %1412 = vst [vmem:[%s239 + $0xc0] sm:$0xff] %v1350
      %1413 = vst [vmem:[%s239 + $0xc8] sm:$0xff] %v1355
      %1414 = vst [vmem:[%s239 + $0xd0] sm:$0xff] %v1360
      %1415 = vst [vmem:[%s239 + $0xd8] sm:$0xff] %v1365
      %1416 = vst [vmem:[%s239 + $0xe0] sm:$0xff] %v1370
      %1417 = vst [vmem:[%s239 + $0xe8] sm:$0xff] %v1375
      %1418 = vst [vmem:[%s239 + $0xf0] sm:$0xff] %v1380
      %1419 = vst [vmem:[%s239 + $0xf8] sm:$0xff] %v1385
      %v1420 = vlaneseq
      %v1421 = vshrl.u32 %v1420, 7
      %v1422 = vsub.s32 0, %v1421
      %v1423 = vrot.slane %v722, %v1422
      %v1424 = vlaneseq
      %v1425 = vshrl.u32 %v1424, 7
      %v1426 = vsub.s32 1, %v1425
      %v1427 = vrot.slane %v722, %v1426
      %v1428 = vlaneseq
      %v1429 = vshrl.u32 %v1428, 7
      %v1430 = vsub.s32 2, %v1429
      %v1431 = vrot.slane %v722, %v1430
      %v1432 = vlaneseq
      %v1433 = vshrl.u32 %v1432, 7
      %v1434 = vsub.s32 3, %v1433
      %v1435 = vrot.slane %v722, %v1434
      %v1436 = vlaneseq
      %v1437 = vshrl.u32 %v1436, 7
      %v1438 = vsub.s32 4, %v1437
      %v1439 = vrot.slane %v722, %v1438
      %v1440 = vlaneseq
      %v1441 = vshrl.u32 %v1440, 7
      %v1442 = vsub.s32 5, %v1441
      %v1443 = vrot.slane %v722, %v1442
      %v1444 = vlaneseq
      %v1445 = vshrl.u32 %v1444, 7
      %v1446 = vsub.s32 6, %v1445
      %v1447 = vrot.slane %v722, %v1446
      %v1448 = vlaneseq
      %v1449 = vshrl.u32 %v1448, 7
      %v1450 = vsub.s32 7, %v1449
      %v1451 = vrot.slane %v722, %v1450
      %v1452 = vlaneseq
      %v1453 = vshrl.u32 %v1452, 7
      %v1454 = vsub.s32 0, %v1453
      %v1455 = vrot.slane %v730, %v1454
      %v1456 = vlaneseq
      %v1457 = vshrl.u32 %v1456, 7
      %v1458 = vsub.s32 1, %v1457
      %v1459 = vrot.slane %v730, %v1458
      %v1460 = vlaneseq
      %v1461 = vshrl.u32 %v1460, 7
      %v1462 = vsub.s32 2, %v1461
      %v1463 = vrot.slane %v730, %v1462
      %v1464 = vlaneseq
      %v1465 = vshrl.u32 %v1464, 7
      %v1466 = vsub.s32 3, %v1465
      %v1467 = vrot.slane %v730, %v1466
      %v1468 = vlaneseq
      %v1469 = vshrl.u32 %v1468, 7
      %v1470 = vsub.s32 4, %v1469
      %v1471 = vrot.slane %v730, %v1470
      %v1472 = vlaneseq
      %v1473 = vshrl.u32 %v1472, 7
      %v1474 = vsub.s32 5, %v1473
      %v1475 = vrot.slane %v730, %v1474
      %v1476 = vlaneseq
      %v1477 = vshrl.u32 %v1476, 7
      %v1478 = vsub.s32 6, %v1477
      %v1479 = vrot.slane %v730, %v1478
      %v1480 = vlaneseq
      %v1481 = vshrl.u32 %v1480, 7
      %v1482 = vsub.s32 7, %v1481
      %v1483 = vrot.slane %v730, %v1482
      %v1484 = vlaneseq
      %v1485 = vshrl.u32 %v1484, 7
      %v1486 = vsub.s32 0, %v1485
      %v1487 = vrot.slane %v738, %v1486
      %v1488 = vlaneseq
      %v1489 = vshrl.u32 %v1488, 7
      %v1490 = vsub.s32 1, %v1489
      %v1491 = vrot.slane %v738, %v1490
      %v1492 = vlaneseq
      %v1493 = vshrl.u32 %v1492, 7
      %v1494 = vsub.s32 2, %v1493
      %v1495 = vrot.slane %v738, %v1494
      %v1496 = vlaneseq
      %v1497 = vshrl.u32 %v1496, 7
      %v1498 = vsub.s32 3, %v1497
      %v1499 = vrot.slane %v738, %v1498
      %v1500 = vlaneseq
      %v1501 = vshrl.u32 %v1500, 7
      %v1502 = vsub.s32 4, %v1501
      %v1503 = vrot.slane %v738, %v1502
      %v1504 = vlaneseq
      %v1505 = vshrl.u32 %v1504, 7
      %v1506 = vsub.s32 5, %v1505
      %v1507 = vrot.slane %v738, %v1506
      %v1508 = vlaneseq
      %v1509 = vshrl.u32 %v1508, 7
      %v1510 = vsub.s32 6, %v1509
      %v1511 = vrot.slane %v738, %v1510
      %v1512 = vlaneseq
      %v1513 = vshrl.u32 %v1512, 7
      %v1514 = vsub.s32 7, %v1513
      %v1515 = vrot.slane %v738, %v1514
      %v1516 = vlaneseq
      %v1517 = vshrl.u32 %v1516, 7
      %v1518 = vsub.s32 0, %v1517
      %v1519 = vrot.slane %v746, %v1518
      %v1520 = vlaneseq
      %v1521 = vshrl.u32 %v1520, 7
      %v1522 = vsub.s32 1, %v1521
      %v1523 = vrot.slane %v746, %v1522
      %v1524 = vlaneseq
      %v1525 = vshrl.u32 %v1524, 7
      %v1526 = vsub.s32 2, %v1525
      %v1527 = vrot.slane %v746, %v1526
      %v1528 = vlaneseq
      %v1529 = vshrl.u32 %v1528, 7
      %v1530 = vsub.s32 3, %v1529
      %v1531 = vrot.slane %v746, %v1530
      %v1532 = vlaneseq
      %v1533 = vshrl.u32 %v1532, 7
      %v1534 = vsub.s32 4, %v1533
      %v1535 = vrot.slane %v746, %v1534
      %v1536 = vlaneseq
      %v1537 = vshrl.u32 %v1536, 7
      %v1538 = vsub.s32 5, %v1537
      %v1539 = vrot.slane %v746, %v1538
      %v1540 = vlaneseq
      %v1541 = vshrl.u32 %v1540, 7
      %v1542 = vsub.s32 6, %v1541
      %v1543 = vrot.slane %v746, %v1542
      %v1544 = vlaneseq
      %v1545 = vshrl.u32 %v1544, 7
      %v1546 = vsub.s32 7, %v1545
      %v1547 = vrot.slane %v746, %v1546
      %v1548 = vlaneseq
      %v1549 = vshrl.u32 %v1548, 7
      %v1550 = vsub.s32 0, %v1549
      %v1551 = vrot.slane %v754, %v1550
      %v1552 = vlaneseq
      %v1553 = vshrl.u32 %v1552, 7
      %v1554 = vsub.s32 1, %v1553
      %v1555 = vrot.slane %v754, %v1554
      %v1556 = vlaneseq
      %v1557 = vshrl.u32 %v1556, 7
      %v1558 = vsub.s32 2, %v1557
      %v1559 = vrot.slane %v754, %v1558
      %v1560 = vlaneseq
      %v1561 = vshrl.u32 %v1560, 7
      %v1562 = vsub.s32 3, %v1561
      %v1563 = vrot.slane %v754, %v1562
      %v1564 = vlaneseq
      %v1565 = vshrl.u32 %v1564, 7
      %v1566 = vsub.s32 4, %v1565
      %v1567 = vrot.slane %v754, %v1566
      %v1568 = vlaneseq
      %v1569 = vshrl.u32 %v1568, 7
      %v1570 = vsub.s32 5, %v1569
      %v1571 = vrot.slane %v754, %v1570
      %v1572 = vlaneseq
      %v1573 = vshrl.u32 %v1572, 7
      %v1574 = vsub.s32 6, %v1573
      %v1575 = vrot.slane %v754, %v1574
      %v1576 = vlaneseq
      %v1577 = vshrl.u32 %v1576, 7
      %v1578 = vsub.s32 7, %v1577
      %v1579 = vrot.slane %v754, %v1578
      %v1580 = vlaneseq
      %v1581 = vshrl.u32 %v1580, 7
      %v1582 = vsub.s32 0, %v1581
      %v1583 = vrot.slane %v762, %v1582
      %v1584 = vlaneseq
      %v1585 = vshrl.u32 %v1584, 7
      %v1586 = vsub.s32 1, %v1585
      %v1587 = vrot.slane %v762, %v1586
      %v1588 = vlaneseq
      %v1589 = vshrl.u32 %v1588, 7
      %v1590 = vsub.s32 2, %v1589
      %v1591 = vrot.slane %v762, %v1590
      %v1592 = vlaneseq
      %v1593 = vshrl.u32 %v1592, 7
      %v1594 = vsub.s32 3, %v1593
      %v1595 = vrot.slane %v762, %v1594
      %v1596 = vlaneseq
      %v1597 = vshrl.u32 %v1596, 7
      %v1598 = vsub.s32 4, %v1597
      %v1599 = vrot.slane %v762, %v1598
      %v1600 = vlaneseq
      %v1601 = vshrl.u32 %v1600, 7
      %v1602 = vsub.s32 5, %v1601
      %v1603 = vrot.slane %v762, %v1602
      %v1604 = vlaneseq
      %v1605 = vshrl.u32 %v1604, 7
      %v1606 = vsub.s32 6, %v1605
      %v1607 = vrot.slane %v762, %v1606
      %v1608 = vlaneseq
      %v1609 = vshrl.u32 %v1608, 7
      %v1610 = vsub.s32 7, %v1609
      %v1611 = vrot.slane %v762, %v1610
      %v1612 = vlaneseq
      %v1613 = vshrl.u32 %v1612, 7
      %v1614 = vsub.s32 0, %v1613
      %v1615 = vrot.slane %v770, %v1614
      %v1616 = vlaneseq
      %v1617 = vshrl.u32 %v1616, 7
      %v1618 = vsub.s32 1, %v1617
      %v1619 = vrot.slane %v770, %v1618
      %v1620 = vlaneseq
      %v1621 = vshrl.u32 %v1620, 7
      %v1622 = vsub.s32 2, %v1621
      %v1623 = vrot.slane %v770, %v1622
      %v1624 = vlaneseq
      %v1625 = vshrl.u32 %v1624, 7
      %v1626 = vsub.s32 3, %v1625
      %v1627 = vrot.slane %v770, %v1626
      %v1628 = vlaneseq
      %v1629 = vshrl.u32 %v1628, 7
      %v1630 = vsub.s32 4, %v1629
      %v1631 = vrot.slane %v770, %v1630
      %v1632 = vlaneseq
      %v1633 = vshrl.u32 %v1632, 7
      %v1634 = vsub.s32 5, %v1633
      %v1635 = vrot.slane %v770, %v1634
      %v1636 = vlaneseq
      %v1637 = vshrl.u32 %v1636, 7
      %v1638 = vsub.s32 6, %v1637
      %v1639 = vrot.slane %v770, %v1638
      %v1640 = vlaneseq
      %v1641 = vshrl.u32 %v1640, 7
      %v1642 = vsub.s32 7, %v1641
      %v1643 = vrot.slane %v770, %v1642
      %v1644 = vlaneseq
      %v1645 = vshrl.u32 %v1644, 7
      %v1646 = vsub.s32 0, %v1645
      %v1647 = vrot.slane %v778, %v1646
      %v1648 = vlaneseq
      %v1649 = vshrl.u32 %v1648, 7
      %v1650 = vsub.s32 1, %v1649
      %v1651 = vrot.slane %v778, %v1650
      %v1652 = vlaneseq
      %v1653 = vshrl.u32 %v1652, 7
      %v1654 = vsub.s32 2, %v1653
      %v1655 = vrot.slane %v778, %v1654
      %v1656 = vlaneseq
      %v1657 = vshrl.u32 %v1656, 7
      %v1658 = vsub.s32 3, %v1657
      %v1659 = vrot.slane %v778, %v1658
      %v1660 = vlaneseq
      %v1661 = vshrl.u32 %v1660, 7
      %v1662 = vsub.s32 4, %v1661
      %v1663 = vrot.slane %v778, %v1662
      %v1664 = vlaneseq
      %v1665 = vshrl.u32 %v1664, 7
      %v1666 = vsub.s32 5, %v1665
      %v1667 = vrot.slane %v778, %v1666
      %v1668 = vlaneseq
      %v1669 = vshrl.u32 %v1668, 7
      %v1670 = vsub.s32 6, %v1669
      %v1671 = vrot.slane %v778, %v1670
      %v1672 = vlaneseq
      %v1673 = vshrl.u32 %v1672, 7
      %v1674 = vsub.s32 7, %v1673
      %v1675 = vrot.slane %v778, %v1674
      %v1676 = vlaneseq
      %v1677 = vshrl.u32 %v1676, 7
      %v1678 = vsub.s32 0, %v1677
      %v1679 = vrot.slane %v786, %v1678
      %v1680 = vlaneseq
      %v1681 = vshrl.u32 %v1680, 7
      %v1682 = vsub.s32 1, %v1681
      %v1683 = vrot.slane %v786, %v1682
      %v1684 = vlaneseq
      %v1685 = vshrl.u32 %v1684, 7
      %v1686 = vsub.s32 2, %v1685
      %v1687 = vrot.slane %v786, %v1686
      %v1688 = vlaneseq
      %v1689 = vshrl.u32 %v1688, 7
      %v1690 = vsub.s32 3, %v1689
      %v1691 = vrot.slane %v786, %v1690
      %v1692 = vlaneseq
      %v1693 = vshrl.u32 %v1692, 7
      %v1694 = vsub.s32 4, %v1693
      %v1695 = vrot.slane %v786, %v1694
      %v1696 = vlaneseq
      %v1697 = vshrl.u32 %v1696, 7
      %v1698 = vsub.s32 5, %v1697
      %v1699 = vrot.slane %v786, %v1698
      %v1700 = vlaneseq
      %v1701 = vshrl.u32 %v1700, 7
      %v1702 = vsub.s32 6, %v1701
      %v1703 = vrot.slane %v786, %v1702
      %v1704 = vlaneseq
      %v1705 = vshrl.u32 %v1704, 7
      %v1706 = vsub.s32 7, %v1705
      %v1707 = vrot.slane %v786, %v1706
      %v1708 = vlaneseq
      %v1709 = vshrl.u32 %v1708, 7
      %v1710 = vsub.s32 0, %v1709
      %v1711 = vrot.slane %v794, %v1710
      %v1712 = vlaneseq
      %v1713 = vshrl.u32 %v1712, 7
      %v1714 = vsub.s32 1, %v1713
      %v1715 = vrot.slane %v794, %v1714
      %v1716 = vlaneseq
      %v1717 = vshrl.u32 %v1716, 7
      %v1718 = vsub.s32 2, %v1717
      %v1719 = vrot.slane %v794, %v1718
      %v1720 = vlaneseq
      %v1721 = vshrl.u32 %v1720, 7
      %v1722 = vsub.s32 3, %v1721
      %v1723 = vrot.slane %v794, %v1722
      %v1724 = vlaneseq
      %v1725 = vshrl.u32 %v1724, 7
      %v1726 = vsub.s32 4, %v1725
      %v1727 = vrot.slane %v794, %v1726
      %v1728 = vlaneseq
      %v1729 = vshrl.u32 %v1728, 7
      %v1730 = vsub.s32 5, %v1729
      %v1731 = vrot.slane %v794, %v1730
      %v1732 = vlaneseq
      %v1733 = vshrl.u32 %v1732, 7
      %v1734 = vsub.s32 6, %v1733
      %v1735 = vrot.slane %v794, %v1734
      %v1736 = vlaneseq
      %v1737 = vshrl.u32 %v1736, 7
      %v1738 = vsub.s32 7, %v1737
      %v1739 = vrot.slane %v794, %v1738
      %v1740 = vlaneseq
      %v1741 = vshrl.u32 %v1740, 7
      %v1742 = vsub.s32 0, %v1741
      %v1743 = vrot.slane %v802, %v1742
      %v1744 = vlaneseq
      %v1745 = vshrl.u32 %v1744, 7
      %v1746 = vsub.s32 1, %v1745
      %v1747 = vrot.slane %v802, %v1746
      %v1748 = vlaneseq
      %v1749 = vshrl.u32 %v1748, 7
      %v1750 = vsub.s32 2, %v1749
      %v1751 = vrot.slane %v802, %v1750
      %v1752 = vlaneseq
      %v1753 = vshrl.u32 %v1752, 7
      %v1754 = vsub.s32 3, %v1753
      %v1755 = vrot.slane %v802, %v1754
      %v1756 = vlaneseq
      %v1757 = vshrl.u32 %v1756, 7
      %v1758 = vsub.s32 4, %v1757
      %v1759 = vrot.slane %v802, %v1758
      %v1760 = vlaneseq
      %v1761 = vshrl.u32 %v1760, 7
      %v1762 = vsub.s32 5, %v1761
      %v1763 = vrot.slane %v802, %v1762
      %v1764 = vlaneseq
      %v1765 = vshrl.u32 %v1764, 7
      %v1766 = vsub.s32 6, %v1765
      %v1767 = vrot.slane %v802, %v1766
      %v1768 = vlaneseq
      %v1769 = vshrl.u32 %v1768, 7
      %v1770 = vsub.s32 7, %v1769
      %v1771 = vrot.slane %v802, %v1770
      %v1772 = vlaneseq
      %v1773 = vshrl.u32 %v1772, 7
      %v1774 = vsub.s32 0, %v1773
      %v1775 = vrot.slane %v810, %v1774
      %v1776 = vlaneseq
      %v1777 = vshrl.u32 %v1776, 7
      %v1778 = vsub.s32 1, %v1777
      %v1779 = vrot.slane %v810, %v1778
      %v1780 = vlaneseq
      %v1781 = vshrl.u32 %v1780, 7
      %v1782 = vsub.s32 2, %v1781
      %v1783 = vrot.slane %v810, %v1782
      %v1784 = vlaneseq
      %v1785 = vshrl.u32 %v1784, 7
      %v1786 = vsub.s32 3, %v1785
      %v1787 = vrot.slane %v810, %v1786
      %v1788 = vlaneseq
      %v1789 = vshrl.u32 %v1788, 7
      %v1790 = vsub.s32 4, %v1789
      %v1791 = vrot.slane %v810, %v1790
      %v1792 = vlaneseq
      %v1793 = vshrl.u32 %v1792, 7
      %v1794 = vsub.s32 5, %v1793
      %v1795 = vrot.slane %v810, %v1794
      %v1796 = vlaneseq
      %v1797 = vshrl.u32 %v1796, 7
      %v1798 = vsub.s32 6, %v1797
      %v1799 = vrot.slane %v810, %v1798
      %v1800 = vlaneseq
      %v1801 = vshrl.u32 %v1800, 7
      %v1802 = vsub.s32 7, %v1801
      %v1803 = vrot.slane %v810, %v1802
      %v1804 = vlaneseq
      %v1805 = vshrl.u32 %v1804, 7
      %v1806 = vsub.s32 0, %v1805
      %v1807 = vrot.slane %v818, %v1806
      %v1808 = vlaneseq
      %v1809 = vshrl.u32 %v1808, 7
      %v1810 = vsub.s32 1, %v1809
      %v1811 = vrot.slane %v818, %v1810
      %v1812 = vlaneseq
      %v1813 = vshrl.u32 %v1812, 7
      %v1814 = vsub.s32 2, %v1813
      %v1815 = vrot.slane %v818, %v1814
      %v1816 = vlaneseq
      %v1817 = vshrl.u32 %v1816, 7
      %v1818 = vsub.s32 3, %v1817
      %v1819 = vrot.slane %v818, %v1818
      %v1820 = vlaneseq
      %v1821 = vshrl.u32 %v1820, 7
      %v1822 = vsub.s32 4, %v1821
      %v1823 = vrot.slane %v818, %v1822
      %v1824 = vlaneseq
      %v1825 = vshrl.u32 %v1824, 7
      %v1826 = vsub.s32 5, %v1825
      %v1827 = vrot.slane %v818, %v1826
      %v1828 = vlaneseq
      %v1829 = vshrl.u32 %v1828, 7
      %v1830 = vsub.s32 6, %v1829
      %v1831 = vrot.slane %v818, %v1830
      %v1832 = vlaneseq
      %v1833 = vshrl.u32 %v1832, 7
      %v1834 = vsub.s32 7, %v1833
      %v1835 = vrot.slane %v818, %v1834
      %v1836 = vlaneseq
      %v1837 = vshrl.u32 %v1836, 7
      %v1838 = vsub.s32 0, %v1837
      %v1839 = vrot.slane %v826, %v1838
      %v1840 = vlaneseq
      %v1841 = vshrl.u32 %v1840, 7
      %v1842 = vsub.s32 1, %v1841
      %v1843 = vrot.slane %v826, %v1842
      %v1844 = vlaneseq
      %v1845 = vshrl.u32 %v1844, 7
      %v1846 = vsub.s32 2, %v1845
      %v1847 = vrot.slane %v826, %v1846
      %v1848 = vlaneseq
      %v1849 = vshrl.u32 %v1848, 7
      %v1850 = vsub.s32 3, %v1849
      %v1851 = vrot.slane %v826, %v1850
      %v1852 = vlaneseq
      %v1853 = vshrl.u32 %v1852, 7
      %v1854 = vsub.s32 4, %v1853
      %v1855 = vrot.slane %v826, %v1854
      %v1856 = vlaneseq
      %v1857 = vshrl.u32 %v1856, 7
      %v1858 = vsub.s32 5, %v1857
      %v1859 = vrot.slane %v826, %v1858
      %v1860 = vlaneseq
      %v1861 = vshrl.u32 %v1860, 7
      %v1862 = vsub.s32 6, %v1861
      %v1863 = vrot.slane %v826, %v1862
      %v1864 = vlaneseq
      %v1865 = vshrl.u32 %v1864, 7
      %v1866 = vsub.s32 7, %v1865
      %v1867 = vrot.slane %v826, %v1866
      %v1868 = vlaneseq
      %v1869 = vshrl.u32 %v1868, 7
      %v1870 = vsub.s32 0, %v1869
      %v1871 = vrot.slane %v834, %v1870
      %v1872 = vlaneseq
      %v1873 = vshrl.u32 %v1872, 7
      %v1874 = vsub.s32 1, %v1873
      %v1875 = vrot.slane %v834, %v1874
      %v1876 = vlaneseq
      %v1877 = vshrl.u32 %v1876, 7
      %v1878 = vsub.s32 2, %v1877
      %v1879 = vrot.slane %v834, %v1878
      %v1880 = vlaneseq
      %v1881 = vshrl.u32 %v1880, 7
      %v1882 = vsub.s32 3, %v1881
      %v1883 = vrot.slane %v834, %v1882
      %v1884 = vlaneseq
      %v1885 = vshrl.u32 %v1884, 7
      %v1886 = vsub.s32 4, %v1885
      %v1887 = vrot.slane %v834, %v1886
      %v1888 = vlaneseq
      %v1889 = vshrl.u32 %v1888, 7
      %v1890 = vsub.s32 5, %v1889
      %v1891 = vrot.slane %v834, %v1890
      %v1892 = vlaneseq
      %v1893 = vshrl.u32 %v1892, 7
      %v1894 = vsub.s32 6, %v1893
      %v1895 = vrot.slane %v834, %v1894
      %v1896 = vlaneseq
      %v1897 = vshrl.u32 %v1896, 7
      %v1898 = vsub.s32 7, %v1897
      %v1899 = vrot.slane %v834, %v1898
      %v1900 = vlaneseq
      %v1901 = vshrl.u32 %v1900, 7
      %v1902 = vsub.s32 0, %v1901
      %v1903 = vrot.slane %v842, %v1902
      %v1904 = vlaneseq
      %v1905 = vshrl.u32 %v1904, 7
      %v1906 = vsub.s32 1, %v1905
      %v1907 = vrot.slane %v842, %v1906
      %v1908 = vlaneseq
      %v1909 = vshrl.u32 %v1908, 7
      %v1910 = vsub.s32 2, %v1909
      %v1911 = vrot.slane %v842, %v1910
      %v1912 = vlaneseq
      %v1913 = vshrl.u32 %v1912, 7
      %v1914 = vsub.s32 3, %v1913
      %v1915 = vrot.slane %v842, %v1914
      %v1916 = vlaneseq
      %v1917 = vshrl.u32 %v1916, 7
      %v1918 = vsub.s32 4, %v1917
      %v1919 = vrot.slane %v842, %v1918
      %v1920 = vlaneseq
      %v1921 = vshrl.u32 %v1920, 7
      %v1922 = vsub.s32 5, %v1921
      %v1923 = vrot.slane %v842, %v1922
      %v1924 = vlaneseq
      %v1925 = vshrl.u32 %v1924, 7
      %v1926 = vsub.s32 6, %v1925
      %v1927 = vrot.slane %v842, %v1926
      %v1928 = vlaneseq
      %v1929 = vshrl.u32 %v1928, 7
      %v1930 = vsub.s32 7, %v1929
      %v1931 = vrot.slane %v842, %v1930
      %v1932 = vlaneseq
      %v1933 = vshrl.u32 %v1932, 7
      %v1934 = vsub.s32 0, %v1933
      %v1935 = vrot.slane %v850, %v1934
      %v1936 = vlaneseq
      %v1937 = vshrl.u32 %v1936, 7
      %v1938 = vsub.s32 1, %v1937
      %v1939 = vrot.slane %v850, %v1938
      %v1940 = vlaneseq
      %v1941 = vshrl.u32 %v1940, 7
      %v1942 = vsub.s32 2, %v1941
      %v1943 = vrot.slane %v850, %v1942
      %v1944 = vlaneseq
      %v1945 = vshrl.u32 %v1944, 7
      %v1946 = vsub.s32 3, %v1945
      %v1947 = vrot.slane %v850, %v1946
      %v1948 = vlaneseq
      %v1949 = vshrl.u32 %v1948, 7
      %v1950 = vsub.s32 4, %v1949
      %v1951 = vrot.slane %v850, %v1950
      %v1952 = vlaneseq
      %v1953 = vshrl.u32 %v1952, 7
      %v1954 = vsub.s32 5, %v1953
      %v1955 = vrot.slane %v850, %v1954
      %v1956 = vlaneseq
      %v1957 = vshrl.u32 %v1956, 7
      %v1958 = vsub.s32 6, %v1957
      %v1959 = vrot.slane %v850, %v1958
      %v1960 = vlaneseq
      %v1961 = vshrl.u32 %v1960, 7
      %v1962 = vsub.s32 7, %v1961
      %v1963 = vrot.slane %v850, %v1962
      %v1964 = vlaneseq
      %v1965 = vshrl.u32 %v1964, 7
      %v1966 = vsub.s32 0, %v1965
      %v1967 = vrot.slane %v858, %v1966
      %v1968 = vlaneseq
      %v1969 = vshrl.u32 %v1968, 7
      %v1970 = vsub.s32 1, %v1969
      %v1971 = vrot.slane %v858, %v1970
      %v1972 = vlaneseq
      %v1973 = vshrl.u32 %v1972, 7
      %v1974 = vsub.s32 2, %v1973
      %v1975 = vrot.slane %v858, %v1974
      %v1976 = vlaneseq
      %v1977 = vshrl.u32 %v1976, 7
      %v1978 = vsub.s32 3, %v1977
      %v1979 = vrot.slane %v858, %v1978
      %v1980 = vlaneseq
      %v1981 = vshrl.u32 %v1980, 7
      %v1982 = vsub.s32 4, %v1981
      %v1983 = vrot.slane %v858, %v1982
      %v1984 = vlaneseq
      %v1985 = vshrl.u32 %v1984, 7
      %v1986 = vsub.s32 5, %v1985
      %v1987 = vrot.slane %v858, %v1986
      %v1988 = vlaneseq
      %v1989 = vshrl.u32 %v1988, 7
      %v1990 = vsub.s32 6, %v1989
      %v1991 = vrot.slane %v858, %v1990
      %v1992 = vlaneseq
      %v1993 = vshrl.u32 %v1992, 7
      %v1994 = vsub.s32 7, %v1993
      %v1995 = vrot.slane %v858, %v1994
      %v1996 = vlaneseq
      %v1997 = vshrl.u32 %v1996, 7
      %v1998 = vsub.s32 0, %v1997
      %v1999 = vrot.slane %v866, %v1998
      %v2000 = vlaneseq
      %v2001 = vshrl.u32 %v2000, 7
      %v2002 = vsub.s32 1, %v2001
      %v2003 = vrot.slane %v866, %v2002
      %v2004 = vlaneseq
      %v2005 = vshrl.u32 %v2004, 7
      %v2006 = vsub.s32 2, %v2005
      %v2007 = vrot.slane %v866, %v2006
      %v2008 = vlaneseq
      %v2009 = vshrl.u32 %v2008, 7
      %v2010 = vsub.s32 3, %v2009
      %v2011 = vrot.slane %v866, %v2010
      %v2012 = vlaneseq
      %v2013 = vshrl.u32 %v2012, 7
      %v2014 = vsub.s32 4, %v2013
      %v2015 = vrot.slane %v866, %v2014
      %v2016 = vlaneseq
      %v2017 = vshrl.u32 %v2016, 7
      %v2018 = vsub.s32 5, %v2017
      %v2019 = vrot.slane %v866, %v2018
      %v2020 = vlaneseq
      %v2021 = vshrl.u32 %v2020, 7
      %v2022 = vsub.s32 6, %v2021
      %v2023 = vrot.slane %v866, %v2022
      %v2024 = vlaneseq
      %v2025 = vshrl.u32 %v2024, 7
      %v2026 = vsub.s32 7, %v2025
      %v2027 = vrot.slane %v866, %v2026
      %v2028 = vlaneseq
      %v2029 = vshrl.u32 %v2028, 7
      %v2030 = vsub.s32 0, %v2029
      %v2031 = vrot.slane %v874, %v2030
      %v2032 = vlaneseq
      %v2033 = vshrl.u32 %v2032, 7
      %v2034 = vsub.s32 1, %v2033
      %v2035 = vrot.slane %v874, %v2034
      %v2036 = vlaneseq
      %v2037 = vshrl.u32 %v2036, 7
      %v2038 = vsub.s32 2, %v2037
      %v2039 = vrot.slane %v874, %v2038
      %v2040 = vlaneseq
      %v2041 = vshrl.u32 %v2040, 7
      %v2042 = vsub.s32 3, %v2041
      %v2043 = vrot.slane %v874, %v2042
      %v2044 = vlaneseq
      %v2045 = vshrl.u32 %v2044, 7
      %v2046 = vsub.s32 4, %v2045
      %v2047 = vrot.slane %v874, %v2046
      %v2048 = vlaneseq
      %v2049 = vshrl.u32 %v2048, 7
      %v2050 = vsub.s32 5, %v2049
      %v2051 = vrot.slane %v874, %v2050
      %v2052 = vlaneseq
      %v2053 = vshrl.u32 %v2052, 7
      %v2054 = vsub.s32 6, %v2053
      %v2055 = vrot.slane %v874, %v2054
      %v2056 = vlaneseq
      %v2057 = vshrl.u32 %v2056, 7
      %v2058 = vsub.s32 7, %v2057
      %v2059 = vrot.slane %v874, %v2058
      %v2060 = vlaneseq
      %v2061 = vshrl.u32 %v2060, 7
      %v2062 = vsub.s32 0, %v2061
      %v2063 = vrot.slane %v882, %v2062
      %v2064 = vlaneseq
      %v2065 = vshrl.u32 %v2064, 7
      %v2066 = vsub.s32 1, %v2065
      %v2067 = vrot.slane %v882, %v2066
      %v2068 = vlaneseq
      %v2069 = vshrl.u32 %v2068, 7
      %v2070 = vsub.s32 2, %v2069
      %v2071 = vrot.slane %v882, %v2070
      %v2072 = vlaneseq
      %v2073 = vshrl.u32 %v2072, 7
      %v2074 = vsub.s32 3, %v2073
      %v2075 = vrot.slane %v882, %v2074
      %v2076 = vlaneseq
      %v2077 = vshrl.u32 %v2076, 7
      %v2078 = vsub.s32 4, %v2077
      %v2079 = vrot.slane %v882, %v2078
      %v2080 = vlaneseq
      %v2081 = vshrl.u32 %v2080, 7
      %v2082 = vsub.s32 5, %v2081
      %v2083 = vrot.slane %v882, %v2082
      %v2084 = vlaneseq
      %v2085 = vshrl.u32 %v2084, 7
      %v2086 = vsub.s32 6, %v2085
      %v2087 = vrot.slane %v882, %v2086
      %v2088 = vlaneseq
      %v2089 = vshrl.u32 %v2088, 7
      %v2090 = vsub.s32 7, %v2089
      %v2091 = vrot.slane %v882, %v2090
      %v2092 = vlaneseq
      %v2093 = vshrl.u32 %v2092, 7
      %v2094 = vsub.s32 0, %v2093
      %v2095 = vrot.slane %v890, %v2094
      %v2096 = vlaneseq
      %v2097 = vshrl.u32 %v2096, 7
      %v2098 = vsub.s32 1, %v2097
      %v2099 = vrot.slane %v890, %v2098
      %v2100 = vlaneseq
      %v2101 = vshrl.u32 %v2100, 7
      %v2102 = vsub.s32 2, %v2101
      %v2103 = vrot.slane %v890, %v2102
      %v2104 = vlaneseq
      %v2105 = vshrl.u32 %v2104, 7
      %v2106 = vsub.s32 3, %v2105
      %v2107 = vrot.slane %v890, %v2106
      %v2108 = vlaneseq
      %v2109 = vshrl.u32 %v2108, 7
      %v2110 = vsub.s32 4, %v2109
      %v2111 = vrot.slane %v890, %v2110
      %v2112 = vlaneseq
      %v2113 = vshrl.u32 %v2112, 7
      %v2114 = vsub.s32 5, %v2113
      %v2115 = vrot.slane %v890, %v2114
      %v2116 = vlaneseq
      %v2117 = vshrl.u32 %v2116, 7
      %v2118 = vsub.s32 6, %v2117
      %v2119 = vrot.slane %v890, %v2118
      %v2120 = vlaneseq
      %v2121 = vshrl.u32 %v2120, 7
      %v2122 = vsub.s32 7, %v2121
      %v2123 = vrot.slane %v890, %v2122
      %v2124 = vlaneseq
      %v2125 = vshrl.u32 %v2124, 7
      %v2126 = vsub.s32 0, %v2125
      %v2127 = vrot.slane %v898, %v2126
      %v2128 = vlaneseq
      %v2129 = vshrl.u32 %v2128, 7
      %v2130 = vsub.s32 1, %v2129
      %v2131 = vrot.slane %v898, %v2130
      %v2132 = vlaneseq
      %v2133 = vshrl.u32 %v2132, 7
      %v2134 = vsub.s32 2, %v2133
      %v2135 = vrot.slane %v898, %v2134
      %v2136 = vlaneseq
      %v2137 = vshrl.u32 %v2136, 7
      %v2138 = vsub.s32 3, %v2137
      %v2139 = vrot.slane %v898, %v2138
      %v2140 = vlaneseq
      %v2141 = vshrl.u32 %v2140, 7
      %v2142 = vsub.s32 4, %v2141
      %v2143 = vrot.slane %v898, %v2142
      %v2144 = vlaneseq
      %v2145 = vshrl.u32 %v2144, 7
      %v2146 = vsub.s32 5, %v2145
      %v2147 = vrot.slane %v898, %v2146
      %v2148 = vlaneseq
      %v2149 = vshrl.u32 %v2148, 7
      %v2150 = vsub.s32 6, %v2149
      %v2151 = vrot.slane %v898, %v2150
      %v2152 = vlaneseq
      %v2153 = vshrl.u32 %v2152, 7
      %v2154 = vsub.s32 7, %v2153
      %v2155 = vrot.slane %v898, %v2154
      %v2156 = vlaneseq
      %v2157 = vshrl.u32 %v2156, 7
      %v2158 = vsub.s32 0, %v2157
      %v2159 = vrot.slane %v906, %v2158
      %v2160 = vlaneseq
      %v2161 = vshrl.u32 %v2160, 7
      %v2162 = vsub.s32 1, %v2161
      %v2163 = vrot.slane %v906, %v2162
      %v2164 = vlaneseq
      %v2165 = vshrl.u32 %v2164, 7
      %v2166 = vsub.s32 2, %v2165
      %v2167 = vrot.slane %v906, %v2166
      %v2168 = vlaneseq
      %v2169 = vshrl.u32 %v2168, 7
      %v2170 = vsub.s32 3, %v2169
      %v2171 = vrot.slane %v906, %v2170
      %v2172 = vlaneseq
      %v2173 = vshrl.u32 %v2172, 7
      %v2174 = vsub.s32 4, %v2173
      %v2175 = vrot.slane %v906, %v2174
      %v2176 = vlaneseq
      %v2177 = vshrl.u32 %v2176, 7
      %v2178 = vsub.s32 5, %v2177
      %v2179 = vrot.slane %v906, %v2178
      %v2180 = vlaneseq
      %v2181 = vshrl.u32 %v2180, 7
      %v2182 = vsub.s32 6, %v2181
      %v2183 = vrot.slane %v906, %v2182
      %v2184 = vlaneseq
      %v2185 = vshrl.u32 %v2184, 7
      %v2186 = vsub.s32 7, %v2185
      %v2187 = vrot.slane %v906, %v2186
      %v2188 = vlaneseq
      %v2189 = vshrl.u32 %v2188, 7
      %v2190 = vsub.s32 0, %v2189
      %v2191 = vrot.slane %v914, %v2190
      %v2192 = vlaneseq
      %v2193 = vshrl.u32 %v2192, 7
      %v2194 = vsub.s32 1, %v2193
      %v2195 = vrot.slane %v914, %v2194
      %v2196 = vlaneseq
      %v2197 = vshrl.u32 %v2196, 7
      %v2198 = vsub.s32 2, %v2197
      %v2199 = vrot.slane %v914, %v2198
      %v2200 = vlaneseq
      %v2201 = vshrl.u32 %v2200, 7
      %v2202 = vsub.s32 3, %v2201
      %v2203 = vrot.slane %v914, %v2202
      %v2204 = vlaneseq
      %v2205 = vshrl.u32 %v2204, 7
      %v2206 = vsub.s32 4, %v2205
      %v2207 = vrot.slane %v914, %v2206
      %v2208 = vlaneseq
      %v2209 = vshrl.u32 %v2208, 7
      %v2210 = vsub.s32 5, %v2209
      %v2211 = vrot.slane %v914, %v2210
      %v2212 = vlaneseq
      %v2213 = vshrl.u32 %v2212, 7
      %v2214 = vsub.s32 6, %v2213
      %v2215 = vrot.slane %v914, %v2214
      %v2216 = vlaneseq
      %v2217 = vshrl.u32 %v2216, 7
      %v2218 = vsub.s32 7, %v2217
      %v2219 = vrot.slane %v914, %v2218
      %v2220 = vlaneseq
      %v2221 = vshrl.u32 %v2220, 7
      %v2222 = vsub.s32 0, %v2221
      %v2223 = vrot.slane %v922, %v2222
      %v2224 = vlaneseq
      %v2225 = vshrl.u32 %v2224, 7
      %v2226 = vsub.s32 1, %v2225
      %v2227 = vrot.slane %v922, %v2226
      %v2228 = vlaneseq
      %v2229 = vshrl.u32 %v2228, 7
      %v2230 = vsub.s32 2, %v2229
      %v2231 = vrot.slane %v922, %v2230
      %v2232 = vlaneseq
      %v2233 = vshrl.u32 %v2232, 7
      %v2234 = vsub.s32 3, %v2233
      %v2235 = vrot.slane %v922, %v2234
      %v2236 = vlaneseq
      %v2237 = vshrl.u32 %v2236, 7
      %v2238 = vsub.s32 4, %v2237
      %v2239 = vrot.slane %v922, %v2238
      %v2240 = vlaneseq
      %v2241 = vshrl.u32 %v2240, 7
      %v2242 = vsub.s32 5, %v2241
      %v2243 = vrot.slane %v922, %v2242
      %v2244 = vlaneseq
      %v2245 = vshrl.u32 %v2244, 7
      %v2246 = vsub.s32 6, %v2245
      %v2247 = vrot.slane %v922, %v2246
      %v2248 = vlaneseq
      %v2249 = vshrl.u32 %v2248, 7
      %v2250 = vsub.s32 7, %v2249
      %v2251 = vrot.slane %v922, %v2250
      %v2252 = vlaneseq
      %v2253 = vshrl.u32 %v2252, 7
      %v2254 = vsub.s32 0, %v2253
      %v2255 = vrot.slane %v930, %v2254
      %v2256 = vlaneseq
      %v2257 = vshrl.u32 %v2256, 7
      %v2258 = vsub.s32 1, %v2257
      %v2259 = vrot.slane %v930, %v2258
      %v2260 = vlaneseq
      %v2261 = vshrl.u32 %v2260, 7
      %v2262 = vsub.s32 2, %v2261
      %v2263 = vrot.slane %v930, %v2262
      %v2264 = vlaneseq
      %v2265 = vshrl.u32 %v2264, 7
      %v2266 = vsub.s32 3, %v2265
      %v2267 = vrot.slane %v930, %v2266
      %v2268 = vlaneseq
      %v2269 = vshrl.u32 %v2268, 7
      %v2270 = vsub.s32 4, %v2269
      %v2271 = vrot.slane %v930, %v2270
      %v2272 = vlaneseq
      %v2273 = vshrl.u32 %v2272, 7
      %v2274 = vsub.s32 5, %v2273
      %v2275 = vrot.slane %v930, %v2274
      %v2276 = vlaneseq
      %v2277 = vshrl.u32 %v2276, 7
      %v2278 = vsub.s32 6, %v2277
      %v2279 = vrot.slane %v930, %v2278
      %v2280 = vlaneseq
      %v2281 = vshrl.u32 %v2280, 7
      %v2282 = vsub.s32 7, %v2281
      %v2283 = vrot.slane %v930, %v2282
      %v2284 = vlaneseq
      %v2285 = vshrl.u32 %v2284, 7
      %v2286 = vsub.s32 0, %v2285
      %v2287 = vrot.slane %v938, %v2286
      %v2288 = vlaneseq
      %v2289 = vshrl.u32 %v2288, 7
      %v2290 = vsub.s32 1, %v2289
      %v2291 = vrot.slane %v938, %v2290
      %v2292 = vlaneseq
      %v2293 = vshrl.u32 %v2292, 7
      %v2294 = vsub.s32 2, %v2293
      %v2295 = vrot.slane %v938, %v2294
      %v2296 = vlaneseq
      %v2297 = vshrl.u32 %v2296, 7
      %v2298 = vsub.s32 3, %v2297
      %v2299 = vrot.slane %v938, %v2298
      %v2300 = vlaneseq
      %v2301 = vshrl.u32 %v2300, 7
      %v2302 = vsub.s32 4, %v2301
      %v2303 = vrot.slane %v938, %v2302
      %v2304 = vlaneseq
      %v2305 = vshrl.u32 %v2304, 7
      %v2306 = vsub.s32 5, %v2305
      %v2307 = vrot.slane %v938, %v2306
      %v2308 = vlaneseq
      %v2309 = vshrl.u32 %v2308, 7
      %v2310 = vsub.s32 6, %v2309
      %v2311 = vrot.slane %v938, %v2310
      %v2312 = vlaneseq
      %v2313 = vshrl.u32 %v2312, 7
      %v2314 = vsub.s32 7, %v2313
      %v2315 = vrot.slane %v938, %v2314
      %v2316 = vlaneseq
      %v2317 = vshrl.u32 %v2316, 7
      %v2318 = vsub.s32 0, %v2317
      %v2319 = vrot.slane %v946, %v2318
      %v2320 = vlaneseq
      %v2321 = vshrl.u32 %v2320, 7
      %v2322 = vsub.s32 1, %v2321
      %v2323 = vrot.slane %v946, %v2322
      %v2324 = vlaneseq
      %v2325 = vshrl.u32 %v2324, 7
      %v2326 = vsub.s32 2, %v2325
      %v2327 = vrot.slane %v946, %v2326
      %v2328 = vlaneseq
      %v2329 = vshrl.u32 %v2328, 7
      %v2330 = vsub.s32 3, %v2329
      %v2331 = vrot.slane %v946, %v2330
      %v2332 = vlaneseq
      %v2333 = vshrl.u32 %v2332, 7
      %v2334 = vsub.s32 4, %v2333
      %v2335 = vrot.slane %v946, %v2334
      %v2336 = vlaneseq
      %v2337 = vshrl.u32 %v2336, 7
      %v2338 = vsub.s32 5, %v2337
      %v2339 = vrot.slane %v946, %v2338
      %v2340 = vlaneseq
      %v2341 = vshrl.u32 %v2340, 7
      %v2342 = vsub.s32 6, %v2341
      %v2343 = vrot.slane %v946, %v2342
      %v2344 = vlaneseq
      %v2345 = vshrl.u32 %v2344, 7
      %v2346 = vsub.s32 7, %v2345
      %v2347 = vrot.slane %v946, %v2346
      %v2348 = vlaneseq
      %v2349 = vshrl.u32 %v2348, 7
      %v2350 = vsub.s32 0, %v2349
      %v2351 = vrot.slane %v954, %v2350
      %v2352 = vlaneseq
      %v2353 = vshrl.u32 %v2352, 7
      %v2354 = vsub.s32 1, %v2353
      %v2355 = vrot.slane %v954, %v2354
      %v2356 = vlaneseq
      %v2357 = vshrl.u32 %v2356, 7
      %v2358 = vsub.s32 2, %v2357
      %v2359 = vrot.slane %v954, %v2358
      %v2360 = vlaneseq
      %v2361 = vshrl.u32 %v2360, 7
      %v2362 = vsub.s32 3, %v2361
      %v2363 = vrot.slane %v954, %v2362
      %v2364 = vlaneseq
      %v2365 = vshrl.u32 %v2364, 7
      %v2366 = vsub.s32 4, %v2365
      %v2367 = vrot.slane %v954, %v2366
      %v2368 = vlaneseq
      %v2369 = vshrl.u32 %v2368, 7
      %v2370 = vsub.s32 5, %v2369
      %v2371 = vrot.slane %v954, %v2370
      %v2372 = vlaneseq
      %v2373 = vshrl.u32 %v2372, 7
      %v2374 = vsub.s32 6, %v2373
      %v2375 = vrot.slane %v954, %v2374
      %v2376 = vlaneseq
      %v2377 = vshrl.u32 %v2376, 7
      %v2378 = vsub.s32 7, %v2377
      %v2379 = vrot.slane %v954, %v2378
      %v2380 = vlaneseq
      %v2381 = vshrl.u32 %v2380, 7
      %v2382 = vsub.s32 0, %v2381
      %v2383 = vrot.slane %v962, %v2382
      %v2384 = vlaneseq
      %v2385 = vshrl.u32 %v2384, 7
      %v2386 = vsub.s32 1, %v2385
      %v2387 = vrot.slane %v962, %v2386
      %v2388 = vlaneseq
      %v2389 = vshrl.u32 %v2388, 7
      %v2390 = vsub.s32 2, %v2389
      %v2391 = vrot.slane %v962, %v2390
      %v2392 = vlaneseq
      %v2393 = vshrl.u32 %v2392, 7
      %v2394 = vsub.s32 3, %v2393
      %v2395 = vrot.slane %v962, %v2394
      %v2396 = vlaneseq
      %v2397 = vshrl.u32 %v2396, 7
      %v2398 = vsub.s32 4, %v2397
      %v2399 = vrot.slane %v962, %v2398
      %v2400 = vlaneseq
      %v2401 = vshrl.u32 %v2400, 7
      %v2402 = vsub.s32 5, %v2401
      %v2403 = vrot.slane %v962, %v2402
      %v2404 = vlaneseq
      %v2405 = vshrl.u32 %v2404, 7
      %v2406 = vsub.s32 6, %v2405
      %v2407 = vrot.slane %v962, %v2406
      %v2408 = vlaneseq
      %v2409 = vshrl.u32 %v2408, 7
      %v2410 = vsub.s32 7, %v2409
      %v2411 = vrot.slane %v962, %v2410
      %v2412 = vlaneseq
      %v2413 = vshrl.u32 %v2412, 7
      %v2414 = vsub.s32 0, %v2413
      %v2415 = vrot.slane %v970, %v2414
      %v2416 = vlaneseq
      %v2417 = vshrl.u32 %v2416, 7
      %v2418 = vsub.s32 1, %v2417
      %v2419 = vrot.slane %v970, %v2418
      %v2420 = vlaneseq
      %v2421 = vshrl.u32 %v2420, 7
      %v2422 = vsub.s32 2, %v2421
      %v2423 = vrot.slane %v970, %v2422
      %v2424 = vlaneseq
      %v2425 = vshrl.u32 %v2424, 7
      %v2426 = vsub.s32 3, %v2425
      %v2427 = vrot.slane %v970, %v2426
      %v2428 = vlaneseq
      %v2429 = vshrl.u32 %v2428, 7
      %v2430 = vsub.s32 4, %v2429
      %v2431 = vrot.slane %v970, %v2430
      %v2432 = vlaneseq
      %v2433 = vshrl.u32 %v2432, 7
      %v2434 = vsub.s32 5, %v2433
      %v2435 = vrot.slane %v970, %v2434
      %v2436 = vlaneseq
      %v2437 = vshrl.u32 %v2436, 7
      %v2438 = vsub.s32 6, %v2437
      %v2439 = vrot.slane %v970, %v2438
      %v2440 = vlaneseq
      %v2441 = vshrl.u32 %v2440, 7
      %v2442 = vsub.s32 7, %v2441
      %v2443 = vrot.slane %v970, %v2442
      %v2444 = vcombine.low %v1423, %v1427
      %v2445 = vcombine.low %v1431, %v1435
      %v2446 = vcombine.low %v1439, %v1443
      %v2447 = vcombine.low %v1447, %v1451
      %v2449 = vunpack.c.l.s4 1966171168
      %v2450 = vunpack.c.0.s8 %v2449
      %v2451 = vlaneseq
      %v2452 = vshrl.u32 %v2451, 7
      %v2453 = vsub.s32 %v2450, %v2452
      %v2454 = vrot.slane %v2444, %v2453
      %v2456 = vunpack.c.l.s4 1966171168
      %v2457 = vunpack.c.0.s8 %v2456
      %v2458 = vlaneseq
      %v2459 = vshrl.u32 %v2458, 7
      %v2460 = vsub.s32 %v2457, %v2459
      %v2461 = vrot.slane %v2445, %v2460
      %v2463 = vunpack.c.l.s4 1966171168
      %v2464 = vunpack.c.0.s8 %v2463
      %v2465 = vlaneseq
      %v2466 = vshrl.u32 %v2465, 7
      %v2467 = vsub.s32 %v2464, %v2466
      %v2468 = vrot.slane %v2446, %v2467
      %v2470 = vunpack.c.l.s4 1966171168
      %v2471 = vunpack.c.0.s8 %v2470
      %v2472 = vlaneseq
      %v2473 = vshrl.u32 %v2472, 7
      %v2474 = vsub.s32 %v2471, %v2473
      %v2475 = vrot.slane %v2447, %v2474
      %v2476 = vcombine.low %v2454, %v2461
      %v2477 = vcombine.low %v2468, %v2475
      %v2479 = vunpack.c.l.s4 1966171168
      %v2480 = vunpack.c.0.s8 %v2479
      %v2481 = vlaneseq
      %v2482 = vshrl.u32 %v2481, 7
      %v2483 = vsub.s32 %v2480, %v2482
      %v2484 = vrot.slane %v2476, %v2483
      %v2486 = vunpack.c.l.s4 1966171168
      %v2487 = vunpack.c.0.s8 %v2486
      %v2488 = vlaneseq
      %v2489 = vshrl.u32 %v2488, 7
      %v2490 = vsub.s32 %v2487, %v2489
      %v2491 = vrot.slane %v2477, %v2490
      %v2492 = vcombine.low %v2484, %v2491
      %v2493 = vcombine.low %v1455, %v1459
      %v2494 = vcombine.low %v1463, %v1467
      %v2495 = vcombine.low %v1471, %v1475
      %v2496 = vcombine.low %v1479, %v1483
      %v2498 = vunpack.c.l.s4 1966171168
      %v2499 = vunpack.c.0.s8 %v2498
      %v2500 = vlaneseq
      %v2501 = vshrl.u32 %v2500, 7
      %v2502 = vsub.s32 %v2499, %v2501
      %v2503 = vrot.slane %v2493, %v2502
      %v2505 = vunpack.c.l.s4 1966171168
      %v2506 = vunpack.c.0.s8 %v2505
      %v2507 = vlaneseq
      %v2508 = vshrl.u32 %v2507, 7
      %v2509 = vsub.s32 %v2506, %v2508
      %v2510 = vrot.slane %v2494, %v2509
      %v2512 = vunpack.c.l.s4 1966171168
      %v2513 = vunpack.c.0.s8 %v2512
      %v2514 = vlaneseq
      %v2515 = vshrl.u32 %v2514, 7
      %v2516 = vsub.s32 %v2513, %v2515
      %v2517 = vrot.slane %v2495, %v2516
      %v2519 = vunpack.c.l.s4 1966171168
      %v2520 = vunpack.c.0.s8 %v2519
      %v2521 = vlaneseq
      %v2522 = vshrl.u32 %v2521, 7
      %v2523 = vsub.s32 %v2520, %v2522
      %v2524 = vrot.slane %v2496, %v2523
      %v2525 = vcombine.low %v2503, %v2510
      %v2526 = vcombine.low %v2517, %v2524
      %v2528 = vunpack.c.l.s4 1966171168
      %v2529 = vunpack.c.0.s8 %v2528
      %v2530 = vlaneseq
      %v2531 = vshrl.u32 %v2530, 7
      %v2532 = vsub.s32 %v2529, %v2531
      %v2533 = vrot.slane %v2525, %v2532
      %v2535 = vunpack.c.l.s4 1966171168
      %v2536 = vunpack.c.0.s8 %v2535
      %v2537 = vlaneseq
      %v2538 = vshrl.u32 %v2537, 7
      %v2539 = vsub.s32 %v2536, %v2538
      %v2540 = vrot.slane %v2526, %v2539
      %v2541 = vcombine.low %v2533, %v2540
      %v2542 = vcombine.low %v1487, %v1491
      %v2543 = vcombine.low %v1495, %v1499
      %v2544 = vcombine.low %v1503, %v1507
      %v2545 = vcombine.low %v1511, %v1515
      %v2547 = vunpack.c.l.s4 1966171168
      %v2548 = vunpack.c.0.s8 %v2547
      %v2549 = vlaneseq
      %v2550 = vshrl.u32 %v2549, 7
      %v2551 = vsub.s32 %v2548, %v2550
      %v2552 = vrot.slane %v2542, %v2551
      %v2554 = vunpack.c.l.s4 1966171168
      %v2555 = vunpack.c.0.s8 %v2554
      %v2556 = vlaneseq
      %v2557 = vshrl.u32 %v2556, 7
      %v2558 = vsub.s32 %v2555, %v2557
      %v2559 = vrot.slane %v2543, %v2558
      %v2561 = vunpack.c.l.s4 1966171168
      %v2562 = vunpack.c.0.s8 %v2561
      %v2563 = vlaneseq
      %v2564 = vshrl.u32 %v2563, 7
      %v2565 = vsub.s32 %v2562, %v2564
      %v2566 = vrot.slane %v2544, %v2565
      %v2568 = vunpack.c.l.s4 1966171168
      %v2569 = vunpack.c.0.s8 %v2568
      %v2570 = vlaneseq
      %v2571 = vshrl.u32 %v2570, 7
      %v2572 = vsub.s32 %v2569, %v2571
      %v2573 = vrot.slane %v2545, %v2572
      %v2574 = vcombine.low %v2552, %v2559
      %v2575 = vcombine.low %v2566, %v2573
      %v2577 = vunpack.c.l.s4 1966171168
      %v2578 = vunpack.c.0.s8 %v2577
      %v2579 = vlaneseq
      %v2580 = vshrl.u32 %v2579, 7
      %v2581 = vsub.s32 %v2578, %v2580
      %v2582 = vrot.slane %v2574, %v2581
      %v2584 = vunpack.c.l.s4 1966171168
      %v2585 = vunpack.c.0.s8 %v2584
      %v2586 = vlaneseq
      %v2587 = vshrl.u32 %v2586, 7
      %v2588 = vsub.s32 %v2585, %v2587
      %v2589 = vrot.slane %v2575, %v2588
      %v2590 = vcombine.low %v2582, %v2589
      %v2591 = vcombine.low %v1519, %v1523
      %v2592 = vcombine.low %v1527, %v1531
      %v2593 = vcombine.low %v1535, %v1539
      %v2594 = vcombine.low %v1543, %v1547
      %v2596 = vunpack.c.l.s4 1966171168
      %v2597 = vunpack.c.0.s8 %v2596
      %v2598 = vlaneseq
      %v2599 = vshrl.u32 %v2598, 7
      %v2600 = vsub.s32 %v2597, %v2599
      %v2601 = vrot.slane %v2591, %v2600
      %v2603 = vunpack.c.l.s4 1966171168
      %v2604 = vunpack.c.0.s8 %v2603
      %v2605 = vlaneseq
      %v2606 = vshrl.u32 %v2605, 7
      %v2607 = vsub.s32 %v2604, %v2606
      %v2608 = vrot.slane %v2592, %v2607
      %v2610 = vunpack.c.l.s4 1966171168
      %v2611 = vunpack.c.0.s8 %v2610
      %v2612 = vlaneseq
      %v2613 = vshrl.u32 %v2612, 7
      %v2614 = vsub.s32 %v2611, %v2613
      %v2615 = vrot.slane %v2593, %v2614
      %v2617 = vunpack.c.l.s4 1966171168
      %v2618 = vunpack.c.0.s8 %v2617
      %v2619 = vlaneseq
      %v2620 = vshrl.u32 %v2619, 7
      %v2621 = vsub.s32 %v2618, %v2620
      %v2622 = vrot.slane %v2594, %v2621
      %v2623 = vcombine.low %v2601, %v2608
      %v2624 = vcombine.low %v2615, %v2622
      %v2626 = vunpack.c.l.s4 1966171168
      %v2627 = vunpack.c.0.s8 %v2626
      %v2628 = vlaneseq
      %v2629 = vshrl.u32 %v2628, 7
      %v2630 = vsub.s32 %v2627, %v2629
      %v2631 = vrot.slane %v2623, %v2630
      %v2633 = vunpack.c.l.s4 1966171168
      %v2634 = vunpack.c.0.s8 %v2633
      %v2635 = vlaneseq
      %v2636 = vshrl.u32 %v2635, 7
      %v2637 = vsub.s32 %v2634, %v2636
      %v2638 = vrot.slane %v2624, %v2637
      %v2639 = vcombine.low %v2631, %v2638
      %v2640 = vcombine.low %v1551, %v1555
      %v2641 = vcombine.low %v1559, %v1563
      %v2642 = vcombine.low %v1567, %v1571
      %v2643 = vcombine.low %v1575, %v1579
      %v2645 = vunpack.c.l.s4 1966171168
      %v2646 = vunpack.c.0.s8 %v2645
      %v2647 = vlaneseq
      %v2648 = vshrl.u32 %v2647, 7
      %v2649 = vsub.s32 %v2646, %v2648
      %v2650 = vrot.slane %v2640, %v2649
      %v2652 = vunpack.c.l.s4 1966171168
      %v2653 = vunpack.c.0.s8 %v2652
      %v2654 = vlaneseq
      %v2655 = vshrl.u32 %v2654, 7
      %v2656 = vsub.s32 %v2653, %v2655
      %v2657 = vrot.slane %v2641, %v2656
      %v2659 = vunpack.c.l.s4 1966171168
      %v2660 = vunpack.c.0.s8 %v2659
      %v2661 = vlaneseq
      %v2662 = vshrl.u32 %v2661, 7
      %v2663 = vsub.s32 %v2660, %v2662
      %v2664 = vrot.slane %v2642, %v2663
      %v2666 = vunpack.c.l.s4 1966171168
      %v2667 = vunpack.c.0.s8 %v2666
      %v2668 = vlaneseq
      %v2669 = vshrl.u32 %v2668, 7
      %v2670 = vsub.s32 %v2667, %v2669
      %v2671 = vrot.slane %v2643, %v2670
      %v2672 = vcombine.low %v2650, %v2657
      %v2673 = vcombine.low %v2664, %v2671
      %v2675 = vunpack.c.l.s4 1966171168
      %v2676 = vunpack.c.0.s8 %v2675
      %v2677 = vlaneseq
      %v2678 = vshrl.u32 %v2677, 7
      %v2679 = vsub.s32 %v2676, %v2678
      %v2680 = vrot.slane %v2672, %v2679
      %v2682 = vunpack.c.l.s4 1966171168
      %v2683 = vunpack.c.0.s8 %v2682
      %v2684 = vlaneseq
      %v2685 = vshrl.u32 %v2684, 7
      %v2686 = vsub.s32 %v2683, %v2685
      %v2687 = vrot.slane %v2673, %v2686
      %v2688 = vcombine.low %v2680, %v2687
      %v2689 = vcombine.low %v1583, %v1587
      %v2690 = vcombine.low %v1591, %v1595
      %v2691 = vcombine.low %v1599, %v1603
      %v2692 = vcombine.low %v1607, %v1611
      %v2694 = vunpack.c.l.s4 1966171168
      %v2695 = vunpack.c.0.s8 %v2694
      %v2696 = vlaneseq
      %v2697 = vshrl.u32 %v2696, 7
      %v2698 = vsub.s32 %v2695, %v2697
      %v2699 = vrot.slane %v2689, %v2698
      %v2701 = vunpack.c.l.s4 1966171168
      %v2702 = vunpack.c.0.s8 %v2701
      %v2703 = vlaneseq
      %v2704 = vshrl.u32 %v2703, 7
      %v2705 = vsub.s32 %v2702, %v2704
      %v2706 = vrot.slane %v2690, %v2705
      %v2708 = vunpack.c.l.s4 1966171168
      %v2709 = vunpack.c.0.s8 %v2708
      %v2710 = vlaneseq
      %v2711 = vshrl.u32 %v2710, 7
      %v2712 = vsub.s32 %v2709, %v2711
      %v2713 = vrot.slane %v2691, %v2712
      %v2715 = vunpack.c.l.s4 1966171168
      %v2716 = vunpack.c.0.s8 %v2715
      %v2717 = vlaneseq
      %v2718 = vshrl.u32 %v2717, 7
      %v2719 = vsub.s32 %v2716, %v2718
      %v2720 = vrot.slane %v2692, %v2719
      %v2721 = vcombine.low %v2699, %v2706
      %v2722 = vcombine.low %v2713, %v2720
      %v2724 = vunpack.c.l.s4 1966171168
      %v2725 = vunpack.c.0.s8 %v2724
      %v2726 = vlaneseq
      %v2727 = vshrl.u32 %v2726, 7
      %v2728 = vsub.s32 %v2725, %v2727
      %v2729 = vrot.slane %v2721, %v2728
      %v2731 = vunpack.c.l.s4 1966171168
      %v2732 = vunpack.c.0.s8 %v2731
      %v2733 = vlaneseq
      %v2734 = vshrl.u32 %v2733, 7
      %v2735 = vsub.s32 %v2732, %v2734
      %v2736 = vrot.slane %v2722, %v2735
      %v2737 = vcombine.low %v2729, %v2736
      %v2738 = vcombine.low %v1615, %v1619
      %v2739 = vcombine.low %v1623, %v1627
      %v2740 = vcombine.low %v1631, %v1635
      %v2741 = vcombine.low %v1639, %v1643
      %v2743 = vunpack.c.l.s4 1966171168
      %v2744 = vunpack.c.0.s8 %v2743
      %v2745 = vlaneseq
      %v2746 = vshrl.u32 %v2745, 7
      %v2747 = vsub.s32 %v2744, %v2746
      %v2748 = vrot.slane %v2738, %v2747
      %v2750 = vunpack.c.l.s4 1966171168
      %v2751 = vunpack.c.0.s8 %v2750
      %v2752 = vlaneseq
      %v2753 = vshrl.u32 %v2752, 7
      %v2754 = vsub.s32 %v2751, %v2753
      %v2755 = vrot.slane %v2739, %v2754
      %v2757 = vunpack.c.l.s4 1966171168
      %v2758 = vunpack.c.0.s8 %v2757
      %v2759 = vlaneseq
      %v2760 = vshrl.u32 %v2759, 7
      %v2761 = vsub.s32 %v2758, %v2760
      %v2762 = vrot.slane %v2740, %v2761
      %v2764 = vunpack.c.l.s4 1966171168
      %v2765 = vunpack.c.0.s8 %v2764
      %v2766 = vlaneseq
      %v2767 = vshrl.u32 %v2766, 7
      %v2768 = vsub.s32 %v2765, %v2767
      %v2769 = vrot.slane %v2741, %v2768
      %v2770 = vcombine.low %v2748, %v2755
      %v2771 = vcombine.low %v2762, %v2769
      %v2773 = vunpack.c.l.s4 1966171168
      %v2774 = vunpack.c.0.s8 %v2773
      %v2775 = vlaneseq
      %v2776 = vshrl.u32 %v2775, 7
      %v2777 = vsub.s32 %v2774, %v2776
      %v2778 = vrot.slane %v2770, %v2777
      %v2780 = vunpack.c.l.s4 1966171168
      %v2781 = vunpack.c.0.s8 %v2780
      %v2782 = vlaneseq
      %v2783 = vshrl.u32 %v2782, 7
      %v2784 = vsub.s32 %v2781, %v2783
      %v2785 = vrot.slane %v2771, %v2784
      %v2786 = vcombine.low %v2778, %v2785
      %v2787 = vcombine.low %v1647, %v1651
      %v2788 = vcombine.low %v1655, %v1659
      %v2789 = vcombine.low %v1663, %v1667
      %v2790 = vcombine.low %v1671, %v1675
      %v2792 = vunpack.c.l.s4 1966171168
      %v2793 = vunpack.c.0.s8 %v2792
      %v2794 = vlaneseq
      %v2795 = vshrl.u32 %v2794, 7
      %v2796 = vsub.s32 %v2793, %v2795
      %v2797 = vrot.slane %v2787, %v2796
      %v2799 = vunpack.c.l.s4 1966171168
      %v2800 = vunpack.c.0.s8 %v2799
      %v2801 = vlaneseq
      %v2802 = vshrl.u32 %v2801, 7
      %v2803 = vsub.s32 %v2800, %v2802
      %v2804 = vrot.slane %v2788, %v2803
      %v2806 = vunpack.c.l.s4 1966171168
      %v2807 = vunpack.c.0.s8 %v2806
      %v2808 = vlaneseq
      %v2809 = vshrl.u32 %v2808, 7
      %v2810 = vsub.s32 %v2807, %v2809
      %v2811 = vrot.slane %v2789, %v2810
      %v2813 = vunpack.c.l.s4 1966171168
      %v2814 = vunpack.c.0.s8 %v2813
      %v2815 = vlaneseq
      %v2816 = vshrl.u32 %v2815, 7
      %v2817 = vsub.s32 %v2814, %v2816
      %v2818 = vrot.slane %v2790, %v2817
      %v2819 = vcombine.low %v2797, %v2804
      %v2820 = vcombine.low %v2811, %v2818
      %v2822 = vunpack.c.l.s4 1966171168
      %v2823 = vunpack.c.0.s8 %v2822
      %v2824 = vlaneseq
      %v2825 = vshrl.u32 %v2824, 7
      %v2826 = vsub.s32 %v2823, %v2825
      %v2827 = vrot.slane %v2819, %v2826
      %v2829 = vunpack.c.l.s4 1966171168
      %v2830 = vunpack.c.0.s8 %v2829
      %v2831 = vlaneseq
      %v2832 = vshrl.u32 %v2831, 7
      %v2833 = vsub.s32 %v2830, %v2832
      %v2834 = vrot.slane %v2820, %v2833
      %v2835 = vcombine.low %v2827, %v2834
      %v2836 = vcombine.low %v1679, %v1683
      %v2837 = vcombine.low %v1687, %v1691
      %v2838 = vcombine.low %v1695, %v1699
      %v2839 = vcombine.low %v1703, %v1707
      %v2841 = vunpack.c.l.s4 1966171168
      %v2842 = vunpack.c.0.s8 %v2841
      %v2843 = vlaneseq
      %v2844 = vshrl.u32 %v2843, 7
      %v2845 = vsub.s32 %v2842, %v2844
      %v2846 = vrot.slane %v2836, %v2845
      %v2848 = vunpack.c.l.s4 1966171168
      %v2849 = vunpack.c.0.s8 %v2848
      %v2850 = vlaneseq
      %v2851 = vshrl.u32 %v2850, 7
      %v2852 = vsub.s32 %v2849, %v2851
      %v2853 = vrot.slane %v2837, %v2852
      %v2855 = vunpack.c.l.s4 1966171168
      %v2856 = vunpack.c.0.s8 %v2855
      %v2857 = vlaneseq
      %v2858 = vshrl.u32 %v2857, 7
      %v2859 = vsub.s32 %v2856, %v2858
      %v2860 = vrot.slane %v2838, %v2859
      %v2862 = vunpack.c.l.s4 1966171168
      %v2863 = vunpack.c.0.s8 %v2862
      %v2864 = vlaneseq
      %v2865 = vshrl.u32 %v2864, 7
      %v2866 = vsub.s32 %v2863, %v2865
      %v2867 = vrot.slane %v2839, %v2866
      %v2868 = vcombine.low %v2846, %v2853
      %v2869 = vcombine.low %v2860, %v2867
      %v2871 = vunpack.c.l.s4 1966171168
      %v2872 = vunpack.c.0.s8 %v2871
      %v2873 = vlaneseq
      %v2874 = vshrl.u32 %v2873, 7
      %v2875 = vsub.s32 %v2872, %v2874
      %v2876 = vrot.slane %v2868, %v2875
      %v2878 = vunpack.c.l.s4 1966171168
      %v2879 = vunpack.c.0.s8 %v2878
      %v2880 = vlaneseq
      %v2881 = vshrl.u32 %v2880, 7
      %v2882 = vsub.s32 %v2879, %v2881
      %v2883 = vrot.slane %v2869, %v2882
      %v2884 = vcombine.low %v2876, %v2883
      %v2885 = vcombine.low %v1711, %v1715
      %v2886 = vcombine.low %v1719, %v1723
      %v2887 = vcombine.low %v1727, %v1731
      %v2888 = vcombine.low %v1735, %v1739
      %v2890 = vunpack.c.l.s4 1966171168
      %v2891 = vunpack.c.0.s8 %v2890
      %v2892 = vlaneseq
      %v2893 = vshrl.u32 %v2892, 7
      %v2894 = vsub.s32 %v2891, %v2893
      %v2895 = vrot.slane %v2885, %v2894
      %v2897 = vunpack.c.l.s4 1966171168
      %v2898 = vunpack.c.0.s8 %v2897
      %v2899 = vlaneseq
      %v2900 = vshrl.u32 %v2899, 7
      %v2901 = vsub.s32 %v2898, %v2900
      %v2902 = vrot.slane %v2886, %v2901
      %v2904 = vunpack.c.l.s4 1966171168
      %v2905 = vunpack.c.0.s8 %v2904
      %v2906 = vlaneseq
      %v2907 = vshrl.u32 %v2906, 7
      %v2908 = vsub.s32 %v2905, %v2907
      %v2909 = vrot.slane %v2887, %v2908
      %v2911 = vunpack.c.l.s4 1966171168
      %v2912 = vunpack.c.0.s8 %v2911
      %v2913 = vlaneseq
      %v2914 = vshrl.u32 %v2913, 7
      %v2915 = vsub.s32 %v2912, %v2914
      %v2916 = vrot.slane %v2888, %v2915
      %v2917 = vcombine.low %v2895, %v2902
      %v2918 = vcombine.low %v2909, %v2916
      %v2920 = vunpack.c.l.s4 1966171168
      %v2921 = vunpack.c.0.s8 %v2920
      %v2922 = vlaneseq
      %v2923 = vshrl.u32 %v2922, 7
      %v2924 = vsub.s32 %v2921, %v2923
      %v2925 = vrot.slane %v2917, %v2924
      %v2927 = vunpack.c.l.s4 1966171168
      %v2928 = vunpack.c.0.s8 %v2927
      %v2929 = vlaneseq
      %v2930 = vshrl.u32 %v2929, 7
      %v2931 = vsub.s32 %v2928, %v2930
      %v2932 = vrot.slane %v2918, %v2931
      %v2933 = vcombine.low %v2925, %v2932
      %v2934 = vcombine.low %v1743, %v1747
      %v2935 = vcombine.low %v1751, %v1755
      %v2936 = vcombine.low %v1759, %v1763
      %v2937 = vcombine.low %v1767, %v1771
      %v2939 = vunpack.c.l.s4 1966171168
      %v2940 = vunpack.c.0.s8 %v2939
      %v2941 = vlaneseq
      %v2942 = vshrl.u32 %v2941, 7
      %v2943 = vsub.s32 %v2940, %v2942
      %v2944 = vrot.slane %v2934, %v2943
      %v2946 = vunpack.c.l.s4 1966171168
      %v2947 = vunpack.c.0.s8 %v2946
      %v2948 = vlaneseq
      %v2949 = vshrl.u32 %v2948, 7
      %v2950 = vsub.s32 %v2947, %v2949
      %v2951 = vrot.slane %v2935, %v2950
      %v2953 = vunpack.c.l.s4 1966171168
      %v2954 = vunpack.c.0.s8 %v2953
      %v2955 = vlaneseq
      %v2956 = vshrl.u32 %v2955, 7
      %v2957 = vsub.s32 %v2954, %v2956
      %v2958 = vrot.slane %v2936, %v2957
      %v2960 = vunpack.c.l.s4 1966171168
      %v2961 = vunpack.c.0.s8 %v2960
      %v2962 = vlaneseq
      %v2963 = vshrl.u32 %v2962, 7
      %v2964 = vsub.s32 %v2961, %v2963
      %v2965 = vrot.slane %v2937, %v2964
      %v2966 = vcombine.low %v2944, %v2951
      %v2967 = vcombine.low %v2958, %v2965
      %v2969 = vunpack.c.l.s4 1966171168
      %v2970 = vunpack.c.0.s8 %v2969
      %v2971 = vlaneseq
      %v2972 = vshrl.u32 %v2971, 7
      %v2973 = vsub.s32 %v2970, %v2972
      %v2974 = vrot.slane %v2966, %v2973
      %v2976 = vunpack.c.l.s4 1966171168
      %v2977 = vunpack.c.0.s8 %v2976
      %v2978 = vlaneseq
      %v2979 = vshrl.u32 %v2978, 7
      %v2980 = vsub.s32 %v2977, %v2979
      %v2981 = vrot.slane %v2967, %v2980
      %v2982 = vcombine.low %v2974, %v2981
      %v2983 = vcombine.low %v1775, %v1779
      %v2984 = vcombine.low %v1783, %v1787
      %v2985 = vcombine.low %v1791, %v1795
      %v2986 = vcombine.low %v1799, %v1803
      %v2988 = vunpack.c.l.s4 1966171168
      %v2989 = vunpack.c.0.s8 %v2988
      %v2990 = vlaneseq
      %v2991 = vshrl.u32 %v2990, 7
      %v2992 = vsub.s32 %v2989, %v2991
      %v2993 = vrot.slane %v2983, %v2992
      %v2995 = vunpack.c.l.s4 1966171168
      %v2996 = vunpack.c.0.s8 %v2995
      %v2997 = vlaneseq
      %v2998 = vshrl.u32 %v2997, 7
      %v2999 = vsub.s32 %v2996, %v2998
      %v3000 = vrot.slane %v2984, %v2999
      %v3002 = vunpack.c.l.s4 1966171168
      %v3003 = vunpack.c.0.s8 %v3002
      %v3004 = vlaneseq
      %v3005 = vshrl.u32 %v3004, 7
      %v3006 = vsub.s32 %v3003, %v3005
      %v3007 = vrot.slane %v2985, %v3006
      %v3009 = vunpack.c.l.s4 1966171168
      %v3010 = vunpack.c.0.s8 %v3009
      %v3011 = vlaneseq
      %v3012 = vshrl.u32 %v3011, 7
      %v3013 = vsub.s32 %v3010, %v3012
      %v3014 = vrot.slane %v2986, %v3013
      %v3015 = vcombine.low %v2993, %v3000
      %v3016 = vcombine.low %v3007, %v3014
      %v3018 = vunpack.c.l.s4 1966171168
      %v3019 = vunpack.c.0.s8 %v3018
      %v3020 = vlaneseq
      %v3021 = vshrl.u32 %v3020, 7
      %v3022 = vsub.s32 %v3019, %v3021
      %v3023 = vrot.slane %v3015, %v3022
      %v3025 = vunpack.c.l.s4 1966171168
      %v3026 = vunpack.c.0.s8 %v3025
      %v3027 = vlaneseq
      %v3028 = vshrl.u32 %v3027, 7
      %v3029 = vsub.s32 %v3026, %v3028
      %v3030 = vrot.slane %v3016, %v3029
      %v3031 = vcombine.low %v3023, %v3030
      %v3032 = vcombine.low %v1807, %v1811
      %v3033 = vcombine.low %v1815, %v1819
      %v3034 = vcombine.low %v1823, %v1827
      %v3035 = vcombine.low %v1831, %v1835
      %v3037 = vunpack.c.l.s4 1966171168
      %v3038 = vunpack.c.0.s8 %v3037
      %v3039 = vlaneseq
      %v3040 = vshrl.u32 %v3039, 7
      %v3041 = vsub.s32 %v3038, %v3040
      %v3042 = vrot.slane %v3032, %v3041
      %v3044 = vunpack.c.l.s4 1966171168
      %v3045 = vunpack.c.0.s8 %v3044
      %v3046 = vlaneseq
      %v3047 = vshrl.u32 %v3046, 7
      %v3048 = vsub.s32 %v3045, %v3047
      %v3049 = vrot.slane %v3033, %v3048
      %v3051 = vunpack.c.l.s4 1966171168
      %v3052 = vunpack.c.0.s8 %v3051
      %v3053 = vlaneseq
      %v3054 = vshrl.u32 %v3053, 7
      %v3055 = vsub.s32 %v3052, %v3054
      %v3056 = vrot.slane %v3034, %v3055
      %v3058 = vunpack.c.l.s4 1966171168
      %v3059 = vunpack.c.0.s8 %v3058
      %v3060 = vlaneseq
      %v3061 = vshrl.u32 %v3060, 7
      %v3062 = vsub.s32 %v3059, %v3061
      %v3063 = vrot.slane %v3035, %v3062
      %v3064 = vcombine.low %v3042, %v3049
      %v3065 = vcombine.low %v3056, %v3063
      %v3067 = vunpack.c.l.s4 1966171168
      %v3068 = vunpack.c.0.s8 %v3067
      %v3069 = vlaneseq
      %v3070 = vshrl.u32 %v3069, 7
      %v3071 = vsub.s32 %v3068, %v3070
      %v3072 = vrot.slane %v3064, %v3071
      %v3074 = vunpack.c.l.s4 1966171168
      %v3075 = vunpack.c.0.s8 %v3074
      %v3076 = vlaneseq
      %v3077 = vshrl.u32 %v3076, 7
      %v3078 = vsub.s32 %v3075, %v3077
      %v3079 = vrot.slane %v3065, %v3078
      %v3080 = vcombine.low %v3072, %v3079
      %v3081 = vcombine.low %v1839, %v1843
      %v3082 = vcombine.low %v1847, %v1851
      %v3083 = vcombine.low %v1855, %v1859
      %v3084 = vcombine.low %v1863, %v1867
      %v3086 = vunpack.c.l.s4 1966171168
      %v3087 = vunpack.c.0.s8 %v3086
      %v3088 = vlaneseq
      %v3089 = vshrl.u32 %v3088, 7
      %v3090 = vsub.s32 %v3087, %v3089
      %v3091 = vrot.slane %v3081, %v3090
      %v3093 = vunpack.c.l.s4 1966171168
      %v3094 = vunpack.c.0.s8 %v3093
      %v3095 = vlaneseq
      %v3096 = vshrl.u32 %v3095, 7
      %v3097 = vsub.s32 %v3094, %v3096
      %v3098 = vrot.slane %v3082, %v3097
      %v3100 = vunpack.c.l.s4 1966171168
      %v3101 = vunpack.c.0.s8 %v3100
      %v3102 = vlaneseq
      %v3103 = vshrl.u32 %v3102, 7
      %v3104 = vsub.s32 %v3101, %v3103
      %v3105 = vrot.slane %v3083, %v3104
      %v3107 = vunpack.c.l.s4 1966171168
      %v3108 = vunpack.c.0.s8 %v3107
      %v3109 = vlaneseq
      %v3110 = vshrl.u32 %v3109, 7
      %v3111 = vsub.s32 %v3108, %v3110
      %v3112 = vrot.slane %v3084, %v3111
      %v3113 = vcombine.low %v3091, %v3098
      %v3114 = vcombine.low %v3105, %v3112
      %v3116 = vunpack.c.l.s4 1966171168
      %v3117 = vunpack.c.0.s8 %v3116
      %v3118 = vlaneseq
      %v3119 = vshrl.u32 %v3118, 7
      %v3120 = vsub.s32 %v3117, %v3119
      %v3121 = vrot.slane %v3113, %v3120
      %v3123 = vunpack.c.l.s4 1966171168
      %v3124 = vunpack.c.0.s8 %v3123
      %v3125 = vlaneseq
      %v3126 = vshrl.u32 %v3125, 7
      %v3127 = vsub.s32 %v3124, %v3126
      %v3128 = vrot.slane %v3114, %v3127
      %v3129 = vcombine.low %v3121, %v3128
      %v3130 = vcombine.low %v1871, %v1875
      %v3131 = vcombine.low %v1879, %v1883
      %v3132 = vcombine.low %v1887, %v1891
      %v3133 = vcombine.low %v1895, %v1899
      %v3135 = vunpack.c.l.s4 1966171168
      %v3136 = vunpack.c.0.s8 %v3135
      %v3137 = vlaneseq
      %v3138 = vshrl.u32 %v3137, 7
      %v3139 = vsub.s32 %v3136, %v3138
      %v3140 = vrot.slane %v3130, %v3139
      %v3142 = vunpack.c.l.s4 1966171168
      %v3143 = vunpack.c.0.s8 %v3142
      %v3144 = vlaneseq
      %v3145 = vshrl.u32 %v3144, 7
      %v3146 = vsub.s32 %v3143, %v3145
      %v3147 = vrot.slane %v3131, %v3146
      %v3149 = vunpack.c.l.s4 1966171168
      %v3150 = vunpack.c.0.s8 %v3149
      %v3151 = vlaneseq
      %v3152 = vshrl.u32 %v3151, 7
      %v3153 = vsub.s32 %v3150, %v3152
      %v3154 = vrot.slane %v3132, %v3153
      %v3156 = vunpack.c.l.s4 1966171168
      %v3157 = vunpack.c.0.s8 %v3156
      %v3158 = vlaneseq
      %v3159 = vshrl.u32 %v3158, 7
      %v3160 = vsub.s32 %v3157, %v3159
      %v3161 = vrot.slane %v3133, %v3160
      %v3162 = vcombine.low %v3140, %v3147
      %v3163 = vcombine.low %v3154, %v3161
      %v3165 = vunpack.c.l.s4 1966171168
      %v3166 = vunpack.c.0.s8 %v3165
      %v3167 = vlaneseq
      %v3168 = vshrl.u32 %v3167, 7
      %v3169 = vsub.s32 %v3166, %v3168
      %v3170 = vrot.slane %v3162, %v3169
      %v3172 = vunpack.c.l.s4 1966171168
      %v3173 = vunpack.c.0.s8 %v3172
      %v3174 = vlaneseq
      %v3175 = vshrl.u32 %v3174, 7
      %v3176 = vsub.s32 %v3173, %v3175
      %v3177 = vrot.slane %v3163, %v3176
      %v3178 = vcombine.low %v3170, %v3177
      %v3179 = vcombine.low %v1903, %v1907
      %v3180 = vcombine.low %v1911, %v1915
      %v3181 = vcombine.low %v1919, %v1923
      %v3182 = vcombine.low %v1927, %v1931
      %v3184 = vunpack.c.l.s4 1966171168
      %v3185 = vunpack.c.0.s8 %v3184
      %v3186 = vlaneseq
      %v3187 = vshrl.u32 %v3186, 7
      %v3188 = vsub.s32 %v3185, %v3187
      %v3189 = vrot.slane %v3179, %v3188
      %v3191 = vunpack.c.l.s4 1966171168
      %v3192 = vunpack.c.0.s8 %v3191
      %v3193 = vlaneseq
      %v3194 = vshrl.u32 %v3193, 7
      %v3195 = vsub.s32 %v3192, %v3194
      %v3196 = vrot.slane %v3180, %v3195
      %v3198 = vunpack.c.l.s4 1966171168
      %v3199 = vunpack.c.0.s8 %v3198
      %v3200 = vlaneseq
      %v3201 = vshrl.u32 %v3200, 7
      %v3202 = vsub.s32 %v3199, %v3201
      %v3203 = vrot.slane %v3181, %v3202
      %v3205 = vunpack.c.l.s4 1966171168
      %v3206 = vunpack.c.0.s8 %v3205
      %v3207 = vlaneseq
      %v3208 = vshrl.u32 %v3207, 7
      %v3209 = vsub.s32 %v3206, %v3208
      %v3210 = vrot.slane %v3182, %v3209
      %v3211 = vcombine.low %v3189, %v3196
      %v3212 = vcombine.low %v3203, %v3210
      %v3214 = vunpack.c.l.s4 1966171168
      %v3215 = vunpack.c.0.s8 %v3214
      %v3216 = vlaneseq
      %v3217 = vshrl.u32 %v3216, 7
      %v3218 = vsub.s32 %v3215, %v3217
      %v3219 = vrot.slane %v3211, %v3218
      %v3221 = vunpack.c.l.s4 1966171168
      %v3222 = vunpack.c.0.s8 %v3221
      %v3223 = vlaneseq
      %v3224 = vshrl.u32 %v3223, 7
      %v3225 = vsub.s32 %v3222, %v3224
      %v3226 = vrot.slane %v3212, %v3225
      %v3227 = vcombine.low %v3219, %v3226
      %v3228 = vcombine.low %v1935, %v1939
      %v3229 = vcombine.low %v1943, %v1947
      %v3230 = vcombine.low %v1951, %v1955
      %v3231 = vcombine.low %v1959, %v1963
      %v3233 = vunpack.c.l.s4 1966171168
      %v3234 = vunpack.c.0.s8 %v3233
      %v3235 = vlaneseq
      %v3236 = vshrl.u32 %v3235, 7
      %v3237 = vsub.s32 %v3234, %v3236
      %v3238 = vrot.slane %v3228, %v3237
      %v3240 = vunpack.c.l.s4 1966171168
      %v3241 = vunpack.c.0.s8 %v3240
      %v3242 = vlaneseq
      %v3243 = vshrl.u32 %v3242, 7
      %v3244 = vsub.s32 %v3241, %v3243
      %v3245 = vrot.slane %v3229, %v3244
      %v3247 = vunpack.c.l.s4 1966171168
      %v3248 = vunpack.c.0.s8 %v3247
      %v3249 = vlaneseq
      %v3250 = vshrl.u32 %v3249, 7
      %v3251 = vsub.s32 %v3248, %v3250
      %v3252 = vrot.slane %v3230, %v3251
      %v3254 = vunpack.c.l.s4 1966171168
      %v3255 = vunpack.c.0.s8 %v3254
      %v3256 = vlaneseq
      %v3257 = vshrl.u32 %v3256, 7
      %v3258 = vsub.s32 %v3255, %v3257
      %v3259 = vrot.slane %v3231, %v3258
      %v3260 = vcombine.low %v3238, %v3245
      %v3261 = vcombine.low %v3252, %v3259
      %v3263 = vunpack.c.l.s4 1966171168
      %v3264 = vunpack.c.0.s8 %v3263
      %v3265 = vlaneseq
      %v3266 = vshrl.u32 %v3265, 7
      %v3267 = vsub.s32 %v3264, %v3266
      %v3268 = vrot.slane %v3260, %v3267
      %v3270 = vunpack.c.l.s4 1966171168
      %v3271 = vunpack.c.0.s8 %v3270
      %v3272 = vlaneseq
      %v3273 = vshrl.u32 %v3272, 7
      %v3274 = vsub.s32 %v3271, %v3273
      %v3275 = vrot.slane %v3261, %v3274
      %v3276 = vcombine.low %v3268, %v3275
      %v3277 = vcombine.low %v1967, %v1971
      %v3278 = vcombine.low %v1975, %v1979
      %v3279 = vcombine.low %v1983, %v1987
      %v3280 = vcombine.low %v1991, %v1995
      %v3282 = vunpack.c.l.s4 1966171168
      %v3283 = vunpack.c.0.s8 %v3282
      %v3284 = vlaneseq
      %v3285 = vshrl.u32 %v3284, 7
      %v3286 = vsub.s32 %v3283, %v3285
      %v3287 = vrot.slane %v3277, %v3286
      %v3289 = vunpack.c.l.s4 1966171168
      %v3290 = vunpack.c.0.s8 %v3289
      %v3291 = vlaneseq
      %v3292 = vshrl.u32 %v3291, 7
      %v3293 = vsub.s32 %v3290, %v3292
      %v3294 = vrot.slane %v3278, %v3293
      %v3296 = vunpack.c.l.s4 1966171168
      %v3297 = vunpack.c.0.s8 %v3296
      %v3298 = vlaneseq
      %v3299 = vshrl.u32 %v3298, 7
      %v3300 = vsub.s32 %v3297, %v3299
      %v3301 = vrot.slane %v3279, %v3300
      %v3303 = vunpack.c.l.s4 1966171168
      %v3304 = vunpack.c.0.s8 %v3303
      %v3305 = vlaneseq
      %v3306 = vshrl.u32 %v3305, 7
      %v3307 = vsub.s32 %v3304, %v3306
      %v3308 = vrot.slane %v3280, %v3307
      %v3309 = vcombine.low %v3287, %v3294
      %v3310 = vcombine.low %v3301, %v3308
      %v3312 = vunpack.c.l.s4 1966171168
      %v3313 = vunpack.c.0.s8 %v3312
      %v3314 = vlaneseq
      %v3315 = vshrl.u32 %v3314, 7
      %v3316 = vsub.s32 %v3313, %v3315
      %v3317 = vrot.slane %v3309, %v3316
      %v3319 = vunpack.c.l.s4 1966171168
      %v3320 = vunpack.c.0.s8 %v3319
      %v3321 = vlaneseq
      %v3322 = vshrl.u32 %v3321, 7
      %v3323 = vsub.s32 %v3320, %v3322
      %v3324 = vrot.slane %v3310, %v3323
      %v3325 = vcombine.low %v3317, %v3324
      %v3326 = vcombine.low %v1999, %v2003
      %v3327 = vcombine.low %v2007, %v2011
      %v3328 = vcombine.low %v2015, %v2019
      %v3329 = vcombine.low %v2023, %v2027
      %v3331 = vunpack.c.l.s4 1966171168
      %v3332 = vunpack.c.0.s8 %v3331
      %v3333 = vlaneseq
      %v3334 = vshrl.u32 %v3333, 7
      %v3335 = vsub.s32 %v3332, %v3334
      %v3336 = vrot.slane %v3326, %v3335
      %v3338 = vunpack.c.l.s4 1966171168
      %v3339 = vunpack.c.0.s8 %v3338
      %v3340 = vlaneseq
      %v3341 = vshrl.u32 %v3340, 7
      %v3342 = vsub.s32 %v3339, %v3341
      %v3343 = vrot.slane %v3327, %v3342
      %v3345 = vunpack.c.l.s4 1966171168
      %v3346 = vunpack.c.0.s8 %v3345
      %v3347 = vlaneseq
      %v3348 = vshrl.u32 %v3347, 7
      %v3349 = vsub.s32 %v3346, %v3348
      %v3350 = vrot.slane %v3328, %v3349
      %v3352 = vunpack.c.l.s4 1966171168
      %v3353 = vunpack.c.0.s8 %v3352
      %v3354 = vlaneseq
      %v3355 = vshrl.u32 %v3354, 7
      %v3356 = vsub.s32 %v3353, %v3355
      %v3357 = vrot.slane %v3329, %v3356
      %v3358 = vcombine.low %v3336, %v3343
      %v3359 = vcombine.low %v3350, %v3357
      %v3361 = vunpack.c.l.s4 1966171168
      %v3362 = vunpack.c.0.s8 %v3361
      %v3363 = vlaneseq
      %v3364 = vshrl.u32 %v3363, 7
      %v3365 = vsub.s32 %v3362, %v3364
      %v3366 = vrot.slane %v3358, %v3365
      %v3368 = vunpack.c.l.s4 1966171168
      %v3369 = vunpack.c.0.s8 %v3368
      %v3370 = vlaneseq
      %v3371 = vshrl.u32 %v3370, 7
      %v3372 = vsub.s32 %v3369, %v3371
      %v3373 = vrot.slane %v3359, %v3372
      %v3374 = vcombine.low %v3366, %v3373
      %v3375 = vcombine.low %v2031, %v2035
      %v3376 = vcombine.low %v2039, %v2043
      %v3377 = vcombine.low %v2047, %v2051
      %v3378 = vcombine.low %v2055, %v2059
      %v3380 = vunpack.c.l.s4 1966171168
      %v3381 = vunpack.c.0.s8 %v3380
      %v3382 = vlaneseq
      %v3383 = vshrl.u32 %v3382, 7
      %v3384 = vsub.s32 %v3381, %v3383
      %v3385 = vrot.slane %v3375, %v3384
      %v3387 = vunpack.c.l.s4 1966171168
      %v3388 = vunpack.c.0.s8 %v3387
      %v3389 = vlaneseq
      %v3390 = vshrl.u32 %v3389, 7
      %v3391 = vsub.s32 %v3388, %v3390
      %v3392 = vrot.slane %v3376, %v3391
      %v3394 = vunpack.c.l.s4 1966171168
      %v3395 = vunpack.c.0.s8 %v3394
      %v3396 = vlaneseq
      %v3397 = vshrl.u32 %v3396, 7
      %v3398 = vsub.s32 %v3395, %v3397
      %v3399 = vrot.slane %v3377, %v3398
      %v3401 = vunpack.c.l.s4 1966171168
      %v3402 = vunpack.c.0.s8 %v3401
      %v3403 = vlaneseq
      %v3404 = vshrl.u32 %v3403, 7
      %v3405 = vsub.s32 %v3402, %v3404
      %v3406 = vrot.slane %v3378, %v3405
      %v3407 = vcombine.low %v3385, %v3392
      %v3408 = vcombine.low %v3399, %v3406
      %v3410 = vunpack.c.l.s4 1966171168
      %v3411 = vunpack.c.0.s8 %v3410
      %v3412 = vlaneseq
      %v3413 = vshrl.u32 %v3412, 7
      %v3414 = vsub.s32 %v3411, %v3413
      %v3415 = vrot.slane %v3407, %v3414
      %v3417 = vunpack.c.l.s4 1966171168
      %v3418 = vunpack.c.0.s8 %v3417
      %v3419 = vlaneseq
      %v3420 = vshrl.u32 %v3419, 7
      %v3421 = vsub.s32 %v3418, %v3420
      %v3422 = vrot.slane %v3408, %v3421
      %v3423 = vcombine.low %v3415, %v3422
      %v3424 = vcombine.low %v2063, %v2067
      %v3425 = vcombine.low %v2071, %v2075
      %v3426 = vcombine.low %v2079, %v2083
      %v3427 = vcombine.low %v2087, %v2091
      %v3429 = vunpack.c.l.s4 1966171168
      %v3430 = vunpack.c.0.s8 %v3429
      %v3431 = vlaneseq
      %v3432 = vshrl.u32 %v3431, 7
      %v3433 = vsub.s32 %v3430, %v3432
      %v3434 = vrot.slane %v3424, %v3433
      %v3436 = vunpack.c.l.s4 1966171168
      %v3437 = vunpack.c.0.s8 %v3436
      %v3438 = vlaneseq
      %v3439 = vshrl.u32 %v3438, 7
      %v3440 = vsub.s32 %v3437, %v3439
      %v3441 = vrot.slane %v3425, %v3440
      %v3443 = vunpack.c.l.s4 1966171168
      %v3444 = vunpack.c.0.s8 %v3443
      %v3445 = vlaneseq
      %v3446 = vshrl.u32 %v3445, 7
      %v3447 = vsub.s32 %v3444, %v3446
      %v3448 = vrot.slane %v3426, %v3447
      %v3450 = vunpack.c.l.s4 1966171168
      %v3451 = vunpack.c.0.s8 %v3450
      %v3452 = vlaneseq
      %v3453 = vshrl.u32 %v3452, 7
      %v3454 = vsub.s32 %v3451, %v3453
      %v3455 = vrot.slane %v3427, %v3454
      %v3456 = vcombine.low %v3434, %v3441
      %v3457 = vcombine.low %v3448, %v3455
      %v3459 = vunpack.c.l.s4 1966171168
      %v3460 = vunpack.c.0.s8 %v3459
      %v3461 = vlaneseq
      %v3462 = vshrl.u32 %v3461, 7
      %v3463 = vsub.s32 %v3460, %v3462
      %v3464 = vrot.slane %v3456, %v3463
      %v3466 = vunpack.c.l.s4 1966171168
      %v3467 = vunpack.c.0.s8 %v3466
      %v3468 = vlaneseq
      %v3469 = vshrl.u32 %v3468, 7
      %v3470 = vsub.s32 %v3467, %v3469
      %v3471 = vrot.slane %v3457, %v3470
      %v3472 = vcombine.low %v3464, %v3471
      %v3473 = vcombine.low %v2095, %v2099
      %v3474 = vcombine.low %v2103, %v2107
      %v3475 = vcombine.low %v2111, %v2115
      %v3476 = vcombine.low %v2119, %v2123
      %v3478 = vunpack.c.l.s4 1966171168
      %v3479 = vunpack.c.0.s8 %v3478
      %v3480 = vlaneseq
      %v3481 = vshrl.u32 %v3480, 7
      %v3482 = vsub.s32 %v3479, %v3481
      %v3483 = vrot.slane %v3473, %v3482
      %v3485 = vunpack.c.l.s4 1966171168
      %v3486 = vunpack.c.0.s8 %v3485
      %v3487 = vlaneseq
      %v3488 = vshrl.u32 %v3487, 7
      %v3489 = vsub.s32 %v3486, %v3488
      %v3490 = vrot.slane %v3474, %v3489
      %v3492 = vunpack.c.l.s4 1966171168
      %v3493 = vunpack.c.0.s8 %v3492
      %v3494 = vlaneseq
      %v3495 = vshrl.u32 %v3494, 7
      %v3496 = vsub.s32 %v3493, %v3495
      %v3497 = vrot.slane %v3475, %v3496
      %v3499 = vunpack.c.l.s4 1966171168
      %v3500 = vunpack.c.0.s8 %v3499
      %v3501 = vlaneseq
      %v3502 = vshrl.u32 %v3501, 7
      %v3503 = vsub.s32 %v3500, %v3502
      %v3504 = vrot.slane %v3476, %v3503
      %v3505 = vcombine.low %v3483, %v3490
      %v3506 = vcombine.low %v3497, %v3504
      %v3508 = vunpack.c.l.s4 1966171168
      %v3509 = vunpack.c.0.s8 %v3508
      %v3510 = vlaneseq
      %v3511 = vshrl.u32 %v3510, 7
      %v3512 = vsub.s32 %v3509, %v3511
      %v3513 = vrot.slane %v3505, %v3512
      %v3515 = vunpack.c.l.s4 1966171168
      %v3516 = vunpack.c.0.s8 %v3515
      %v3517 = vlaneseq
      %v3518 = vshrl.u32 %v3517, 7
      %v3519 = vsub.s32 %v3516, %v3518
      %v3520 = vrot.slane %v3506, %v3519
      %v3521 = vcombine.low %v3513, %v3520
      %v3522 = vcombine.low %v2127, %v2131
      %v3523 = vcombine.low %v2135, %v2139
      %v3524 = vcombine.low %v2143, %v2147
      %v3525 = vcombine.low %v2151, %v2155
      %v3527 = vunpack.c.l.s4 1966171168
      %v3528 = vunpack.c.0.s8 %v3527
      %v3529 = vlaneseq
      %v3530 = vshrl.u32 %v3529, 7
      %v3531 = vsub.s32 %v3528, %v3530
      %v3532 = vrot.slane %v3522, %v3531
      %v3534 = vunpack.c.l.s4 1966171168
      %v3535 = vunpack.c.0.s8 %v3534
      %v3536 = vlaneseq
      %v3537 = vshrl.u32 %v3536, 7
      %v3538 = vsub.s32 %v3535, %v3537
      %v3539 = vrot.slane %v3523, %v3538
      %v3541 = vunpack.c.l.s4 1966171168
      %v3542 = vunpack.c.0.s8 %v3541
      %v3543 = vlaneseq
      %v3544 = vshrl.u32 %v3543, 7
      %v3545 = vsub.s32 %v3542, %v3544
      %v3546 = vrot.slane %v3524, %v3545
      %v3548 = vunpack.c.l.s4 1966171168
      %v3549 = vunpack.c.0.s8 %v3548
      %v3550 = vlaneseq
      %v3551 = vshrl.u32 %v3550, 7
      %v3552 = vsub.s32 %v3549, %v3551
      %v3553 = vrot.slane %v3525, %v3552
      %v3554 = vcombine.low %v3532, %v3539
      %v3555 = vcombine.low %v3546, %v3553
      %v3557 = vunpack.c.l.s4 1966171168
      %v3558 = vunpack.c.0.s8 %v3557
      %v3559 = vlaneseq
      %v3560 = vshrl.u32 %v3559, 7
      %v3561 = vsub.s32 %v3558, %v3560
      %v3562 = vrot.slane %v3554, %v3561
      %v3564 = vunpack.c.l.s4 1966171168
      %v3565 = vunpack.c.0.s8 %v3564
      %v3566 = vlaneseq
      %v3567 = vshrl.u32 %v3566, 7
      %v3568 = vsub.s32 %v3565, %v3567
      %v3569 = vrot.slane %v3555, %v3568
      %v3570 = vcombine.low %v3562, %v3569
      %v3571 = vcombine.low %v2159, %v2163
      %v3572 = vcombine.low %v2167, %v2171
      %v3573 = vcombine.low %v2175, %v2179
      %v3574 = vcombine.low %v2183, %v2187
      %v3576 = vunpack.c.l.s4 1966171168
      %v3577 = vunpack.c.0.s8 %v3576
      %v3578 = vlaneseq
      %v3579 = vshrl.u32 %v3578, 7
      %v3580 = vsub.s32 %v3577, %v3579
      %v3581 = vrot.slane %v3571, %v3580
      %v3583 = vunpack.c.l.s4 1966171168
      %v3584 = vunpack.c.0.s8 %v3583
      %v3585 = vlaneseq
      %v3586 = vshrl.u32 %v3585, 7
      %v3587 = vsub.s32 %v3584, %v3586
      %v3588 = vrot.slane %v3572, %v3587
      %v3590 = vunpack.c.l.s4 1966171168
      %v3591 = vunpack.c.0.s8 %v3590
      %v3592 = vlaneseq
      %v3593 = vshrl.u32 %v3592, 7
      %v3594 = vsub.s32 %v3591, %v3593
      %v3595 = vrot.slane %v3573, %v3594
      %v3597 = vunpack.c.l.s4 1966171168
      %v3598 = vunpack.c.0.s8 %v3597
      %v3599 = vlaneseq
      %v3600 = vshrl.u32 %v3599, 7
      %v3601 = vsub.s32 %v3598, %v3600
      %v3602 = vrot.slane %v3574, %v3601
      %v3603 = vcombine.low %v3581, %v3588
      %v3604 = vcombine.low %v3595, %v3602
      %v3606 = vunpack.c.l.s4 1966171168
      %v3607 = vunpack.c.0.s8 %v3606
      %v3608 = vlaneseq
      %v3609 = vshrl.u32 %v3608, 7
      %v3610 = vsub.s32 %v3607, %v3609
      %v3611 = vrot.slane %v3603, %v3610
      %v3613 = vunpack.c.l.s4 1966171168
      %v3614 = vunpack.c.0.s8 %v3613
      %v3615 = vlaneseq
      %v3616 = vshrl.u32 %v3615, 7
      %v3617 = vsub.s32 %v3614, %v3616
      %v3618 = vrot.slane %v3604, %v3617
      %v3619 = vcombine.low %v3611, %v3618
      %v3620 = vcombine.low %v2191, %v2195
      %v3621 = vcombine.low %v2199, %v2203
      %v3622 = vcombine.low %v2207, %v2211
      %v3623 = vcombine.low %v2215, %v2219
      %v3625 = vunpack.c.l.s4 1966171168
      %v3626 = vunpack.c.0.s8 %v3625
      %v3627 = vlaneseq
      %v3628 = vshrl.u32 %v3627, 7
      %v3629 = vsub.s32 %v3626, %v3628
      %v3630 = vrot.slane %v3620, %v3629
      %v3632 = vunpack.c.l.s4 1966171168
      %v3633 = vunpack.c.0.s8 %v3632
      %v3634 = vlaneseq
      %v3635 = vshrl.u32 %v3634, 7
      %v3636 = vsub.s32 %v3633, %v3635
      %v3637 = vrot.slane %v3621, %v3636
      %v3639 = vunpack.c.l.s4 1966171168
      %v3640 = vunpack.c.0.s8 %v3639
      %v3641 = vlaneseq
      %v3642 = vshrl.u32 %v3641, 7
      %v3643 = vsub.s32 %v3640, %v3642
      %v3644 = vrot.slane %v3622, %v3643
      %v3646 = vunpack.c.l.s4 1966171168
      %v3647 = vunpack.c.0.s8 %v3646
      %v3648 = vlaneseq
      %v3649 = vshrl.u32 %v3648, 7
      %v3650 = vsub.s32 %v3647, %v3649
      %v3651 = vrot.slane %v3623, %v3650
      %v3652 = vcombine.low %v3630, %v3637
      %v3653 = vcombine.low %v3644, %v3651
      %v3655 = vunpack.c.l.s4 1966171168
      %v3656 = vunpack.c.0.s8 %v3655
      %v3657 = vlaneseq
      %v3658 = vshrl.u32 %v3657, 7
      %v3659 = vsub.s32 %v3656, %v3658
      %v3660 = vrot.slane %v3652, %v3659
      %v3662 = vunpack.c.l.s4 1966171168
      %v3663 = vunpack.c.0.s8 %v3662
      %v3664 = vlaneseq
      %v3665 = vshrl.u32 %v3664, 7
      %v3666 = vsub.s32 %v3663, %v3665
      %v3667 = vrot.slane %v3653, %v3666
      %v3668 = vcombine.low %v3660, %v3667
      %v3669 = vcombine.low %v2223, %v2227
      %v3670 = vcombine.low %v2231, %v2235
      %v3671 = vcombine.low %v2239, %v2243
      %v3672 = vcombine.low %v2247, %v2251
      %v3674 = vunpack.c.l.s4 1966171168
      %v3675 = vunpack.c.0.s8 %v3674
      %v3676 = vlaneseq
      %v3677 = vshrl.u32 %v3676, 7
      %v3678 = vsub.s32 %v3675, %v3677
      %v3679 = vrot.slane %v3669, %v3678
      %v3681 = vunpack.c.l.s4 1966171168
      %v3682 = vunpack.c.0.s8 %v3681
      %v3683 = vlaneseq
      %v3684 = vshrl.u32 %v3683, 7
      %v3685 = vsub.s32 %v3682, %v3684
      %v3686 = vrot.slane %v3670, %v3685
      %v3688 = vunpack.c.l.s4 1966171168
      %v3689 = vunpack.c.0.s8 %v3688
      %v3690 = vlaneseq
      %v3691 = vshrl.u32 %v3690, 7
      %v3692 = vsub.s32 %v3689, %v3691
      %v3693 = vrot.slane %v3671, %v3692
      %v3695 = vunpack.c.l.s4 1966171168
      %v3696 = vunpack.c.0.s8 %v3695
      %v3697 = vlaneseq
      %v3698 = vshrl.u32 %v3697, 7
      %v3699 = vsub.s32 %v3696, %v3698
      %v3700 = vrot.slane %v3672, %v3699
      %v3701 = vcombine.low %v3679, %v3686
      %v3702 = vcombine.low %v3693, %v3700
      %v3704 = vunpack.c.l.s4 1966171168
      %v3705 = vunpack.c.0.s8 %v3704
      %v3706 = vlaneseq
      %v3707 = vshrl.u32 %v3706, 7
      %v3708 = vsub.s32 %v3705, %v3707
      %v3709 = vrot.slane %v3701, %v3708
      %v3711 = vunpack.c.l.s4 1966171168
      %v3712 = vunpack.c.0.s8 %v3711
      %v3713 = vlaneseq
      %v3714 = vshrl.u32 %v3713, 7
      %v3715 = vsub.s32 %v3712, %v3714
      %v3716 = vrot.slane %v3702, %v3715
      %v3717 = vcombine.low %v3709, %v3716
      %v3718 = vcombine.low %v2255, %v2259
      %v3719 = vcombine.low %v2263, %v2267
      %v3720 = vcombine.low %v2271, %v2275
      %v3721 = vcombine.low %v2279, %v2283
      %v3723 = vunpack.c.l.s4 1966171168
      %v3724 = vunpack.c.0.s8 %v3723
      %v3725 = vlaneseq
      %v3726 = vshrl.u32 %v3725, 7
      %v3727 = vsub.s32 %v3724, %v3726
      %v3728 = vrot.slane %v3718, %v3727
      %v3730 = vunpack.c.l.s4 1966171168
      %v3731 = vunpack.c.0.s8 %v3730
      %v3732 = vlaneseq
      %v3733 = vshrl.u32 %v3732, 7
      %v3734 = vsub.s32 %v3731, %v3733
      %v3735 = vrot.slane %v3719, %v3734
      %v3737 = vunpack.c.l.s4 1966171168
      %v3738 = vunpack.c.0.s8 %v3737
      %v3739 = vlaneseq
      %v3740 = vshrl.u32 %v3739, 7
      %v3741 = vsub.s32 %v3738, %v3740
      %v3742 = vrot.slane %v3720, %v3741
      %v3744 = vunpack.c.l.s4 1966171168
      %v3745 = vunpack.c.0.s8 %v3744
      %v3746 = vlaneseq
      %v3747 = vshrl.u32 %v3746, 7
      %v3748 = vsub.s32 %v3745, %v3747
      %v3749 = vrot.slane %v3721, %v3748
      %v3750 = vcombine.low %v3728, %v3735
      %v3751 = vcombine.low %v3742, %v3749
      %v3753 = vunpack.c.l.s4 1966171168
      %v3754 = vunpack.c.0.s8 %v3753
      %v3755 = vlaneseq
      %v3756 = vshrl.u32 %v3755, 7
      %v3757 = vsub.s32 %v3754, %v3756
      %v3758 = vrot.slane %v3750, %v3757
      %v3760 = vunpack.c.l.s4 1966171168
      %v3761 = vunpack.c.0.s8 %v3760
      %v3762 = vlaneseq
      %v3763 = vshrl.u32 %v3762, 7
      %v3764 = vsub.s32 %v3761, %v3763
      %v3765 = vrot.slane %v3751, %v3764
      %v3766 = vcombine.low %v3758, %v3765
      %v3767 = vcombine.low %v2287, %v2291
      %v3768 = vcombine.low %v2295, %v2299
      %v3769 = vcombine.low %v2303, %v2307
      %v3770 = vcombine.low %v2311, %v2315
      %v3772 = vunpack.c.l.s4 1966171168
      %v3773 = vunpack.c.0.s8 %v3772
      %v3774 = vlaneseq
      %v3775 = vshrl.u32 %v3774, 7
      %v3776 = vsub.s32 %v3773, %v3775
      %v3777 = vrot.slane %v3767, %v3776
      %v3779 = vunpack.c.l.s4 1966171168
      %v3780 = vunpack.c.0.s8 %v3779
      %v3781 = vlaneseq
      %v3782 = vshrl.u32 %v3781, 7
      %v3783 = vsub.s32 %v3780, %v3782
      %v3784 = vrot.slane %v3768, %v3783
      %v3786 = vunpack.c.l.s4 1966171168
      %v3787 = vunpack.c.0.s8 %v3786
      %v3788 = vlaneseq
      %v3789 = vshrl.u32 %v3788, 7
      %v3790 = vsub.s32 %v3787, %v3789
      %v3791 = vrot.slane %v3769, %v3790
      %v3793 = vunpack.c.l.s4 1966171168
      %v3794 = vunpack.c.0.s8 %v3793
      %v3795 = vlaneseq
      %v3796 = vshrl.u32 %v3795, 7
      %v3797 = vsub.s32 %v3794, %v3796
      %v3798 = vrot.slane %v3770, %v3797
      %v3799 = vcombine.low %v3777, %v3784
      %v3800 = vcombine.low %v3791, %v3798
      %v3802 = vunpack.c.l.s4 1966171168
      %v3803 = vunpack.c.0.s8 %v3802
      %v3804 = vlaneseq
      %v3805 = vshrl.u32 %v3804, 7
      %v3806 = vsub.s32 %v3803, %v3805
      %v3807 = vrot.slane %v3799, %v3806
      %v3809 = vunpack.c.l.s4 1966171168
      %v3810 = vunpack.c.0.s8 %v3809
      %v3811 = vlaneseq
      %v3812 = vshrl.u32 %v3811, 7
      %v3813 = vsub.s32 %v3810, %v3812
      %v3814 = vrot.slane %v3800, %v3813
      %v3815 = vcombine.low %v3807, %v3814
      %v3816 = vcombine.low %v2319, %v2323
      %v3817 = vcombine.low %v2327, %v2331
      %v3818 = vcombine.low %v2335, %v2339
      %v3819 = vcombine.low %v2343, %v2347
      %v3821 = vunpack.c.l.s4 1966171168
      %v3822 = vunpack.c.0.s8 %v3821
      %v3823 = vlaneseq
      %v3824 = vshrl.u32 %v3823, 7
      %v3825 = vsub.s32 %v3822, %v3824
      %v3826 = vrot.slane %v3816, %v3825
      %v3828 = vunpack.c.l.s4 1966171168
      %v3829 = vunpack.c.0.s8 %v3828
      %v3830 = vlaneseq
      %v3831 = vshrl.u32 %v3830, 7
      %v3832 = vsub.s32 %v3829, %v3831
      %v3833 = vrot.slane %v3817, %v3832
      %v3835 = vunpack.c.l.s4 1966171168
      %v3836 = vunpack.c.0.s8 %v3835
      %v3837 = vlaneseq
      %v3838 = vshrl.u32 %v3837, 7
      %v3839 = vsub.s32 %v3836, %v3838
      %v3840 = vrot.slane %v3818, %v3839
      %v3842 = vunpack.c.l.s4 1966171168
      %v3843 = vunpack.c.0.s8 %v3842
      %v3844 = vlaneseq
      %v3845 = vshrl.u32 %v3844, 7
      %v3846 = vsub.s32 %v3843, %v3845
      %v3847 = vrot.slane %v3819, %v3846
      %v3848 = vcombine.low %v3826, %v3833
      %v3849 = vcombine.low %v3840, %v3847
      %v3851 = vunpack.c.l.s4 1966171168
      %v3852 = vunpack.c.0.s8 %v3851
      %v3853 = vlaneseq
      %v3854 = vshrl.u32 %v3853, 7
      %v3855 = vsub.s32 %v3852, %v3854
      %v3856 = vrot.slane %v3848, %v3855
      %v3858 = vunpack.c.l.s4 1966171168
      %v3859 = vunpack.c.0.s8 %v3858
      %v3860 = vlaneseq
      %v3861 = vshrl.u32 %v3860, 7
      %v3862 = vsub.s32 %v3859, %v3861
      %v3863 = vrot.slane %v3849, %v3862
      %v3864 = vcombine.low %v3856, %v3863
      %v3865 = vcombine.low %v2351, %v2355
      %v3866 = vcombine.low %v2359, %v2363
      %v3867 = vcombine.low %v2367, %v2371
      %v3868 = vcombine.low %v2375, %v2379
      %v3870 = vunpack.c.l.s4 1966171168
      %v3871 = vunpack.c.0.s8 %v3870
      %v3872 = vlaneseq
      %v3873 = vshrl.u32 %v3872, 7
      %v3874 = vsub.s32 %v3871, %v3873
      %v3875 = vrot.slane %v3865, %v3874
      %v3877 = vunpack.c.l.s4 1966171168
      %v3878 = vunpack.c.0.s8 %v3877
      %v3879 = vlaneseq
      %v3880 = vshrl.u32 %v3879, 7
      %v3881 = vsub.s32 %v3878, %v3880
      %v3882 = vrot.slane %v3866, %v3881
      %v3884 = vunpack.c.l.s4 1966171168
      %v3885 = vunpack.c.0.s8 %v3884
      %v3886 = vlaneseq
      %v3887 = vshrl.u32 %v3886, 7
      %v3888 = vsub.s32 %v3885, %v3887
      %v3889 = vrot.slane %v3867, %v3888
      %v3891 = vunpack.c.l.s4 1966171168
      %v3892 = vunpack.c.0.s8 %v3891
      %v3893 = vlaneseq
      %v3894 = vshrl.u32 %v3893, 7
      %v3895 = vsub.s32 %v3892, %v3894
      %v3896 = vrot.slane %v3868, %v3895
      %v3897 = vcombine.low %v3875, %v3882
      %v3898 = vcombine.low %v3889, %v3896
      %v3900 = vunpack.c.l.s4 1966171168
      %v3901 = vunpack.c.0.s8 %v3900
      %v3902 = vlaneseq
      %v3903 = vshrl.u32 %v3902, 7
      %v3904 = vsub.s32 %v3901, %v3903
      %v3905 = vrot.slane %v3897, %v3904
      %v3907 = vunpack.c.l.s4 1966171168
      %v3908 = vunpack.c.0.s8 %v3907
      %v3909 = vlaneseq
      %v3910 = vshrl.u32 %v3909, 7
      %v3911 = vsub.s32 %v3908, %v3910
      %v3912 = vrot.slane %v3898, %v3911
      %v3913 = vcombine.low %v3905, %v3912
      %v3914 = vcombine.low %v2383, %v2387
      %v3915 = vcombine.low %v2391, %v2395
      %v3916 = vcombine.low %v2399, %v2403
      %v3917 = vcombine.low %v2407, %v2411
      %v3919 = vunpack.c.l.s4 1966171168
      %v3920 = vunpack.c.0.s8 %v3919
      %v3921 = vlaneseq
      %v3922 = vshrl.u32 %v3921, 7
      %v3923 = vsub.s32 %v3920, %v3922
      %v3924 = vrot.slane %v3914, %v3923
      %v3926 = vunpack.c.l.s4 1966171168
      %v3927 = vunpack.c.0.s8 %v3926
      %v3928 = vlaneseq
      %v3929 = vshrl.u32 %v3928, 7
      %v3930 = vsub.s32 %v3927, %v3929
      %v3931 = vrot.slane %v3915, %v3930
      %v3933 = vunpack.c.l.s4 1966171168
      %v3934 = vunpack.c.0.s8 %v3933
      %v3935 = vlaneseq
      %v3936 = vshrl.u32 %v3935, 7
      %v3937 = vsub.s32 %v3934, %v3936
      %v3938 = vrot.slane %v3916, %v3937
      %v3940 = vunpack.c.l.s4 1966171168
      %v3941 = vunpack.c.0.s8 %v3940
      %v3942 = vlaneseq
      %v3943 = vshrl.u32 %v3942, 7
      %v3944 = vsub.s32 %v3941, %v3943
      %v3945 = vrot.slane %v3917, %v3944
      %v3946 = vcombine.low %v3924, %v3931
      %v3947 = vcombine.low %v3938, %v3945
      %v3949 = vunpack.c.l.s4 1966171168
      %v3950 = vunpack.c.0.s8 %v3949
      %v3951 = vlaneseq
      %v3952 = vshrl.u32 %v3951, 7
      %v3953 = vsub.s32 %v3950, %v3952
      %v3954 = vrot.slane %v3946, %v3953
      %v3956 = vunpack.c.l.s4 1966171168
      %v3957 = vunpack.c.0.s8 %v3956
      %v3958 = vlaneseq
      %v3959 = vshrl.u32 %v3958, 7
      %v3960 = vsub.s32 %v3957, %v3959
      %v3961 = vrot.slane %v3947, %v3960
      %v3962 = vcombine.low %v3954, %v3961
      %v3963 = vcombine.low %v2415, %v2419
      %v3964 = vcombine.low %v2423, %v2427
      %v3965 = vcombine.low %v2431, %v2435
      %v3966 = vcombine.low %v2439, %v2443
      %v3968 = vunpack.c.l.s4 1966171168
      %v3969 = vunpack.c.0.s8 %v3968
      %v3970 = vlaneseq
      %v3971 = vshrl.u32 %v3970, 7
      %v3972 = vsub.s32 %v3969, %v3971
      %v3973 = vrot.slane %v3963, %v3972
      %v3975 = vunpack.c.l.s4 1966171168
      %v3976 = vunpack.c.0.s8 %v3975
      %v3977 = vlaneseq
      %v3978 = vshrl.u32 %v3977, 7
      %v3979 = vsub.s32 %v3976, %v3978
      %v3980 = vrot.slane %v3964, %v3979
      %v3982 = vunpack.c.l.s4 1966171168
      %v3983 = vunpack.c.0.s8 %v3982
      %v3984 = vlaneseq
      %v3985 = vshrl.u32 %v3984, 7
      %v3986 = vsub.s32 %v3983, %v3985
      %v3987 = vrot.slane %v3965, %v3986
      %v3989 = vunpack.c.l.s4 1966171168
      %v3990 = vunpack.c.0.s8 %v3989
      %v3991 = vlaneseq
      %v3992 = vshrl.u32 %v3991, 7
      %v3993 = vsub.s32 %v3990, %v3992
      %v3994 = vrot.slane %v3966, %v3993
      %v3995 = vcombine.low %v3973, %v3980
      %v3996 = vcombine.low %v3987, %v3994
      %v3998 = vunpack.c.l.s4 1966171168
      %v3999 = vunpack.c.0.s8 %v3998
      %v4000 = vlaneseq
      %v4001 = vshrl.u32 %v4000, 7
      %v4002 = vsub.s32 %v3999, %v4001
      %v4003 = vrot.slane %v3995, %v4002
      %v4005 = vunpack.c.l.s4 1966171168
      %v4006 = vunpack.c.0.s8 %v4005
      %v4007 = vlaneseq
      %v4008 = vshrl.u32 %v4007, 7
      %v4009 = vsub.s32 %v4006, %v4008
      %v4010 = vrot.slane %v3996, %v4009
      %v4011 = vcombine.low %v4003, %v4010
      %4012 = vset.pattern.permute.xlu0 0
      %4013 = vperm.xlu0 %4012, %v2492
      %v4014 = vpop.permute.xlu0 %4013
      %4015 = vset.pattern.permute.xlu0 0
      %4016 = vperm.xlu0 %4015, %v2541
      %v4017 = vpop.permute.xlu0 %4016
      %4018 = vset.pattern.permute.xlu0 0
      %4019 = vperm.xlu0 %4018, %v2590
      %v4020 = vpop.permute.xlu0 %4019
      %4021 = vset.pattern.permute.xlu0 0
      %4022 = vperm.xlu0 %4021, %v2639
      %v4023 = vpop.permute.xlu0 %4022
      %4024 = vset.pattern.permute.xlu0 0
      %4025 = vperm.xlu0 %4024, %v2688
      %v4026 = vpop.permute.xlu0 %4025
      %4027 = vset.pattern.permute.xlu0 0
      %4028 = vperm.xlu0 %4027, %v2737
      %v4029 = vpop.permute.xlu0 %4028
      %4030 = vset.pattern.permute.xlu0 0
      %4031 = vperm.xlu0 %4030, %v2786
      %v4032 = vpop.permute.xlu0 %4031
      %4033 = vset.pattern.permute.xlu0 0
      %4034 = vperm.xlu0 %4033, %v2835
      %v4035 = vpop.permute.xlu0 %4034
      %4036 = vset.pattern.permute.xlu0 0
      %4037 = vperm.xlu0 %4036, %v2884
      %v4038 = vpop.permute.xlu0 %4037
      %4039 = vset.pattern.permute.xlu0 0
      %4040 = vperm.xlu0 %4039, %v2933
      %v4041 = vpop.permute.xlu0 %4040
      %4042 = vset.pattern.permute.xlu0 0
      %4043 = vperm.xlu0 %4042, %v2982
      %v4044 = vpop.permute.xlu0 %4043
      %4045 = vset.pattern.permute.xlu0 0
      %4046 = vperm.xlu0 %4045, %v3031
      %v4047 = vpop.permute.xlu0 %4046
      %4048 = vset.pattern.permute.xlu0 0
      %4049 = vperm.xlu0 %4048, %v3080
      %v4050 = vpop.permute.xlu0 %4049
      %4051 = vset.pattern.permute.xlu0 0
      %4052 = vperm.xlu0 %4051, %v3129
      %v4053 = vpop.permute.xlu0 %4052
      %4054 = vset.pattern.permute.xlu0 0
      %4055 = vperm.xlu0 %4054, %v3178
      %v4056 = vpop.permute.xlu0 %4055
      %4057 = vset.pattern.permute.xlu0 0
      %4058 = vperm.xlu0 %4057, %v3227
      %v4059 = vpop.permute.xlu0 %4058
      %4060 = vset.pattern.permute.xlu0 0
      %4061 = vperm.xlu0 %4060, %v3276
      %v4062 = vpop.permute.xlu0 %4061
      %4063 = vset.pattern.permute.xlu0 0
      %4064 = vperm.xlu0 %4063, %v3325
      %v4065 = vpop.permute.xlu0 %4064
      %4066 = vset.pattern.permute.xlu0 0
      %4067 = vperm.xlu0 %4066, %v3374
      %v4068 = vpop.permute.xlu0 %4067
      %4069 = vset.pattern.permute.xlu0 0
      %4070 = vperm.xlu0 %4069, %v3423
      %v4071 = vpop.permute.xlu0 %4070
      %4072 = vset.pattern.permute.xlu0 0
      %4073 = vperm.xlu0 %4072, %v3472
      %v4074 = vpop.permute.xlu0 %4073
      %4075 = vset.pattern.permute.xlu0 0
      %4076 = vperm.xlu0 %4075, %v3521
      %v4077 = vpop.permute.xlu0 %4076
      %4078 = vset.pattern.permute.xlu0 0
      %4079 = vperm.xlu0 %4078, %v3570
      %v4080 = vpop.permute.xlu0 %4079
      %4081 = vset.pattern.permute.xlu0 0
      %4082 = vperm.xlu0 %4081, %v3619
      %v4083 = vpop.permute.xlu0 %4082
      %4084 = vset.pattern.permute.xlu0 0
      %4085 = vperm.xlu0 %4084, %v3668
      %v4086 = vpop.permute.xlu0 %4085
      %4087 = vset.pattern.permute.xlu0 0
      %4088 = vperm.xlu0 %4087, %v3717
      %v4089 = vpop.permute.xlu0 %4088
      %4090 = vset.pattern.permute.xlu0 0
      %4091 = vperm.xlu0 %4090, %v3766
      %v4092 = vpop.permute.xlu0 %4091
      %4093 = vset.pattern.permute.xlu0 0
      %4094 = vperm.xlu0 %4093, %v3815
      %v4095 = vpop.permute.xlu0 %4094
      %4096 = vset.pattern.permute.xlu0 0
      %4097 = vperm.xlu0 %4096, %v3864
      %v4098 = vpop.permute.xlu0 %4097
      %4099 = vset.pattern.permute.xlu0 0
      %4100 = vperm.xlu0 %4099, %v3913
      %v4101 = vpop.permute.xlu0 %4100
      %4102 = vset.pattern.permute.xlu0 0
      %4103 = vperm.xlu0 %4102, %v3962
      %v4104 = vpop.permute.xlu0 %4103
      %4105 = vset.pattern.permute.xlu0 0
      %4106 = vperm.xlu0 %4105, %v4011
      %v4107 = vpop.permute.xlu0 %4106
      %v4108 = vlaneseq
      %v4109 = vshrl.u32 %v4108, 7
      %v4110 = vsub.s32 %v713, %v4109
      %v4111 = vrot.slane %v4014, %v4110
      %v4112 = vadd.s32 %v713, 4294967288
      %v4113 = vlaneseq
      %v4114 = vshrl.u32 %v4113, 7
      %v4115 = vsub.s32 %v4112, %v4114
      %v4116 = vrot.slane %v4017, %v4115
      %vm4117 = vcmask 130112
      %v4118 = vsel %vm4117, %v4116, %v4111
      %v4119 = vadd.s32 %v713, 4294967280
      %v4120 = vlaneseq
      %v4121 = vshrl.u32 %v4120, 7
      %v4122 = vsub.s32 %v4119, %v4121
      %v4123 = vrot.slane %v4020, %v4122
      %vm4124 = vcmask 195712
      %v4125 = vsel %vm4124, %v4123, %v4118
      %v4126 = vadd.s32 %v713, 4294967272
      %v4127 = vlaneseq
      %v4128 = vshrl.u32 %v4127, 7
      %v4129 = vsub.s32 %v4126, %v4128
      %v4130 = vrot.slane %v4023, %v4129
      %vm4131 = vcmask 261312
      %v4132 = vsel %vm4131, %v4130, %v4125
      %v4133 = vadd.s32 %v713, 4294967264
      %v4134 = vlaneseq
      %v4135 = vshrl.u32 %v4134, 7
      %v4136 = vsub.s32 %v4133, %v4135
      %v4137 = vrot.slane %v4026, %v4136
      %vm4138 = vcmask 326912
      %v4139 = vsel %vm4138, %v4137, %v4132
      %v4140 = vadd.s32 %v713, 4294967256
      %v4141 = vlaneseq
      %v4142 = vshrl.u32 %v4141, 7
      %v4143 = vsub.s32 %v4140, %v4142
      %v4144 = vrot.slane %v4029, %v4143
      %vm4145 = vcmask 392512
      %v4146 = vsel %vm4145, %v4144, %v4139
      %v4147 = vadd.s32 %v713, 4294967248
      %v4148 = vlaneseq
      %v4149 = vshrl.u32 %v4148, 7
      %v4150 = vsub.s32 %v4147, %v4149
      %v4151 = vrot.slane %v4032, %v4150
      %vm4152 = vcmask 458112
      %v4153 = vsel %vm4152, %v4151, %v4146
      %v4154 = vadd.s32 %v713, 4294967240
      %v4155 = vlaneseq
      %v4156 = vshrl.u32 %v4155, 7
      %v4157 = vsub.s32 %v4154, %v4156
      %v4158 = vrot.slane %v4035, %v4157
      %vm4159 = vcmask 523712
      %v4160 = vsel %vm4159, %v4158, %v4153
      %v4161 = vadd.s32 %v713, 4294967232
      %v4162 = vlaneseq
      %v4163 = vshrl.u32 %v4162, 7
      %v4164 = vsub.s32 %v4161, %v4163
      %v4165 = vrot.slane %v4038, %v4164
      %vm4166 = vcmask 589312
      %v4167 = vsel %vm4166, %v4165, %v4160
      %v4168 = vadd.s32 %v713, 4294967224
      %v4169 = vlaneseq
      %v4170 = vshrl.u32 %v4169, 7
      %v4171 = vsub.s32 %v4168, %v4170
      %v4172 = vrot.slane %v4041, %v4171
      %vm4173 = vcmask 654912
      %v4174 = vsel %vm4173, %v4172, %v4167
      %v4175 = vadd.s32 %v713, 4294967216
      %v4176 = vlaneseq
      %v4177 = vshrl.u32 %v4176, 7
      %v4178 = vsub.s32 %v4175, %v4177
      %v4179 = vrot.slane %v4044, %v4178
      %vm4180 = vcmask 720512
      %v4181 = vsel %vm4180, %v4179, %v4174
      %v4182 = vadd.s32 %v713, 4294967208
      %v4183 = vlaneseq
      %v4184 = vshrl.u32 %v4183, 7
      %v4185 = vsub.s32 %v4182, %v4184
      %v4186 = vrot.slane %v4047, %v4185
      %vm4187 = vcmask 786112
      %v4188 = vsel %vm4187, %v4186, %v4181
      %v4189 = vadd.s32 %v713, 4294967200
      %v4190 = vlaneseq
      %v4191 = vshrl.u32 %v4190, 7
      %v4192 = vsub.s32 %v4189, %v4191
      %v4193 = vrot.slane %v4050, %v4192
      %vm4194 = vcmask 851712
      %v4195 = vsel %vm4194, %v4193, %v4188
      %v4196 = vadd.s32 %v713, 4294967192
      %v4197 = vlaneseq
      %v4198 = vshrl.u32 %v4197, 7
      %v4199 = vsub.s32 %v4196, %v4198
      %v4200 = vrot.slane %v4053, %v4199
      %vm4201 = vcmask 917312
      %v4202 = vsel %vm4201, %v4200, %v4195
      %v4203 = vadd.s32 %v713, 4294967184
      %v4204 = vlaneseq
      %v4205 = vshrl.u32 %v4204, 7
      %v4206 = vsub.s32 %v4203, %v4205
      %v4207 = vrot.slane %v4056, %v4206
      %vm4208 = vcmask 982912
      %v4209 = vsel %vm4208, %v4207, %v4202
      %v4210 = vadd.s32 %v713, 4294967176
      %v4211 = vlaneseq
      %v4212 = vshrl.u32 %v4211, 7
      %v4213 = vsub.s32 %v4210, %v4212
      %v4214 = vrot.slane %v4059, %v4213
      %vm4215 = vcmask 1048512
      %v4216 = vsel %vm4215, %v4214, %v4209
      %v4217 = vlaneseq
      %v4218 = vshrl.u32 %v4217, 7
      %v4219 = vsub.s32 %v713, %v4218
      %v4220 = vrot.slane %v4062, %v4219
      %v4221 = vlaneseq
      %v4222 = vshrl.u32 %v4221, 7
      %v4223 = vsub.s32 %v4112, %v4222
      %v4224 = vrot.slane %v4065, %v4223
      %v4225 = vsel %vm4117, %v4224, %v4220
      %v4226 = vlaneseq
      %v4227 = vshrl.u32 %v4226, 7
      %v4228 = vsub.s32 %v4119, %v4227
      %v4229 = vrot.slane %v4068, %v4228
      %v4230 = vsel %vm4124, %v4229, %v4225
      %v4231 = vlaneseq
      %v4232 = vshrl.u32 %v4231, 7
      %v4233 = vsub.s32 %v4126, %v4232
      %v4234 = vrot.slane %v4071, %v4233
      %v4235 = vsel %vm4131, %v4234, %v4230
      %v4236 = vlaneseq
      %v4237 = vshrl.u32 %v4236, 7
      %v4238 = vsub.s32 %v4133, %v4237
      %v4239 = vrot.slane %v4074, %v4238
      %v4240 = vsel %vm4138, %v4239, %v4235
      %v4241 = vlaneseq
      %v4242 = vshrl.u32 %v4241, 7
      %v4243 = vsub.s32 %v4140, %v4242
      %v4244 = vrot.slane %v4077, %v4243
      %v4245 = vsel %vm4145, %v4244, %v4240
      %v4246 = vlaneseq
      %v4247 = vshrl.u32 %v4246, 7
      %v4248 = vsub.s32 %v4147, %v4247
      %v4249 = vrot.slane %v4080, %v4248
      %v4250 = vsel %vm4152, %v4249, %v4245
      %v4251 = vlaneseq
      %v4252 = vshrl.u32 %v4251, 7
      %v4253 = vsub.s32 %v4154, %v4252
      %v4254 = vrot.slane %v4083, %v4253
      %v4255 = vsel %vm4159, %v4254, %v4250
      %v4256 = vlaneseq
      %v4257 = vshrl.u32 %v4256, 7
      %v4258 = vsub.s32 %v4161, %v4257
      %v4259 = vrot.slane %v4086, %v4258
      %v4260 = vsel %vm4166, %v4259, %v4255
      %v4261 = vlaneseq
      %v4262 = vshrl.u32 %v4261, 7
      %v4263 = vsub.s32 %v4168, %v4262
      %v4264 = vrot.slane %v4089, %v4263
      %v4265 = vsel %vm4173, %v4264, %v4260
      %v4266 = vlaneseq
      %v4267 = vshrl.u32 %v4266, 7
      %v4268 = vsub.s32 %v4175, %v4267
      %v4269 = vrot.slane %v4092, %v4268
      %v4270 = vsel %vm4180, %v4269, %v4265
      %v4271 = vlaneseq
      %v4272 = vshrl.u32 %v4271, 7
      %v4273 = vsub.s32 %v4182, %v4272
      %v4274 = vrot.slane %v4095, %v4273
      %v4275 = vsel %vm4187, %v4274, %v4270
      %v4276 = vlaneseq
      %v4277 = vshrl.u32 %v4276, 7
      %v4278 = vsub.s32 %v4189, %v4277
      %v4279 = vrot.slane %v4098, %v4278
      %v4280 = vsel %vm4194, %v4279, %v4275
      %v4281 = vlaneseq
      %v4282 = vshrl.u32 %v4281, 7
      %v4283 = vsub.s32 %v4196, %v4282
      %v4284 = vrot.slane %v4101, %v4283
      %v4285 = vsel %vm4201, %v4284, %v4280
      %v4286 = vlaneseq
      %v4287 = vshrl.u32 %v4286, 7
      %v4288 = vsub.s32 %v4203, %v4287
      %v4289 = vrot.slane %v4104, %v4288
      %v4290 = vsel %vm4208, %v4289, %v4285
      %v4291 = vlaneseq
      %v4292 = vshrl.u32 %v4291, 7
      %v4293 = vsub.s32 %v4210, %v4292
      %v4294 = vrot.slane %v4107, %v4293
      %v4295 = vsel %vm4215, %v4294, %v4290
      %v4296 = vcombine.low %v4216, %v4295
      %v4298 = vunpack.c.l.s4 1966171168
      %v4299 = vunpack.c.0.s8 %v4298
      %v4300 = vlaneseq
      %v4301 = vshrl.u32 %v4300, 7
      %v4302 = vsub.s32 %v4299, %v4301
      %v4303 = vrot.slane %v4296, %v4302
      %v4305 = vunpack.c.l.s4 1966171168
      %v4306 = vunpack.c.0.s8 %v4305
      %v4307 = vlaneseq
      %v4308 = vshrl.u32 %v4307, 7
      %v4309 = vsub.s32 %v4306, %v4308
      %v4310 = vrot.slane %v4303, %v4309
      %v4311 = vlaneseq
      %vm4312 = vcmp.ge.s32.totalorder %v4311, 0
      %vm4313 = vcmp.lt.s32.totalorder %v4311, 256
      %vm4314 = vmand %vm4312, %vm4313
      %4315 = vst.msk [vmem:[%s244] sm:$0x3] %vm4314, %v4310
      %v4316 = vsub.f32 %v1230, %v251
      %v4317 = vsub.f32 %v1235, %v252
      %v4318 = vsub.f32 %v1240, %v253
      %v4319 = vsub.f32 %v1245, %v254
      %v4320 = vsub.f32 %v1250, %v255
      %v4321 = vsub.f32 %v1255, %v256
      %v4322 = vsub.f32 %v1260, %v257
      %v4323 = vsub.f32 %v1265, %v258
      %v4324 = vsub.f32 %v1270, %v259
      %v4325 = vsub.f32 %v1275, %v260
      %v4326 = vsub.f32 %v1280, %v261
      %v4327 = vsub.f32 %v1285, %v262
      %v4328 = vsub.f32 %v1290, %v263
      %v4329 = vsub.f32 %v1295, %v264
      %v4330 = vsub.f32 %v1300, %v265
      %v4331 = vsub.f32 %v1305, %v266
      %v4332 = vsub.f32 %v1310, %v267
      %v4333 = vsub.f32 %v1315, %v268
      %v4334 = vsub.f32 %v1320, %v269
      %v4335 = vsub.f32 %v1325, %v270
      %v4336 = vsub.f32 %v1330, %v271
      %v4337 = vsub.f32 %v1335, %v272
      %v4338 = vsub.f32 %v1340, %v273
      %v4339 = vsub.f32 %v1345, %v274
      %v4340 = vsub.f32 %v1350, %v275
      %v4341 = vsub.f32 %v1355, %v276
      %v4342 = vsub.f32 %v1360, %v277
      %v4343 = vsub.f32 %v1365, %v278
      %v4344 = vsub.f32 %v1370, %v279
      %v4345 = vsub.f32 %v1375, %v280
      %v4346 = vsub.f32 %v1380, %v281
      %v4347 = vsub.f32 %v1385, %v282
      %v4348 = vmul.f32 %v4316, %v4316
      %v4349 = vmul.f32 %v4317, %v4317
      %v4350 = vmul.f32 %v4318, %v4318
      %v4351 = vmul.f32 %v4319, %v4319
      %v4352 = vmul.f32 %v4320, %v4320
      %v4353 = vmul.f32 %v4321, %v4321
      %v4354 = vmul.f32 %v4322, %v4322
      %v4355 = vmul.f32 %v4323, %v4323
      %v4356 = vmul.f32 %v4324, %v4324
      %v4357 = vmul.f32 %v4325, %v4325
      %v4358 = vmul.f32 %v4326, %v4326
      %v4359 = vmul.f32 %v4327, %v4327
      %v4360 = vmul.f32 %v4328, %v4328
      %v4361 = vmul.f32 %v4329, %v4329
      %v4362 = vmul.f32 %v4330, %v4330
      %v4363 = vmul.f32 %v4331, %v4331
      %v4364 = vmul.f32 %v4332, %v4332
      %v4365 = vmul.f32 %v4333, %v4333
      %v4366 = vmul.f32 %v4334, %v4334
      %v4367 = vmul.f32 %v4335, %v4335
      %v4368 = vmul.f32 %v4336, %v4336
      %v4369 = vmul.f32 %v4337, %v4337
      %v4370 = vmul.f32 %v4338, %v4338
      %v4371 = vmul.f32 %v4339, %v4339
      %v4372 = vmul.f32 %v4340, %v4340
      %v4373 = vmul.f32 %v4341, %v4341
      %v4374 = vmul.f32 %v4342, %v4342
      %v4375 = vmul.f32 %v4343, %v4343
      %v4376 = vmul.f32 %v4344, %v4344
      %v4377 = vmul.f32 %v4345, %v4345
      %v4378 = vmul.f32 %v4346, %v4346
      %v4379 = vmul.f32 %v4347, %v4347
      %4380 = vadd.xlane.f32.xlu0 %v4348
      %v4381 = vpop.xlane.xlu0 %4380
      %4382 = vadd.xlane.f32.xlu0 %v4349
      %v4383 = vpop.xlane.xlu0 %4382
      %4384 = vadd.xlane.f32.xlu0 %v4350
      %v4385 = vpop.xlane.xlu0 %4384
      %4386 = vadd.xlane.f32.xlu0 %v4351
      %v4387 = vpop.xlane.xlu0 %4386
      %4388 = vadd.xlane.f32.xlu0 %v4352
      %v4389 = vpop.xlane.xlu0 %4388
      %4390 = vadd.xlane.f32.xlu0 %v4353
      %v4391 = vpop.xlane.xlu0 %4390
      %4392 = vadd.xlane.f32.xlu0 %v4354
      %v4393 = vpop.xlane.xlu0 %4392
      %4394 = vadd.xlane.f32.xlu0 %v4355
      %v4395 = vpop.xlane.xlu0 %4394
      %4396 = vadd.xlane.f32.xlu0 %v4356
      %v4397 = vpop.xlane.xlu0 %4396
      %4398 = vadd.xlane.f32.xlu0 %v4357
      %v4399 = vpop.xlane.xlu0 %4398
      %4400 = vadd.xlane.f32.xlu0 %v4358
      %v4401 = vpop.xlane.xlu0 %4400
      %4402 = vadd.xlane.f32.xlu0 %v4359
      %v4403 = vpop.xlane.xlu0 %4402
      %4404 = vadd.xlane.f32.xlu0 %v4360
      %v4405 = vpop.xlane.xlu0 %4404
      %4406 = vadd.xlane.f32.xlu0 %v4361
      %v4407 = vpop.xlane.xlu0 %4406
      %4408 = vadd.xlane.f32.xlu0 %v4362
      %v4409 = vpop.xlane.xlu0 %4408
      %4410 = vadd.xlane.f32.xlu0 %v4363
      %v4411 = vpop.xlane.xlu0 %4410
      %4412 = vadd.xlane.f32.xlu0 %v4364
      %v4413 = vpop.xlane.xlu0 %4412
      %4414 = vadd.xlane.f32.xlu0 %v4365
      %v4415 = vpop.xlane.xlu0 %4414
      %4416 = vadd.xlane.f32.xlu0 %v4366
      %v4417 = vpop.xlane.xlu0 %4416
      %4418 = vadd.xlane.f32.xlu0 %v4367
      %v4419 = vpop.xlane.xlu0 %4418
      %4420 = vadd.xlane.f32.xlu0 %v4368
      %v4421 = vpop.xlane.xlu0 %4420
      %4422 = vadd.xlane.f32.xlu0 %v4369
      %v4423 = vpop.xlane.xlu0 %4422
      %4424 = vadd.xlane.f32.xlu0 %v4370
      %v4425 = vpop.xlane.xlu0 %4424
      %4426 = vadd.xlane.f32.xlu0 %v4371
      %v4427 = vpop.xlane.xlu0 %4426
      %4428 = vadd.xlane.f32.xlu0 %v4372
      %v4429 = vpop.xlane.xlu0 %4428
      %4430 = vadd.xlane.f32.xlu0 %v4373
      %v4431 = vpop.xlane.xlu0 %4430
      %4432 = vadd.xlane.f32.xlu0 %v4374
      %v4433 = vpop.xlane.xlu0 %4432
      %4434 = vadd.xlane.f32.xlu0 %v4375
      %v4435 = vpop.xlane.xlu0 %4434
      %4436 = vadd.xlane.f32.xlu0 %v4376
      %v4437 = vpop.xlane.xlu0 %4436
      %4438 = vadd.xlane.f32.xlu0 %v4377
      %v4439 = vpop.xlane.xlu0 %4438
      %4440 = vadd.xlane.f32.xlu0 %v4378
      %v4441 = vpop.xlane.xlu0 %4440
      %4442 = vadd.xlane.f32.xlu0 %v4379
      %v4443 = vpop.xlane.xlu0 %4442
      %v4476 = vlaneseq
      %v4477 = vshrl.u32 %v4476, 7
      %v4478 = vsub.s32 0, %v4477
      %v4479 = vrot.slane %v4381, %v4478
      %v4480 = vlaneseq
      %v4481 = vshrl.u32 %v4480, 7
      %v4482 = vsub.s32 1, %v4481
      %v4483 = vrot.slane %v4381, %v4482
      %v4484 = vlaneseq
      %v4485 = vshrl.u32 %v4484, 7
      %v4486 = vsub.s32 2, %v4485
      %v4487 = vrot.slane %v4381, %v4486
      %v4488 = vlaneseq
      %v4489 = vshrl.u32 %v4488, 7
      %v4490 = vsub.s32 3, %v4489
      %v4491 = vrot.slane %v4381, %v4490
      %v4492 = vlaneseq
      %v4493 = vshrl.u32 %v4492, 7
      %v4494 = vsub.s32 4, %v4493
      %v4495 = vrot.slane %v4381, %v4494
      %v4496 = vlaneseq
      %v4497 = vshrl.u32 %v4496, 7
      %v4498 = vsub.s32 5, %v4497
      %v4499 = vrot.slane %v4381, %v4498
      %v4500 = vlaneseq
      %v4501 = vshrl.u32 %v4500, 7
      %v4502 = vsub.s32 6, %v4501
      %v4503 = vrot.slane %v4381, %v4502
      %v4504 = vlaneseq
      %v4505 = vshrl.u32 %v4504, 7
      %v4506 = vsub.s32 7, %v4505
      %v4507 = vrot.slane %v4381, %v4506
      %v4508 = vlaneseq
      %v4509 = vshrl.u32 %v4508, 7
      %v4510 = vsub.s32 0, %v4509
      %v4511 = vrot.slane %v4383, %v4510
      %v4512 = vlaneseq
      %v4513 = vshrl.u32 %v4512, 7
      %v4514 = vsub.s32 1, %v4513
      %v4515 = vrot.slane %v4383, %v4514
      %v4516 = vlaneseq
      %v4517 = vshrl.u32 %v4516, 7
      %v4518 = vsub.s32 2, %v4517
      %v4519 = vrot.slane %v4383, %v4518
      %v4520 = vlaneseq
      %v4521 = vshrl.u32 %v4520, 7
      %v4522 = vsub.s32 3, %v4521
      %v4523 = vrot.slane %v4383, %v4522
      %v4524 = vlaneseq
      %v4525 = vshrl.u32 %v4524, 7
      %v4526 = vsub.s32 4, %v4525
      %v4527 = vrot.slane %v4383, %v4526
      %v4528 = vlaneseq
      %v4529 = vshrl.u32 %v4528, 7
      %v4530 = vsub.s32 5, %v4529
      %v4531 = vrot.slane %v4383, %v4530
      %v4532 = vlaneseq
      %v4533 = vshrl.u32 %v4532, 7
      %v4534 = vsub.s32 6, %v4533
      %v4535 = vrot.slane %v4383, %v4534
      %v4536 = vlaneseq
      %v4537 = vshrl.u32 %v4536, 7
      %v4538 = vsub.s32 7, %v4537
      %v4539 = vrot.slane %v4383, %v4538
      %v4540 = vlaneseq
      %v4541 = vshrl.u32 %v4540, 7
      %v4542 = vsub.s32 0, %v4541
      %v4543 = vrot.slane %v4385, %v4542
      %v4544 = vlaneseq
      %v4545 = vshrl.u32 %v4544, 7
      %v4546 = vsub.s32 1, %v4545
      %v4547 = vrot.slane %v4385, %v4546
      %v4548 = vlaneseq
      %v4549 = vshrl.u32 %v4548, 7
      %v4550 = vsub.s32 2, %v4549
      %v4551 = vrot.slane %v4385, %v4550
      %v4552 = vlaneseq
      %v4553 = vshrl.u32 %v4552, 7
      %v4554 = vsub.s32 3, %v4553
      %v4555 = vrot.slane %v4385, %v4554
      %v4556 = vlaneseq
      %v4557 = vshrl.u32 %v4556, 7
      %v4558 = vsub.s32 4, %v4557
      %v4559 = vrot.slane %v4385, %v4558
      %v4560 = vlaneseq
      %v4561 = vshrl.u32 %v4560, 7
      %v4562 = vsub.s32 5, %v4561
      %v4563 = vrot.slane %v4385, %v4562
      %v4564 = vlaneseq
      %v4565 = vshrl.u32 %v4564, 7
      %v4566 = vsub.s32 6, %v4565
      %v4567 = vrot.slane %v4385, %v4566
      %v4568 = vlaneseq
      %v4569 = vshrl.u32 %v4568, 7
      %v4570 = vsub.s32 7, %v4569
      %v4571 = vrot.slane %v4385, %v4570
      %v4572 = vlaneseq
      %v4573 = vshrl.u32 %v4572, 7
      %v4574 = vsub.s32 0, %v4573
      %v4575 = vrot.slane %v4387, %v4574
      %v4576 = vlaneseq
      %v4577 = vshrl.u32 %v4576, 7
      %v4578 = vsub.s32 1, %v4577
      %v4579 = vrot.slane %v4387, %v4578
      %v4580 = vlaneseq
      %v4581 = vshrl.u32 %v4580, 7
      %v4582 = vsub.s32 2, %v4581
      %v4583 = vrot.slane %v4387, %v4582
      %v4584 = vlaneseq
      %v4585 = vshrl.u32 %v4584, 7
      %v4586 = vsub.s32 3, %v4585
      %v4587 = vrot.slane %v4387, %v4586
      %v4588 = vlaneseq
      %v4589 = vshrl.u32 %v4588, 7
      %v4590 = vsub.s32 4, %v4589
      %v4591 = vrot.slane %v4387, %v4590
      %v4592 = vlaneseq
      %v4593 = vshrl.u32 %v4592, 7
      %v4594 = vsub.s32 5, %v4593
      %v4595 = vrot.slane %v4387, %v4594
      %v4596 = vlaneseq
      %v4597 = vshrl.u32 %v4596, 7
      %v4598 = vsub.s32 6, %v4597
      %v4599 = vrot.slane %v4387, %v4598
      %v4600 = vlaneseq
      %v4601 = vshrl.u32 %v4600, 7
      %v4602 = vsub.s32 7, %v4601
      %v4603 = vrot.slane %v4387, %v4602
      %v4604 = vlaneseq
      %v4605 = vshrl.u32 %v4604, 7
      %v4606 = vsub.s32 0, %v4605
      %v4607 = vrot.slane %v4389, %v4606
      %v4608 = vlaneseq
      %v4609 = vshrl.u32 %v4608, 7
      %v4610 = vsub.s32 1, %v4609
      %v4611 = vrot.slane %v4389, %v4610
      %v4612 = vlaneseq
      %v4613 = vshrl.u32 %v4612, 7
      %v4614 = vsub.s32 2, %v4613
      %v4615 = vrot.slane %v4389, %v4614
      %v4616 = vlaneseq
      %v4617 = vshrl.u32 %v4616, 7
      %v4618 = vsub.s32 3, %v4617
      %v4619 = vrot.slane %v4389, %v4618
      %v4620 = vlaneseq
      %v4621 = vshrl.u32 %v4620, 7
      %v4622 = vsub.s32 4, %v4621
      %v4623 = vrot.slane %v4389, %v4622
      %v4624 = vlaneseq
      %v4625 = vshrl.u32 %v4624, 7
      %v4626 = vsub.s32 5, %v4625
      %v4627 = vrot.slane %v4389, %v4626
      %v4628 = vlaneseq
      %v4629 = vshrl.u32 %v4628, 7
      %v4630 = vsub.s32 6, %v4629
      %v4631 = vrot.slane %v4389, %v4630
      %v4632 = vlaneseq
      %v4633 = vshrl.u32 %v4632, 7
      %v4634 = vsub.s32 7, %v4633
      %v4635 = vrot.slane %v4389, %v4634
      %v4636 = vlaneseq
      %v4637 = vshrl.u32 %v4636, 7
      %v4638 = vsub.s32 0, %v4637
      %v4639 = vrot.slane %v4391, %v4638
      %v4640 = vlaneseq
      %v4641 = vshrl.u32 %v4640, 7
      %v4642 = vsub.s32 1, %v4641
      %v4643 = vrot.slane %v4391, %v4642
      %v4644 = vlaneseq
      %v4645 = vshrl.u32 %v4644, 7
      %v4646 = vsub.s32 2, %v4645
      %v4647 = vrot.slane %v4391, %v4646
      %v4648 = vlaneseq
      %v4649 = vshrl.u32 %v4648, 7
      %v4650 = vsub.s32 3, %v4649
      %v4651 = vrot.slane %v4391, %v4650
      %v4652 = vlaneseq
      %v4653 = vshrl.u32 %v4652, 7
      %v4654 = vsub.s32 4, %v4653
      %v4655 = vrot.slane %v4391, %v4654
      %v4656 = vlaneseq
      %v4657 = vshrl.u32 %v4656, 7
      %v4658 = vsub.s32 5, %v4657
      %v4659 = vrot.slane %v4391, %v4658
      %v4660 = vlaneseq
      %v4661 = vshrl.u32 %v4660, 7
      %v4662 = vsub.s32 6, %v4661
      %v4663 = vrot.slane %v4391, %v4662
      %v4664 = vlaneseq
      %v4665 = vshrl.u32 %v4664, 7
      %v4666 = vsub.s32 7, %v4665
      %v4667 = vrot.slane %v4391, %v4666
      %v4668 = vlaneseq
      %v4669 = vshrl.u32 %v4668, 7
      %v4670 = vsub.s32 0, %v4669
      %v4671 = vrot.slane %v4393, %v4670
      %v4672 = vlaneseq
      %v4673 = vshrl.u32 %v4672, 7
      %v4674 = vsub.s32 1, %v4673
      %v4675 = vrot.slane %v4393, %v4674
      %v4676 = vlaneseq
      %v4677 = vshrl.u32 %v4676, 7
      %v4678 = vsub.s32 2, %v4677
      %v4679 = vrot.slane %v4393, %v4678
      %v4680 = vlaneseq
      %v4681 = vshrl.u32 %v4680, 7
      %v4682 = vsub.s32 3, %v4681
      %v4683 = vrot.slane %v4393, %v4682
      %v4684 = vlaneseq
      %v4685 = vshrl.u32 %v4684, 7
      %v4686 = vsub.s32 4, %v4685
      %v4687 = vrot.slane %v4393, %v4686
      %v4688 = vlaneseq
      %v4689 = vshrl.u32 %v4688, 7
      %v4690 = vsub.s32 5, %v4689
      %v4691 = vrot.slane %v4393, %v4690
      %v4692 = vlaneseq
      %v4693 = vshrl.u32 %v4692, 7
      %v4694 = vsub.s32 6, %v4693
      %v4695 = vrot.slane %v4393, %v4694
      %v4696 = vlaneseq
      %v4697 = vshrl.u32 %v4696, 7
      %v4698 = vsub.s32 7, %v4697
      %v4699 = vrot.slane %v4393, %v4698
      %v4700 = vlaneseq
      %v4701 = vshrl.u32 %v4700, 7
      %v4702 = vsub.s32 0, %v4701
      %v4703 = vrot.slane %v4395, %v4702
      %v4704 = vlaneseq
      %v4705 = vshrl.u32 %v4704, 7
      %v4706 = vsub.s32 1, %v4705
      %v4707 = vrot.slane %v4395, %v4706
      %v4708 = vlaneseq
      %v4709 = vshrl.u32 %v4708, 7
      %v4710 = vsub.s32 2, %v4709
      %v4711 = vrot.slane %v4395, %v4710
      %v4712 = vlaneseq
      %v4713 = vshrl.u32 %v4712, 7
      %v4714 = vsub.s32 3, %v4713
      %v4715 = vrot.slane %v4395, %v4714
      %v4716 = vlaneseq
      %v4717 = vshrl.u32 %v4716, 7
      %v4718 = vsub.s32 4, %v4717
      %v4719 = vrot.slane %v4395, %v4718
      %v4720 = vlaneseq
      %v4721 = vshrl.u32 %v4720, 7
      %v4722 = vsub.s32 5, %v4721
      %v4723 = vrot.slane %v4395, %v4722
      %v4724 = vlaneseq
      %v4725 = vshrl.u32 %v4724, 7
      %v4726 = vsub.s32 6, %v4725
      %v4727 = vrot.slane %v4395, %v4726
      %v4728 = vlaneseq
      %v4729 = vshrl.u32 %v4728, 7
      %v4730 = vsub.s32 7, %v4729
      %v4731 = vrot.slane %v4395, %v4730
      %v4732 = vlaneseq
      %v4733 = vshrl.u32 %v4732, 7
      %v4734 = vsub.s32 0, %v4733
      %v4735 = vrot.slane %v4397, %v4734
      %v4736 = vlaneseq
      %v4737 = vshrl.u32 %v4736, 7
      %v4738 = vsub.s32 1, %v4737
      %v4739 = vrot.slane %v4397, %v4738
      %v4740 = vlaneseq
      %v4741 = vshrl.u32 %v4740, 7
      %v4742 = vsub.s32 2, %v4741
      %v4743 = vrot.slane %v4397, %v4742
      %v4744 = vlaneseq
      %v4745 = vshrl.u32 %v4744, 7
      %v4746 = vsub.s32 3, %v4745
      %v4747 = vrot.slane %v4397, %v4746
      %v4748 = vlaneseq
      %v4749 = vshrl.u32 %v4748, 7
      %v4750 = vsub.s32 4, %v4749
      %v4751 = vrot.slane %v4397, %v4750
      %v4752 = vlaneseq
      %v4753 = vshrl.u32 %v4752, 7
      %v4754 = vsub.s32 5, %v4753
      %v4755 = vrot.slane %v4397, %v4754
      %v4756 = vlaneseq
      %v4757 = vshrl.u32 %v4756, 7
      %v4758 = vsub.s32 6, %v4757
      %v4759 = vrot.slane %v4397, %v4758
      %v4760 = vlaneseq
      %v4761 = vshrl.u32 %v4760, 7
      %v4762 = vsub.s32 7, %v4761
      %v4763 = vrot.slane %v4397, %v4762
      %v4764 = vlaneseq
      %v4765 = vshrl.u32 %v4764, 7
      %v4766 = vsub.s32 0, %v4765
      %v4767 = vrot.slane %v4399, %v4766
      %v4768 = vlaneseq
      %v4769 = vshrl.u32 %v4768, 7
      %v4770 = vsub.s32 1, %v4769
      %v4771 = vrot.slane %v4399, %v4770
      %v4772 = vlaneseq
      %v4773 = vshrl.u32 %v4772, 7
      %v4774 = vsub.s32 2, %v4773
      %v4775 = vrot.slane %v4399, %v4774
      %v4776 = vlaneseq
      %v4777 = vshrl.u32 %v4776, 7
      %v4778 = vsub.s32 3, %v4777
      %v4779 = vrot.slane %v4399, %v4778
      %v4780 = vlaneseq
      %v4781 = vshrl.u32 %v4780, 7
      %v4782 = vsub.s32 4, %v4781
      %v4783 = vrot.slane %v4399, %v4782
      %v4784 = vlaneseq
      %v4785 = vshrl.u32 %v4784, 7
      %v4786 = vsub.s32 5, %v4785
      %v4787 = vrot.slane %v4399, %v4786
      %v4788 = vlaneseq
      %v4789 = vshrl.u32 %v4788, 7
      %v4790 = vsub.s32 6, %v4789
      %v4791 = vrot.slane %v4399, %v4790
      %v4792 = vlaneseq
      %v4793 = vshrl.u32 %v4792, 7
      %v4794 = vsub.s32 7, %v4793
      %v4795 = vrot.slane %v4399, %v4794
      %v4796 = vlaneseq
      %v4797 = vshrl.u32 %v4796, 7
      %v4798 = vsub.s32 0, %v4797
      %v4799 = vrot.slane %v4401, %v4798
      %v4800 = vlaneseq
      %v4801 = vshrl.u32 %v4800, 7
      %v4802 = vsub.s32 1, %v4801
      %v4803 = vrot.slane %v4401, %v4802
      %v4804 = vlaneseq
      %v4805 = vshrl.u32 %v4804, 7
      %v4806 = vsub.s32 2, %v4805
      %v4807 = vrot.slane %v4401, %v4806
      %v4808 = vlaneseq
      %v4809 = vshrl.u32 %v4808, 7
      %v4810 = vsub.s32 3, %v4809
      %v4811 = vrot.slane %v4401, %v4810
      %v4812 = vlaneseq
      %v4813 = vshrl.u32 %v4812, 7
      %v4814 = vsub.s32 4, %v4813
      %v4815 = vrot.slane %v4401, %v4814
      %v4816 = vlaneseq
      %v4817 = vshrl.u32 %v4816, 7
      %v4818 = vsub.s32 5, %v4817
      %v4819 = vrot.slane %v4401, %v4818
      %v4820 = vlaneseq
      %v4821 = vshrl.u32 %v4820, 7
      %v4822 = vsub.s32 6, %v4821
      %v4823 = vrot.slane %v4401, %v4822
      %v4824 = vlaneseq
      %v4825 = vshrl.u32 %v4824, 7
      %v4826 = vsub.s32 7, %v4825
      %v4827 = vrot.slane %v4401, %v4826
      %v4828 = vlaneseq
      %v4829 = vshrl.u32 %v4828, 7
      %v4830 = vsub.s32 0, %v4829
      %v4831 = vrot.slane %v4403, %v4830
      %v4832 = vlaneseq
      %v4833 = vshrl.u32 %v4832, 7
      %v4834 = vsub.s32 1, %v4833
      %v4835 = vrot.slane %v4403, %v4834
      %v4836 = vlaneseq
      %v4837 = vshrl.u32 %v4836, 7
      %v4838 = vsub.s32 2, %v4837
      %v4839 = vrot.slane %v4403, %v4838
      %v4840 = vlaneseq
      %v4841 = vshrl.u32 %v4840, 7
      %v4842 = vsub.s32 3, %v4841
      %v4843 = vrot.slane %v4403, %v4842
      %v4844 = vlaneseq
      %v4845 = vshrl.u32 %v4844, 7
      %v4846 = vsub.s32 4, %v4845
      %v4847 = vrot.slane %v4403, %v4846
      %v4848 = vlaneseq
      %v4849 = vshrl.u32 %v4848, 7
      %v4850 = vsub.s32 5, %v4849
      %v4851 = vrot.slane %v4403, %v4850
      %v4852 = vlaneseq
      %v4853 = vshrl.u32 %v4852, 7
      %v4854 = vsub.s32 6, %v4853
      %v4855 = vrot.slane %v4403, %v4854
      %v4856 = vlaneseq
      %v4857 = vshrl.u32 %v4856, 7
      %v4858 = vsub.s32 7, %v4857
      %v4859 = vrot.slane %v4403, %v4858
      %v4860 = vlaneseq
      %v4861 = vshrl.u32 %v4860, 7
      %v4862 = vsub.s32 0, %v4861
      %v4863 = vrot.slane %v4405, %v4862
      %v4864 = vlaneseq
      %v4865 = vshrl.u32 %v4864, 7
      %v4866 = vsub.s32 1, %v4865
      %v4867 = vrot.slane %v4405, %v4866
      %v4868 = vlaneseq
      %v4869 = vshrl.u32 %v4868, 7
      %v4870 = vsub.s32 2, %v4869
      %v4871 = vrot.slane %v4405, %v4870
      %v4872 = vlaneseq
      %v4873 = vshrl.u32 %v4872, 7
      %v4874 = vsub.s32 3, %v4873
      %v4875 = vrot.slane %v4405, %v4874
      %v4876 = vlaneseq
      %v4877 = vshrl.u32 %v4876, 7
      %v4878 = vsub.s32 4, %v4877
      %v4879 = vrot.slane %v4405, %v4878
      %v4880 = vlaneseq
      %v4881 = vshrl.u32 %v4880, 7
      %v4882 = vsub.s32 5, %v4881
      %v4883 = vrot.slane %v4405, %v4882
      %v4884 = vlaneseq
      %v4885 = vshrl.u32 %v4884, 7
      %v4886 = vsub.s32 6, %v4885
      %v4887 = vrot.slane %v4405, %v4886
      %v4888 = vlaneseq
      %v4889 = vshrl.u32 %v4888, 7
      %v4890 = vsub.s32 7, %v4889
      %v4891 = vrot.slane %v4405, %v4890
      %v4892 = vlaneseq
      %v4893 = vshrl.u32 %v4892, 7
      %v4894 = vsub.s32 0, %v4893
      %v4895 = vrot.slane %v4407, %v4894
      %v4896 = vlaneseq
      %v4897 = vshrl.u32 %v4896, 7
      %v4898 = vsub.s32 1, %v4897
      %v4899 = vrot.slane %v4407, %v4898
      %v4900 = vlaneseq
      %v4901 = vshrl.u32 %v4900, 7
      %v4902 = vsub.s32 2, %v4901
      %v4903 = vrot.slane %v4407, %v4902
      %v4904 = vlaneseq
      %v4905 = vshrl.u32 %v4904, 7
      %v4906 = vsub.s32 3, %v4905
      %v4907 = vrot.slane %v4407, %v4906
      %v4908 = vlaneseq
      %v4909 = vshrl.u32 %v4908, 7
      %v4910 = vsub.s32 4, %v4909
      %v4911 = vrot.slane %v4407, %v4910
      %v4912 = vlaneseq
      %v4913 = vshrl.u32 %v4912, 7
      %v4914 = vsub.s32 5, %v4913
      %v4915 = vrot.slane %v4407, %v4914
      %v4916 = vlaneseq
      %v4917 = vshrl.u32 %v4916, 7
      %v4918 = vsub.s32 6, %v4917
      %v4919 = vrot.slane %v4407, %v4918
      %v4920 = vlaneseq
      %v4921 = vshrl.u32 %v4920, 7
      %v4922 = vsub.s32 7, %v4921
      %v4923 = vrot.slane %v4407, %v4922
      %v4924 = vlaneseq
      %v4925 = vshrl.u32 %v4924, 7
      %v4926 = vsub.s32 0, %v4925
      %v4927 = vrot.slane %v4409, %v4926
      %v4928 = vlaneseq
      %v4929 = vshrl.u32 %v4928, 7
      %v4930 = vsub.s32 1, %v4929
      %v4931 = vrot.slane %v4409, %v4930
      %v4932 = vlaneseq
      %v4933 = vshrl.u32 %v4932, 7
      %v4934 = vsub.s32 2, %v4933
      %v4935 = vrot.slane %v4409, %v4934
      %v4936 = vlaneseq
      %v4937 = vshrl.u32 %v4936, 7
      %v4938 = vsub.s32 3, %v4937
      %v4939 = vrot.slane %v4409, %v4938
      %v4940 = vlaneseq
      %v4941 = vshrl.u32 %v4940, 7
      %v4942 = vsub.s32 4, %v4941
      %v4943 = vrot.slane %v4409, %v4942
      %v4944 = vlaneseq
      %v4945 = vshrl.u32 %v4944, 7
      %v4946 = vsub.s32 5, %v4945
      %v4947 = vrot.slane %v4409, %v4946
      %v4948 = vlaneseq
      %v4949 = vshrl.u32 %v4948, 7
      %v4950 = vsub.s32 6, %v4949
      %v4951 = vrot.slane %v4409, %v4950
      %v4952 = vlaneseq
      %v4953 = vshrl.u32 %v4952, 7
      %v4954 = vsub.s32 7, %v4953
      %v4955 = vrot.slane %v4409, %v4954
      %v4956 = vlaneseq
      %v4957 = vshrl.u32 %v4956, 7
      %v4958 = vsub.s32 0, %v4957
      %v4959 = vrot.slane %v4411, %v4958
      %v4960 = vlaneseq
      %v4961 = vshrl.u32 %v4960, 7
      %v4962 = vsub.s32 1, %v4961
      %v4963 = vrot.slane %v4411, %v4962
      %v4964 = vlaneseq
      %v4965 = vshrl.u32 %v4964, 7
      %v4966 = vsub.s32 2, %v4965
      %v4967 = vrot.slane %v4411, %v4966
      %v4968 = vlaneseq
      %v4969 = vshrl.u32 %v4968, 7
      %v4970 = vsub.s32 3, %v4969
      %v4971 = vrot.slane %v4411, %v4970
      %v4972 = vlaneseq
      %v4973 = vshrl.u32 %v4972, 7
      %v4974 = vsub.s32 4, %v4973
      %v4975 = vrot.slane %v4411, %v4974
      %v4976 = vlaneseq
      %v4977 = vshrl.u32 %v4976, 7
      %v4978 = vsub.s32 5, %v4977
      %v4979 = vrot.slane %v4411, %v4978
      %v4980 = vlaneseq
      %v4981 = vshrl.u32 %v4980, 7
      %v4982 = vsub.s32 6, %v4981
      %v4983 = vrot.slane %v4411, %v4982
      %v4984 = vlaneseq
      %v4985 = vshrl.u32 %v4984, 7
      %v4986 = vsub.s32 7, %v4985
      %v4987 = vrot.slane %v4411, %v4986
      %v4988 = vlaneseq
      %v4989 = vshrl.u32 %v4988, 7
      %v4990 = vsub.s32 0, %v4989
      %v4991 = vrot.slane %v4413, %v4990
      %v4992 = vlaneseq
      %v4993 = vshrl.u32 %v4992, 7
      %v4994 = vsub.s32 1, %v4993
      %v4995 = vrot.slane %v4413, %v4994
      %v4996 = vlaneseq
      %v4997 = vshrl.u32 %v4996, 7
      %v4998 = vsub.s32 2, %v4997
      %v4999 = vrot.slane %v4413, %v4998
      %v5000 = vlaneseq
      %v5001 = vshrl.u32 %v5000, 7
      %v5002 = vsub.s32 3, %v5001
      %v5003 = vrot.slane %v4413, %v5002
      %v5004 = vlaneseq
      %v5005 = vshrl.u32 %v5004, 7
      %v5006 = vsub.s32 4, %v5005
      %v5007 = vrot.slane %v4413, %v5006
      %v5008 = vlaneseq
      %v5009 = vshrl.u32 %v5008, 7
      %v5010 = vsub.s32 5, %v5009
      %v5011 = vrot.slane %v4413, %v5010
      %v5012 = vlaneseq
      %v5013 = vshrl.u32 %v5012, 7
      %v5014 = vsub.s32 6, %v5013
      %v5015 = vrot.slane %v4413, %v5014
      %v5016 = vlaneseq
      %v5017 = vshrl.u32 %v5016, 7
      %v5018 = vsub.s32 7, %v5017
      %v5019 = vrot.slane %v4413, %v5018
      %v5020 = vlaneseq
      %v5021 = vshrl.u32 %v5020, 7
      %v5022 = vsub.s32 0, %v5021
      %v5023 = vrot.slane %v4415, %v5022
      %v5024 = vlaneseq
      %v5025 = vshrl.u32 %v5024, 7
      %v5026 = vsub.s32 1, %v5025
      %v5027 = vrot.slane %v4415, %v5026
      %v5028 = vlaneseq
      %v5029 = vshrl.u32 %v5028, 7
      %v5030 = vsub.s32 2, %v5029
      %v5031 = vrot.slane %v4415, %v5030
      %v5032 = vlaneseq
      %v5033 = vshrl.u32 %v5032, 7
      %v5034 = vsub.s32 3, %v5033
      %v5035 = vrot.slane %v4415, %v5034
      %v5036 = vlaneseq
      %v5037 = vshrl.u32 %v5036, 7
      %v5038 = vsub.s32 4, %v5037
      %v5039 = vrot.slane %v4415, %v5038
      %v5040 = vlaneseq
      %v5041 = vshrl.u32 %v5040, 7
      %v5042 = vsub.s32 5, %v5041
      %v5043 = vrot.slane %v4415, %v5042
      %v5044 = vlaneseq
      %v5045 = vshrl.u32 %v5044, 7
      %v5046 = vsub.s32 6, %v5045
      %v5047 = vrot.slane %v4415, %v5046
      %v5048 = vlaneseq
      %v5049 = vshrl.u32 %v5048, 7
      %v5050 = vsub.s32 7, %v5049
      %v5051 = vrot.slane %v4415, %v5050
      %v5052 = vlaneseq
      %v5053 = vshrl.u32 %v5052, 7
      %v5054 = vsub.s32 0, %v5053
      %v5055 = vrot.slane %v4417, %v5054
      %v5056 = vlaneseq
      %v5057 = vshrl.u32 %v5056, 7
      %v5058 = vsub.s32 1, %v5057
      %v5059 = vrot.slane %v4417, %v5058
      %v5060 = vlaneseq
      %v5061 = vshrl.u32 %v5060, 7
      %v5062 = vsub.s32 2, %v5061
      %v5063 = vrot.slane %v4417, %v5062
      %v5064 = vlaneseq
      %v5065 = vshrl.u32 %v5064, 7
      %v5066 = vsub.s32 3, %v5065
      %v5067 = vrot.slane %v4417, %v5066
      %v5068 = vlaneseq
      %v5069 = vshrl.u32 %v5068, 7
      %v5070 = vsub.s32 4, %v5069
      %v5071 = vrot.slane %v4417, %v5070
      %v5072 = vlaneseq
      %v5073 = vshrl.u32 %v5072, 7
      %v5074 = vsub.s32 5, %v5073
      %v5075 = vrot.slane %v4417, %v5074
      %v5076 = vlaneseq
      %v5077 = vshrl.u32 %v5076, 7
      %v5078 = vsub.s32 6, %v5077
      %v5079 = vrot.slane %v4417, %v5078
      %v5080 = vlaneseq
      %v5081 = vshrl.u32 %v5080, 7
      %v5082 = vsub.s32 7, %v5081
      %v5083 = vrot.slane %v4417, %v5082
      %v5084 = vlaneseq
      %v5085 = vshrl.u32 %v5084, 7
      %v5086 = vsub.s32 0, %v5085
      %v5087 = vrot.slane %v4419, %v5086
      %v5088 = vlaneseq
      %v5089 = vshrl.u32 %v5088, 7
      %v5090 = vsub.s32 1, %v5089
      %v5091 = vrot.slane %v4419, %v5090
      %v5092 = vlaneseq
      %v5093 = vshrl.u32 %v5092, 7
      %v5094 = vsub.s32 2, %v5093
      %v5095 = vrot.slane %v4419, %v5094
      %v5096 = vlaneseq
      %v5097 = vshrl.u32 %v5096, 7
      %v5098 = vsub.s32 3, %v5097
      %v5099 = vrot.slane %v4419, %v5098
      %v5100 = vlaneseq
      %v5101 = vshrl.u32 %v5100, 7
      %v5102 = vsub.s32 4, %v5101
      %v5103 = vrot.slane %v4419, %v5102
      %v5104 = vlaneseq
      %v5105 = vshrl.u32 %v5104, 7
      %v5106 = vsub.s32 5, %v5105
      %v5107 = vrot.slane %v4419, %v5106
      %v5108 = vlaneseq
      %v5109 = vshrl.u32 %v5108, 7
      %v5110 = vsub.s32 6, %v5109
      %v5111 = vrot.slane %v4419, %v5110
      %v5112 = vlaneseq
      %v5113 = vshrl.u32 %v5112, 7
      %v5114 = vsub.s32 7, %v5113
      %v5115 = vrot.slane %v4419, %v5114
      %v5116 = vlaneseq
      %v5117 = vshrl.u32 %v5116, 7
      %v5118 = vsub.s32 0, %v5117
      %v5119 = vrot.slane %v4421, %v5118
      %v5120 = vlaneseq
      %v5121 = vshrl.u32 %v5120, 7
      %v5122 = vsub.s32 1, %v5121
      %v5123 = vrot.slane %v4421, %v5122
      %v5124 = vlaneseq
      %v5125 = vshrl.u32 %v5124, 7
      %v5126 = vsub.s32 2, %v5125
      %v5127 = vrot.slane %v4421, %v5126
      %v5128 = vlaneseq
      %v5129 = vshrl.u32 %v5128, 7
      %v5130 = vsub.s32 3, %v5129
      %v5131 = vrot.slane %v4421, %v5130
      %v5132 = vlaneseq
      %v5133 = vshrl.u32 %v5132, 7
      %v5134 = vsub.s32 4, %v5133
      %v5135 = vrot.slane %v4421, %v5134
      %v5136 = vlaneseq
      %v5137 = vshrl.u32 %v5136, 7
      %v5138 = vsub.s32 5, %v5137
      %v5139 = vrot.slane %v4421, %v5138
      %v5140 = vlaneseq
      %v5141 = vshrl.u32 %v5140, 7
      %v5142 = vsub.s32 6, %v5141
      %v5143 = vrot.slane %v4421, %v5142
      %v5144 = vlaneseq
      %v5145 = vshrl.u32 %v5144, 7
      %v5146 = vsub.s32 7, %v5145
      %v5147 = vrot.slane %v4421, %v5146
      %v5148 = vlaneseq
      %v5149 = vshrl.u32 %v5148, 7
      %v5150 = vsub.s32 0, %v5149
      %v5151 = vrot.slane %v4423, %v5150
      %v5152 = vlaneseq
      %v5153 = vshrl.u32 %v5152, 7
      %v5154 = vsub.s32 1, %v5153
      %v5155 = vrot.slane %v4423, %v5154
      %v5156 = vlaneseq
      %v5157 = vshrl.u32 %v5156, 7
      %v5158 = vsub.s32 2, %v5157
      %v5159 = vrot.slane %v4423, %v5158
      %v5160 = vlaneseq
      %v5161 = vshrl.u32 %v5160, 7
      %v5162 = vsub.s32 3, %v5161
      %v5163 = vrot.slane %v4423, %v5162
      %v5164 = vlaneseq
      %v5165 = vshrl.u32 %v5164, 7
      %v5166 = vsub.s32 4, %v5165
      %v5167 = vrot.slane %v4423, %v5166
      %v5168 = vlaneseq
      %v5169 = vshrl.u32 %v5168, 7
      %v5170 = vsub.s32 5, %v5169
      %v5171 = vrot.slane %v4423, %v5170
      %v5172 = vlaneseq
      %v5173 = vshrl.u32 %v5172, 7
      %v5174 = vsub.s32 6, %v5173
      %v5175 = vrot.slane %v4423, %v5174
      %v5176 = vlaneseq
      %v5177 = vshrl.u32 %v5176, 7
      %v5178 = vsub.s32 7, %v5177
      %v5179 = vrot.slane %v4423, %v5178
      %v5180 = vlaneseq
      %v5181 = vshrl.u32 %v5180, 7
      %v5182 = vsub.s32 0, %v5181
      %v5183 = vrot.slane %v4425, %v5182
      %v5184 = vlaneseq
      %v5185 = vshrl.u32 %v5184, 7
      %v5186 = vsub.s32 1, %v5185
      %v5187 = vrot.slane %v4425, %v5186
      %v5188 = vlaneseq
      %v5189 = vshrl.u32 %v5188, 7
      %v5190 = vsub.s32 2, %v5189
      %v5191 = vrot.slane %v4425, %v5190
      %v5192 = vlaneseq
      %v5193 = vshrl.u32 %v5192, 7
      %v5194 = vsub.s32 3, %v5193
      %v5195 = vrot.slane %v4425, %v5194
      %v5196 = vlaneseq
      %v5197 = vshrl.u32 %v5196, 7
      %v5198 = vsub.s32 4, %v5197
      %v5199 = vrot.slane %v4425, %v5198
      %v5200 = vlaneseq
      %v5201 = vshrl.u32 %v5200, 7
      %v5202 = vsub.s32 5, %v5201
      %v5203 = vrot.slane %v4425, %v5202
      %v5204 = vlaneseq
      %v5205 = vshrl.u32 %v5204, 7
      %v5206 = vsub.s32 6, %v5205
      %v5207 = vrot.slane %v4425, %v5206
      %v5208 = vlaneseq
      %v5209 = vshrl.u32 %v5208, 7
      %v5210 = vsub.s32 7, %v5209
      %v5211 = vrot.slane %v4425, %v5210
      %v5212 = vlaneseq
      %v5213 = vshrl.u32 %v5212, 7
      %v5214 = vsub.s32 0, %v5213
      %v5215 = vrot.slane %v4427, %v5214
      %v5216 = vlaneseq
      %v5217 = vshrl.u32 %v5216, 7
      %v5218 = vsub.s32 1, %v5217
      %v5219 = vrot.slane %v4427, %v5218
      %v5220 = vlaneseq
      %v5221 = vshrl.u32 %v5220, 7
      %v5222 = vsub.s32 2, %v5221
      %v5223 = vrot.slane %v4427, %v5222
      %v5224 = vlaneseq
      %v5225 = vshrl.u32 %v5224, 7
      %v5226 = vsub.s32 3, %v5225
      %v5227 = vrot.slane %v4427, %v5226
      %v5228 = vlaneseq
      %v5229 = vshrl.u32 %v5228, 7
      %v5230 = vsub.s32 4, %v5229
      %v5231 = vrot.slane %v4427, %v5230
      %v5232 = vlaneseq
      %v5233 = vshrl.u32 %v5232, 7
      %v5234 = vsub.s32 5, %v5233
      %v5235 = vrot.slane %v4427, %v5234
      %v5236 = vlaneseq
      %v5237 = vshrl.u32 %v5236, 7
      %v5238 = vsub.s32 6, %v5237
      %v5239 = vrot.slane %v4427, %v5238
      %v5240 = vlaneseq
      %v5241 = vshrl.u32 %v5240, 7
      %v5242 = vsub.s32 7, %v5241
      %v5243 = vrot.slane %v4427, %v5242
      %v5244 = vlaneseq
      %v5245 = vshrl.u32 %v5244, 7
      %v5246 = vsub.s32 0, %v5245
      %v5247 = vrot.slane %v4429, %v5246
      %v5248 = vlaneseq
      %v5249 = vshrl.u32 %v5248, 7
      %v5250 = vsub.s32 1, %v5249
      %v5251 = vrot.slane %v4429, %v5250
      %v5252 = vlaneseq
      %v5253 = vshrl.u32 %v5252, 7
      %v5254 = vsub.s32 2, %v5253
      %v5255 = vrot.slane %v4429, %v5254
      %v5256 = vlaneseq
      %v5257 = vshrl.u32 %v5256, 7
      %v5258 = vsub.s32 3, %v5257
      %v5259 = vrot.slane %v4429, %v5258
      %v5260 = vlaneseq
      %v5261 = vshrl.u32 %v5260, 7
      %v5262 = vsub.s32 4, %v5261
      %v5263 = vrot.slane %v4429, %v5262
      %v5264 = vlaneseq
      %v5265 = vshrl.u32 %v5264, 7
      %v5266 = vsub.s32 5, %v5265
      %v5267 = vrot.slane %v4429, %v5266
      %v5268 = vlaneseq
      %v5269 = vshrl.u32 %v5268, 7
      %v5270 = vsub.s32 6, %v5269
      %v5271 = vrot.slane %v4429, %v5270
      %v5272 = vlaneseq
      %v5273 = vshrl.u32 %v5272, 7
      %v5274 = vsub.s32 7, %v5273
      %v5275 = vrot.slane %v4429, %v5274
      %v5276 = vlaneseq
      %v5277 = vshrl.u32 %v5276, 7
      %v5278 = vsub.s32 0, %v5277
      %v5279 = vrot.slane %v4431, %v5278
      %v5280 = vlaneseq
      %v5281 = vshrl.u32 %v5280, 7
      %v5282 = vsub.s32 1, %v5281
      %v5283 = vrot.slane %v4431, %v5282
      %v5284 = vlaneseq
      %v5285 = vshrl.u32 %v5284, 7
      %v5286 = vsub.s32 2, %v5285
      %v5287 = vrot.slane %v4431, %v5286
      %v5288 = vlaneseq
      %v5289 = vshrl.u32 %v5288, 7
      %v5290 = vsub.s32 3, %v5289
      %v5291 = vrot.slane %v4431, %v5290
      %v5292 = vlaneseq
      %v5293 = vshrl.u32 %v5292, 7
      %v5294 = vsub.s32 4, %v5293
      %v5295 = vrot.slane %v4431, %v5294
      %v5296 = vlaneseq
      %v5297 = vshrl.u32 %v5296, 7
      %v5298 = vsub.s32 5, %v5297
      %v5299 = vrot.slane %v4431, %v5298
      %v5300 = vlaneseq
      %v5301 = vshrl.u32 %v5300, 7
      %v5302 = vsub.s32 6, %v5301
      %v5303 = vrot.slane %v4431, %v5302
      %v5304 = vlaneseq
      %v5305 = vshrl.u32 %v5304, 7
      %v5306 = vsub.s32 7, %v5305
      %v5307 = vrot.slane %v4431, %v5306
      %v5308 = vlaneseq
      %v5309 = vshrl.u32 %v5308, 7
      %v5310 = vsub.s32 0, %v5309
      %v5311 = vrot.slane %v4433, %v5310
      %v5312 = vlaneseq
      %v5313 = vshrl.u32 %v5312, 7
      %v5314 = vsub.s32 1, %v5313
      %v5315 = vrot.slane %v4433, %v5314
      %v5316 = vlaneseq
      %v5317 = vshrl.u32 %v5316, 7
      %v5318 = vsub.s32 2, %v5317
      %v5319 = vrot.slane %v4433, %v5318
      %v5320 = vlaneseq
      %v5321 = vshrl.u32 %v5320, 7
      %v5322 = vsub.s32 3, %v5321
      %v5323 = vrot.slane %v4433, %v5322
      %v5324 = vlaneseq
      %v5325 = vshrl.u32 %v5324, 7
      %v5326 = vsub.s32 4, %v5325
      %v5327 = vrot.slane %v4433, %v5326
      %v5328 = vlaneseq
      %v5329 = vshrl.u32 %v5328, 7
      %v5330 = vsub.s32 5, %v5329
      %v5331 = vrot.slane %v4433, %v5330
      %v5332 = vlaneseq
      %v5333 = vshrl.u32 %v5332, 7
      %v5334 = vsub.s32 6, %v5333
      %v5335 = vrot.slane %v4433, %v5334
      %v5336 = vlaneseq
      %v5337 = vshrl.u32 %v5336, 7
      %v5338 = vsub.s32 7, %v5337
      %v5339 = vrot.slane %v4433, %v5338
      %v5340 = vlaneseq
      %v5341 = vshrl.u32 %v5340, 7
      %v5342 = vsub.s32 0, %v5341
      %v5343 = vrot.slane %v4435, %v5342
      %v5344 = vlaneseq
      %v5345 = vshrl.u32 %v5344, 7
      %v5346 = vsub.s32 1, %v5345
      %v5347 = vrot.slane %v4435, %v5346
      %v5348 = vlaneseq
      %v5349 = vshrl.u32 %v5348, 7
      %v5350 = vsub.s32 2, %v5349
      %v5351 = vrot.slane %v4435, %v5350
      %v5352 = vlaneseq
      %v5353 = vshrl.u32 %v5352, 7
      %v5354 = vsub.s32 3, %v5353
      %v5355 = vrot.slane %v4435, %v5354
      %v5356 = vlaneseq
      %v5357 = vshrl.u32 %v5356, 7
      %v5358 = vsub.s32 4, %v5357
      %v5359 = vrot.slane %v4435, %v5358
      %v5360 = vlaneseq
      %v5361 = vshrl.u32 %v5360, 7
      %v5362 = vsub.s32 5, %v5361
      %v5363 = vrot.slane %v4435, %v5362
      %v5364 = vlaneseq
      %v5365 = vshrl.u32 %v5364, 7
      %v5366 = vsub.s32 6, %v5365
      %v5367 = vrot.slane %v4435, %v5366
      %v5368 = vlaneseq
      %v5369 = vshrl.u32 %v5368, 7
      %v5370 = vsub.s32 7, %v5369
      %v5371 = vrot.slane %v4435, %v5370
      %v5372 = vlaneseq
      %v5373 = vshrl.u32 %v5372, 7
      %v5374 = vsub.s32 0, %v5373
      %v5375 = vrot.slane %v4437, %v5374
      %v5376 = vlaneseq
      %v5377 = vshrl.u32 %v5376, 7
      %v5378 = vsub.s32 1, %v5377
      %v5379 = vrot.slane %v4437, %v5378
      %v5380 = vlaneseq
      %v5381 = vshrl.u32 %v5380, 7
      %v5382 = vsub.s32 2, %v5381
      %v5383 = vrot.slane %v4437, %v5382
      %v5384 = vlaneseq
      %v5385 = vshrl.u32 %v5384, 7
      %v5386 = vsub.s32 3, %v5385
      %v5387 = vrot.slane %v4437, %v5386
      %v5388 = vlaneseq
      %v5389 = vshrl.u32 %v5388, 7
      %v5390 = vsub.s32 4, %v5389
      %v5391 = vrot.slane %v4437, %v5390
      %v5392 = vlaneseq
      %v5393 = vshrl.u32 %v5392, 7
      %v5394 = vsub.s32 5, %v5393
      %v5395 = vrot.slane %v4437, %v5394
      %v5396 = vlaneseq
      %v5397 = vshrl.u32 %v5396, 7
      %v5398 = vsub.s32 6, %v5397
      %v5399 = vrot.slane %v4437, %v5398
      %v5400 = vlaneseq
      %v5401 = vshrl.u32 %v5400, 7
      %v5402 = vsub.s32 7, %v5401
      %v5403 = vrot.slane %v4437, %v5402
      %v5404 = vlaneseq
      %v5405 = vshrl.u32 %v5404, 7
      %v5406 = vsub.s32 0, %v5405
      %v5407 = vrot.slane %v4439, %v5406
      %v5408 = vlaneseq
      %v5409 = vshrl.u32 %v5408, 7
      %v5410 = vsub.s32 1, %v5409
      %v5411 = vrot.slane %v4439, %v5410
      %v5412 = vlaneseq
      %v5413 = vshrl.u32 %v5412, 7
      %v5414 = vsub.s32 2, %v5413
      %v5415 = vrot.slane %v4439, %v5414
      %v5416 = vlaneseq
      %v5417 = vshrl.u32 %v5416, 7
      %v5418 = vsub.s32 3, %v5417
      %v5419 = vrot.slane %v4439, %v5418
      %v5420 = vlaneseq
      %v5421 = vshrl.u32 %v5420, 7
      %v5422 = vsub.s32 4, %v5421
      %v5423 = vrot.slane %v4439, %v5422
      %v5424 = vlaneseq
      %v5425 = vshrl.u32 %v5424, 7
      %v5426 = vsub.s32 5, %v5425
      %v5427 = vrot.slane %v4439, %v5426
      %v5428 = vlaneseq
      %v5429 = vshrl.u32 %v5428, 7
      %v5430 = vsub.s32 6, %v5429
      %v5431 = vrot.slane %v4439, %v5430
      %v5432 = vlaneseq
      %v5433 = vshrl.u32 %v5432, 7
      %v5434 = vsub.s32 7, %v5433
      %v5435 = vrot.slane %v4439, %v5434
      %v5436 = vlaneseq
      %v5437 = vshrl.u32 %v5436, 7
      %v5438 = vsub.s32 0, %v5437
      %v5439 = vrot.slane %v4441, %v5438
      %v5440 = vlaneseq
      %v5441 = vshrl.u32 %v5440, 7
      %v5442 = vsub.s32 1, %v5441
      %v5443 = vrot.slane %v4441, %v5442
      %v5444 = vlaneseq
      %v5445 = vshrl.u32 %v5444, 7
      %v5446 = vsub.s32 2, %v5445
      %v5447 = vrot.slane %v4441, %v5446
      %v5448 = vlaneseq
      %v5449 = vshrl.u32 %v5448, 7
      %v5450 = vsub.s32 3, %v5449
      %v5451 = vrot.slane %v4441, %v5450
      %v5452 = vlaneseq
      %v5453 = vshrl.u32 %v5452, 7
      %v5454 = vsub.s32 4, %v5453
      %v5455 = vrot.slane %v4441, %v5454
      %v5456 = vlaneseq
      %v5457 = vshrl.u32 %v5456, 7
      %v5458 = vsub.s32 5, %v5457
      %v5459 = vrot.slane %v4441, %v5458
      %v5460 = vlaneseq
      %v5461 = vshrl.u32 %v5460, 7
      %v5462 = vsub.s32 6, %v5461
      %v5463 = vrot.slane %v4441, %v5462
      %v5464 = vlaneseq
      %v5465 = vshrl.u32 %v5464, 7
      %v5466 = vsub.s32 7, %v5465
      %v5467 = vrot.slane %v4441, %v5466
      %v5468 = vlaneseq
      %v5469 = vshrl.u32 %v5468, 7
      %v5470 = vsub.s32 0, %v5469
      %v5471 = vrot.slane %v4443, %v5470
      %v5472 = vlaneseq
      %v5473 = vshrl.u32 %v5472, 7
      %v5474 = vsub.s32 1, %v5473
      %v5475 = vrot.slane %v4443, %v5474
      %v5476 = vlaneseq
      %v5477 = vshrl.u32 %v5476, 7
      %v5478 = vsub.s32 2, %v5477
      %v5479 = vrot.slane %v4443, %v5478
      %v5480 = vlaneseq
      %v5481 = vshrl.u32 %v5480, 7
      %v5482 = vsub.s32 3, %v5481
      %v5483 = vrot.slane %v4443, %v5482
      %v5484 = vlaneseq
      %v5485 = vshrl.u32 %v5484, 7
      %v5486 = vsub.s32 4, %v5485
      %v5487 = vrot.slane %v4443, %v5486
      %v5488 = vlaneseq
      %v5489 = vshrl.u32 %v5488, 7
      %v5490 = vsub.s32 5, %v5489
      %v5491 = vrot.slane %v4443, %v5490
      %v5492 = vlaneseq
      %v5493 = vshrl.u32 %v5492, 7
      %v5494 = vsub.s32 6, %v5493
      %v5495 = vrot.slane %v4443, %v5494
      %v5496 = vlaneseq
      %v5497 = vshrl.u32 %v5496, 7
      %v5498 = vsub.s32 7, %v5497
      %v5499 = vrot.slane %v4443, %v5498
      %v5500 = vcombine.low %v4479, %v4483
      %v5501 = vcombine.low %v4487, %v4491
      %v5502 = vcombine.low %v4495, %v4499
      %v5503 = vcombine.low %v4503, %v4507
      %v5505 = vunpack.c.l.s4 1966171168
      %v5506 = vunpack.c.0.s8 %v5505
      %v5507 = vlaneseq
      %v5508 = vshrl.u32 %v5507, 7
      %v5509 = vsub.s32 %v5506, %v5508
      %v5510 = vrot.slane %v5500, %v5509
      %v5512 = vunpack.c.l.s4 1966171168
      %v5513 = vunpack.c.0.s8 %v5512
      %v5514 = vlaneseq
      %v5515 = vshrl.u32 %v5514, 7
      %v5516 = vsub.s32 %v5513, %v5515
      %v5517 = vrot.slane %v5501, %v5516
      %v5519 = vunpack.c.l.s4 1966171168
      %v5520 = vunpack.c.0.s8 %v5519
      %v5521 = vlaneseq
      %v5522 = vshrl.u32 %v5521, 7
      %v5523 = vsub.s32 %v5520, %v5522
      %v5524 = vrot.slane %v5502, %v5523
      %v5526 = vunpack.c.l.s4 1966171168
      %v5527 = vunpack.c.0.s8 %v5526
      %v5528 = vlaneseq
      %v5529 = vshrl.u32 %v5528, 7
      %v5530 = vsub.s32 %v5527, %v5529
      %v5531 = vrot.slane %v5503, %v5530
      %v5532 = vcombine.low %v5510, %v5517
      %v5533 = vcombine.low %v5524, %v5531
      %v5535 = vunpack.c.l.s4 1966171168
      %v5536 = vunpack.c.0.s8 %v5535
      %v5537 = vlaneseq
      %v5538 = vshrl.u32 %v5537, 7
      %v5539 = vsub.s32 %v5536, %v5538
      %v5540 = vrot.slane %v5532, %v5539
      %v5542 = vunpack.c.l.s4 1966171168
      %v5543 = vunpack.c.0.s8 %v5542
      %v5544 = vlaneseq
      %v5545 = vshrl.u32 %v5544, 7
      %v5546 = vsub.s32 %v5543, %v5545
      %v5547 = vrot.slane %v5533, %v5546
      %v5548 = vcombine.low %v5540, %v5547
      %v5549 = vcombine.low %v4511, %v4515
      %v5550 = vcombine.low %v4519, %v4523
      %v5551 = vcombine.low %v4527, %v4531
      %v5552 = vcombine.low %v4535, %v4539
      %v5554 = vunpack.c.l.s4 1966171168
      %v5555 = vunpack.c.0.s8 %v5554
      %v5556 = vlaneseq
      %v5557 = vshrl.u32 %v5556, 7
      %v5558 = vsub.s32 %v5555, %v5557
      %v5559 = vrot.slane %v5549, %v5558
      %v5561 = vunpack.c.l.s4 1966171168
      %v5562 = vunpack.c.0.s8 %v5561
      %v5563 = vlaneseq
      %v5564 = vshrl.u32 %v5563, 7
      %v5565 = vsub.s32 %v5562, %v5564
      %v5566 = vrot.slane %v5550, %v5565
      %v5568 = vunpack.c.l.s4 1966171168
      %v5569 = vunpack.c.0.s8 %v5568
      %v5570 = vlaneseq
      %v5571 = vshrl.u32 %v5570, 7
      %v5572 = vsub.s32 %v5569, %v5571
      %v5573 = vrot.slane %v5551, %v5572
      %v5575 = vunpack.c.l.s4 1966171168
      %v5576 = vunpack.c.0.s8 %v5575
      %v5577 = vlaneseq
      %v5578 = vshrl.u32 %v5577, 7
      %v5579 = vsub.s32 %v5576, %v5578
      %v5580 = vrot.slane %v5552, %v5579
      %v5581 = vcombine.low %v5559, %v5566
      %v5582 = vcombine.low %v5573, %v5580
      %v5584 = vunpack.c.l.s4 1966171168
      %v5585 = vunpack.c.0.s8 %v5584
      %v5586 = vlaneseq
      %v5587 = vshrl.u32 %v5586, 7
      %v5588 = vsub.s32 %v5585, %v5587
      %v5589 = vrot.slane %v5581, %v5588
      %v5591 = vunpack.c.l.s4 1966171168
      %v5592 = vunpack.c.0.s8 %v5591
      %v5593 = vlaneseq
      %v5594 = vshrl.u32 %v5593, 7
      %v5595 = vsub.s32 %v5592, %v5594
      %v5596 = vrot.slane %v5582, %v5595
      %v5597 = vcombine.low %v5589, %v5596
      %v5598 = vcombine.low %v4543, %v4547
      %v5599 = vcombine.low %v4551, %v4555
      %v5600 = vcombine.low %v4559, %v4563
      %v5601 = vcombine.low %v4567, %v4571
      %v5603 = vunpack.c.l.s4 1966171168
      %v5604 = vunpack.c.0.s8 %v5603
      %v5605 = vlaneseq
      %v5606 = vshrl.u32 %v5605, 7
      %v5607 = vsub.s32 %v5604, %v5606
      %v5608 = vrot.slane %v5598, %v5607
      %v5610 = vunpack.c.l.s4 1966171168
      %v5611 = vunpack.c.0.s8 %v5610
      %v5612 = vlaneseq
      %v5613 = vshrl.u32 %v5612, 7
      %v5614 = vsub.s32 %v5611, %v5613
      %v5615 = vrot.slane %v5599, %v5614
      %v5617 = vunpack.c.l.s4 1966171168
      %v5618 = vunpack.c.0.s8 %v5617
      %v5619 = vlaneseq
      %v5620 = vshrl.u32 %v5619, 7
      %v5621 = vsub.s32 %v5618, %v5620
      %v5622 = vrot.slane %v5600, %v5621
      %v5624 = vunpack.c.l.s4 1966171168
      %v5625 = vunpack.c.0.s8 %v5624
      %v5626 = vlaneseq
      %v5627 = vshrl.u32 %v5626, 7
      %v5628 = vsub.s32 %v5625, %v5627
      %v5629 = vrot.slane %v5601, %v5628
      %v5630 = vcombine.low %v5608, %v5615
      %v5631 = vcombine.low %v5622, %v5629
      %v5633 = vunpack.c.l.s4 1966171168
      %v5634 = vunpack.c.0.s8 %v5633
      %v5635 = vlaneseq
      %v5636 = vshrl.u32 %v5635, 7
      %v5637 = vsub.s32 %v5634, %v5636
      %v5638 = vrot.slane %v5630, %v5637
      %v5640 = vunpack.c.l.s4 1966171168
      %v5641 = vunpack.c.0.s8 %v5640
      %v5642 = vlaneseq
      %v5643 = vshrl.u32 %v5642, 7
      %v5644 = vsub.s32 %v5641, %v5643
      %v5645 = vrot.slane %v5631, %v5644
      %v5646 = vcombine.low %v5638, %v5645
      %v5647 = vcombine.low %v4575, %v4579
      %v5648 = vcombine.low %v4583, %v4587
      %v5649 = vcombine.low %v4591, %v4595
      %v5650 = vcombine.low %v4599, %v4603
      %v5652 = vunpack.c.l.s4 1966171168
      %v5653 = vunpack.c.0.s8 %v5652
      %v5654 = vlaneseq
      %v5655 = vshrl.u32 %v5654, 7
      %v5656 = vsub.s32 %v5653, %v5655
      %v5657 = vrot.slane %v5647, %v5656
      %v5659 = vunpack.c.l.s4 1966171168
      %v5660 = vunpack.c.0.s8 %v5659
      %v5661 = vlaneseq
      %v5662 = vshrl.u32 %v5661, 7
      %v5663 = vsub.s32 %v5660, %v5662
      %v5664 = vrot.slane %v5648, %v5663
      %v5666 = vunpack.c.l.s4 1966171168
      %v5667 = vunpack.c.0.s8 %v5666
      %v5668 = vlaneseq
      %v5669 = vshrl.u32 %v5668, 7
      %v5670 = vsub.s32 %v5667, %v5669
      %v5671 = vrot.slane %v5649, %v5670
      %v5673 = vunpack.c.l.s4 1966171168
      %v5674 = vunpack.c.0.s8 %v5673
      %v5675 = vlaneseq
      %v5676 = vshrl.u32 %v5675, 7
      %v5677 = vsub.s32 %v5674, %v5676
      %v5678 = vrot.slane %v5650, %v5677
      %v5679 = vcombine.low %v5657, %v5664
      %v5680 = vcombine.low %v5671, %v5678
      %v5682 = vunpack.c.l.s4 1966171168
      %v5683 = vunpack.c.0.s8 %v5682
      %v5684 = vlaneseq
      %v5685 = vshrl.u32 %v5684, 7
      %v5686 = vsub.s32 %v5683, %v5685
      %v5687 = vrot.slane %v5679, %v5686
      %v5689 = vunpack.c.l.s4 1966171168
      %v5690 = vunpack.c.0.s8 %v5689
      %v5691 = vlaneseq
      %v5692 = vshrl.u32 %v5691, 7
      %v5693 = vsub.s32 %v5690, %v5692
      %v5694 = vrot.slane %v5680, %v5693
      %v5695 = vcombine.low %v5687, %v5694
      %v5696 = vcombine.low %v4607, %v4611
      %v5697 = vcombine.low %v4615, %v4619
      %v5698 = vcombine.low %v4623, %v4627
      %v5699 = vcombine.low %v4631, %v4635
      %v5701 = vunpack.c.l.s4 1966171168
      %v5702 = vunpack.c.0.s8 %v5701
      %v5703 = vlaneseq
      %v5704 = vshrl.u32 %v5703, 7
      %v5705 = vsub.s32 %v5702, %v5704
      %v5706 = vrot.slane %v5696, %v5705
      %v5708 = vunpack.c.l.s4 1966171168
      %v5709 = vunpack.c.0.s8 %v5708
      %v5710 = vlaneseq
      %v5711 = vshrl.u32 %v5710, 7
      %v5712 = vsub.s32 %v5709, %v5711
      %v5713 = vrot.slane %v5697, %v5712
      %v5715 = vunpack.c.l.s4 1966171168
      %v5716 = vunpack.c.0.s8 %v5715
      %v5717 = vlaneseq
      %v5718 = vshrl.u32 %v5717, 7
      %v5719 = vsub.s32 %v5716, %v5718
      %v5720 = vrot.slane %v5698, %v5719
      %v5722 = vunpack.c.l.s4 1966171168
      %v5723 = vunpack.c.0.s8 %v5722
      %v5724 = vlaneseq
      %v5725 = vshrl.u32 %v5724, 7
      %v5726 = vsub.s32 %v5723, %v5725
      %v5727 = vrot.slane %v5699, %v5726
      %v5728 = vcombine.low %v5706, %v5713
      %v5729 = vcombine.low %v5720, %v5727
      %v5731 = vunpack.c.l.s4 1966171168
      %v5732 = vunpack.c.0.s8 %v5731
      %v5733 = vlaneseq
      %v5734 = vshrl.u32 %v5733, 7
      %v5735 = vsub.s32 %v5732, %v5734
      %v5736 = vrot.slane %v5728, %v5735
      %v5738 = vunpack.c.l.s4 1966171168
      %v5739 = vunpack.c.0.s8 %v5738
      %v5740 = vlaneseq
      %v5741 = vshrl.u32 %v5740, 7
      %v5742 = vsub.s32 %v5739, %v5741
      %v5743 = vrot.slane %v5729, %v5742
      %v5744 = vcombine.low %v5736, %v5743
      %v5745 = vcombine.low %v4639, %v4643
      %v5746 = vcombine.low %v4647, %v4651
      %v5747 = vcombine.low %v4655, %v4659
      %v5748 = vcombine.low %v4663, %v4667
      %v5750 = vunpack.c.l.s4 1966171168
      %v5751 = vunpack.c.0.s8 %v5750
      %v5752 = vlaneseq
      %v5753 = vshrl.u32 %v5752, 7
      %v5754 = vsub.s32 %v5751, %v5753
      %v5755 = vrot.slane %v5745, %v5754
      %v5757 = vunpack.c.l.s4 1966171168
      %v5758 = vunpack.c.0.s8 %v5757
      %v5759 = vlaneseq
      %v5760 = vshrl.u32 %v5759, 7
      %v5761 = vsub.s32 %v5758, %v5760
      %v5762 = vrot.slane %v5746, %v5761
      %v5764 = vunpack.c.l.s4 1966171168
      %v5765 = vunpack.c.0.s8 %v5764
      %v5766 = vlaneseq
      %v5767 = vshrl.u32 %v5766, 7
      %v5768 = vsub.s32 %v5765, %v5767
      %v5769 = vrot.slane %v5747, %v5768
      %v5771 = vunpack.c.l.s4 1966171168
      %v5772 = vunpack.c.0.s8 %v5771
      %v5773 = vlaneseq
      %v5774 = vshrl.u32 %v5773, 7
      %v5775 = vsub.s32 %v5772, %v5774
      %v5776 = vrot.slane %v5748, %v5775
      %v5777 = vcombine.low %v5755, %v5762
      %v5778 = vcombine.low %v5769, %v5776
      %v5780 = vunpack.c.l.s4 1966171168
      %v5781 = vunpack.c.0.s8 %v5780
      %v5782 = vlaneseq
      %v5783 = vshrl.u32 %v5782, 7
      %v5784 = vsub.s32 %v5781, %v5783
      %v5785 = vrot.slane %v5777, %v5784
      %v5787 = vunpack.c.l.s4 1966171168
      %v5788 = vunpack.c.0.s8 %v5787
      %v5789 = vlaneseq
      %v5790 = vshrl.u32 %v5789, 7
      %v5791 = vsub.s32 %v5788, %v5790
      %v5792 = vrot.slane %v5778, %v5791
      %v5793 = vcombine.low %v5785, %v5792
      %v5794 = vcombine.low %v4671, %v4675
      %v5795 = vcombine.low %v4679, %v4683
      %v5796 = vcombine.low %v4687, %v4691
      %v5797 = vcombine.low %v4695, %v4699
      %v5799 = vunpack.c.l.s4 1966171168
      %v5800 = vunpack.c.0.s8 %v5799
      %v5801 = vlaneseq
      %v5802 = vshrl.u32 %v5801, 7
      %v5803 = vsub.s32 %v5800, %v5802
      %v5804 = vrot.slane %v5794, %v5803
      %v5806 = vunpack.c.l.s4 1966171168
      %v5807 = vunpack.c.0.s8 %v5806
      %v5808 = vlaneseq
      %v5809 = vshrl.u32 %v5808, 7
      %v5810 = vsub.s32 %v5807, %v5809
      %v5811 = vrot.slane %v5795, %v5810
      %v5813 = vunpack.c.l.s4 1966171168
      %v5814 = vunpack.c.0.s8 %v5813
      %v5815 = vlaneseq
      %v5816 = vshrl.u32 %v5815, 7
      %v5817 = vsub.s32 %v5814, %v5816
      %v5818 = vrot.slane %v5796, %v5817
      %v5820 = vunpack.c.l.s4 1966171168
      %v5821 = vunpack.c.0.s8 %v5820
      %v5822 = vlaneseq
      %v5823 = vshrl.u32 %v5822, 7
      %v5824 = vsub.s32 %v5821, %v5823
      %v5825 = vrot.slane %v5797, %v5824
      %v5826 = vcombine.low %v5804, %v5811
      %v5827 = vcombine.low %v5818, %v5825
      %v5829 = vunpack.c.l.s4 1966171168
      %v5830 = vunpack.c.0.s8 %v5829
      %v5831 = vlaneseq
      %v5832 = vshrl.u32 %v5831, 7
      %v5833 = vsub.s32 %v5830, %v5832
      %v5834 = vrot.slane %v5826, %v5833
      %v5836 = vunpack.c.l.s4 1966171168
      %v5837 = vunpack.c.0.s8 %v5836
      %v5838 = vlaneseq
      %v5839 = vshrl.u32 %v5838, 7
      %v5840 = vsub.s32 %v5837, %v5839
      %v5841 = vrot.slane %v5827, %v5840
      %v5842 = vcombine.low %v5834, %v5841
      %v5843 = vcombine.low %v4703, %v4707
      %v5844 = vcombine.low %v4711, %v4715
      %v5845 = vcombine.low %v4719, %v4723
      %v5846 = vcombine.low %v4727, %v4731
      %v5848 = vunpack.c.l.s4 1966171168
      %v5849 = vunpack.c.0.s8 %v5848
      %v5850 = vlaneseq
      %v5851 = vshrl.u32 %v5850, 7
      %v5852 = vsub.s32 %v5849, %v5851
      %v5853 = vrot.slane %v5843, %v5852
      %v5855 = vunpack.c.l.s4 1966171168
      %v5856 = vunpack.c.0.s8 %v5855
      %v5857 = vlaneseq
      %v5858 = vshrl.u32 %v5857, 7
      %v5859 = vsub.s32 %v5856, %v5858
      %v5860 = vrot.slane %v5844, %v5859
      %v5862 = vunpack.c.l.s4 1966171168
      %v5863 = vunpack.c.0.s8 %v5862
      %v5864 = vlaneseq
      %v5865 = vshrl.u32 %v5864, 7
      %v5866 = vsub.s32 %v5863, %v5865
      %v5867 = vrot.slane %v5845, %v5866
      %v5869 = vunpack.c.l.s4 1966171168
      %v5870 = vunpack.c.0.s8 %v5869
      %v5871 = vlaneseq
      %v5872 = vshrl.u32 %v5871, 7
      %v5873 = vsub.s32 %v5870, %v5872
      %v5874 = vrot.slane %v5846, %v5873
      %v5875 = vcombine.low %v5853, %v5860
      %v5876 = vcombine.low %v5867, %v5874
      %v5878 = vunpack.c.l.s4 1966171168
      %v5879 = vunpack.c.0.s8 %v5878
      %v5880 = vlaneseq
      %v5881 = vshrl.u32 %v5880, 7
      %v5882 = vsub.s32 %v5879, %v5881
      %v5883 = vrot.slane %v5875, %v5882
      %v5885 = vunpack.c.l.s4 1966171168
      %v5886 = vunpack.c.0.s8 %v5885
      %v5887 = vlaneseq
      %v5888 = vshrl.u32 %v5887, 7
      %v5889 = vsub.s32 %v5886, %v5888
      %v5890 = vrot.slane %v5876, %v5889
      %v5891 = vcombine.low %v5883, %v5890
      %v5892 = vcombine.low %v4735, %v4739
      %v5893 = vcombine.low %v4743, %v4747
      %v5894 = vcombine.low %v4751, %v4755
      %v5895 = vcombine.low %v4759, %v4763
      %v5897 = vunpack.c.l.s4 1966171168
      %v5898 = vunpack.c.0.s8 %v5897
      %v5899 = vlaneseq
      %v5900 = vshrl.u32 %v5899, 7
      %v5901 = vsub.s32 %v5898, %v5900
      %v5902 = vrot.slane %v5892, %v5901
      %v5904 = vunpack.c.l.s4 1966171168
      %v5905 = vunpack.c.0.s8 %v5904
      %v5906 = vlaneseq
      %v5907 = vshrl.u32 %v5906, 7
      %v5908 = vsub.s32 %v5905, %v5907
      %v5909 = vrot.slane %v5893, %v5908
      %v5911 = vunpack.c.l.s4 1966171168
      %v5912 = vunpack.c.0.s8 %v5911
      %v5913 = vlaneseq
      %v5914 = vshrl.u32 %v5913, 7
      %v5915 = vsub.s32 %v5912, %v5914
      %v5916 = vrot.slane %v5894, %v5915
      %v5918 = vunpack.c.l.s4 1966171168
      %v5919 = vunpack.c.0.s8 %v5918
      %v5920 = vlaneseq
      %v5921 = vshrl.u32 %v5920, 7
      %v5922 = vsub.s32 %v5919, %v5921
      %v5923 = vrot.slane %v5895, %v5922
      %v5924 = vcombine.low %v5902, %v5909
      %v5925 = vcombine.low %v5916, %v5923
      %v5927 = vunpack.c.l.s4 1966171168
      %v5928 = vunpack.c.0.s8 %v5927
      %v5929 = vlaneseq
      %v5930 = vshrl.u32 %v5929, 7
      %v5931 = vsub.s32 %v5928, %v5930
      %v5932 = vrot.slane %v5924, %v5931
      %v5934 = vunpack.c.l.s4 1966171168
      %v5935 = vunpack.c.0.s8 %v5934
      %v5936 = vlaneseq
      %v5937 = vshrl.u32 %v5936, 7
      %v5938 = vsub.s32 %v5935, %v5937
      %v5939 = vrot.slane %v5925, %v5938
      %v5940 = vcombine.low %v5932, %v5939
      %v5941 = vcombine.low %v4767, %v4771
      %v5942 = vcombine.low %v4775, %v4779
      %v5943 = vcombine.low %v4783, %v4787
      %v5944 = vcombine.low %v4791, %v4795
      %v5946 = vunpack.c.l.s4 1966171168
      %v5947 = vunpack.c.0.s8 %v5946
      %v5948 = vlaneseq
      %v5949 = vshrl.u32 %v5948, 7
      %v5950 = vsub.s32 %v5947, %v5949
      %v5951 = vrot.slane %v5941, %v5950
      %v5953 = vunpack.c.l.s4 1966171168
      %v5954 = vunpack.c.0.s8 %v5953
      %v5955 = vlaneseq
      %v5956 = vshrl.u32 %v5955, 7
      %v5957 = vsub.s32 %v5954, %v5956
      %v5958 = vrot.slane %v5942, %v5957
      %v5960 = vunpack.c.l.s4 1966171168
      %v5961 = vunpack.c.0.s8 %v5960
      %v5962 = vlaneseq
      %v5963 = vshrl.u32 %v5962, 7
      %v5964 = vsub.s32 %v5961, %v5963
      %v5965 = vrot.slane %v5943, %v5964
      %v5967 = vunpack.c.l.s4 1966171168
      %v5968 = vunpack.c.0.s8 %v5967
      %v5969 = vlaneseq
      %v5970 = vshrl.u32 %v5969, 7
      %v5971 = vsub.s32 %v5968, %v5970
      %v5972 = vrot.slane %v5944, %v5971
      %v5973 = vcombine.low %v5951, %v5958
      %v5974 = vcombine.low %v5965, %v5972
      %v5976 = vunpack.c.l.s4 1966171168
      %v5977 = vunpack.c.0.s8 %v5976
      %v5978 = vlaneseq
      %v5979 = vshrl.u32 %v5978, 7
      %v5980 = vsub.s32 %v5977, %v5979
      %v5981 = vrot.slane %v5973, %v5980
      %v5983 = vunpack.c.l.s4 1966171168
      %v5984 = vunpack.c.0.s8 %v5983
      %v5985 = vlaneseq
      %v5986 = vshrl.u32 %v5985, 7
      %v5987 = vsub.s32 %v5984, %v5986
      %v5988 = vrot.slane %v5974, %v5987
      %v5989 = vcombine.low %v5981, %v5988
      %v5990 = vcombine.low %v4799, %v4803
      %v5991 = vcombine.low %v4807, %v4811
      %v5992 = vcombine.low %v4815, %v4819
      %v5993 = vcombine.low %v4823, %v4827
      %v5995 = vunpack.c.l.s4 1966171168
      %v5996 = vunpack.c.0.s8 %v5995
      %v5997 = vlaneseq
      %v5998 = vshrl.u32 %v5997, 7
      %v5999 = vsub.s32 %v5996, %v5998
      %v6000 = vrot.slane %v5990, %v5999
      %v6002 = vunpack.c.l.s4 1966171168
      %v6003 = vunpack.c.0.s8 %v6002
      %v6004 = vlaneseq
      %v6005 = vshrl.u32 %v6004, 7
      %v6006 = vsub.s32 %v6003, %v6005
      %v6007 = vrot.slane %v5991, %v6006
      %v6009 = vunpack.c.l.s4 1966171168
      %v6010 = vunpack.c.0.s8 %v6009
      %v6011 = vlaneseq
      %v6012 = vshrl.u32 %v6011, 7
      %v6013 = vsub.s32 %v6010, %v6012
      %v6014 = vrot.slane %v5992, %v6013
      %v6016 = vunpack.c.l.s4 1966171168
      %v6017 = vunpack.c.0.s8 %v6016
      %v6018 = vlaneseq
      %v6019 = vshrl.u32 %v6018, 7
      %v6020 = vsub.s32 %v6017, %v6019
      %v6021 = vrot.slane %v5993, %v6020
      %v6022 = vcombine.low %v6000, %v6007
      %v6023 = vcombine.low %v6014, %v6021
      %v6025 = vunpack.c.l.s4 1966171168
      %v6026 = vunpack.c.0.s8 %v6025
      %v6027 = vlaneseq
      %v6028 = vshrl.u32 %v6027, 7
      %v6029 = vsub.s32 %v6026, %v6028
      %v6030 = vrot.slane %v6022, %v6029
      %v6032 = vunpack.c.l.s4 1966171168
      %v6033 = vunpack.c.0.s8 %v6032
      %v6034 = vlaneseq
      %v6035 = vshrl.u32 %v6034, 7
      %v6036 = vsub.s32 %v6033, %v6035
      %v6037 = vrot.slane %v6023, %v6036
      %v6038 = vcombine.low %v6030, %v6037
      %v6039 = vcombine.low %v4831, %v4835
      %v6040 = vcombine.low %v4839, %v4843
      %v6041 = vcombine.low %v4847, %v4851
      %v6042 = vcombine.low %v4855, %v4859
      %v6044 = vunpack.c.l.s4 1966171168
      %v6045 = vunpack.c.0.s8 %v6044
      %v6046 = vlaneseq
      %v6047 = vshrl.u32 %v6046, 7
      %v6048 = vsub.s32 %v6045, %v6047
      %v6049 = vrot.slane %v6039, %v6048
      %v6051 = vunpack.c.l.s4 1966171168
      %v6052 = vunpack.c.0.s8 %v6051
      %v6053 = vlaneseq
      %v6054 = vshrl.u32 %v6053, 7
      %v6055 = vsub.s32 %v6052, %v6054
      %v6056 = vrot.slane %v6040, %v6055
      %v6058 = vunpack.c.l.s4 1966171168
      %v6059 = vunpack.c.0.s8 %v6058
      %v6060 = vlaneseq
      %v6061 = vshrl.u32 %v6060, 7
      %v6062 = vsub.s32 %v6059, %v6061
      %v6063 = vrot.slane %v6041, %v6062
      %v6065 = vunpack.c.l.s4 1966171168
      %v6066 = vunpack.c.0.s8 %v6065
      %v6067 = vlaneseq
      %v6068 = vshrl.u32 %v6067, 7
      %v6069 = vsub.s32 %v6066, %v6068
      %v6070 = vrot.slane %v6042, %v6069
      %v6071 = vcombine.low %v6049, %v6056
      %v6072 = vcombine.low %v6063, %v6070
      %v6074 = vunpack.c.l.s4 1966171168
      %v6075 = vunpack.c.0.s8 %v6074
      %v6076 = vlaneseq
      %v6077 = vshrl.u32 %v6076, 7
      %v6078 = vsub.s32 %v6075, %v6077
      %v6079 = vrot.slane %v6071, %v6078
      %v6081 = vunpack.c.l.s4 1966171168
      %v6082 = vunpack.c.0.s8 %v6081
      %v6083 = vlaneseq
      %v6084 = vshrl.u32 %v6083, 7
      %v6085 = vsub.s32 %v6082, %v6084
      %v6086 = vrot.slane %v6072, %v6085
      %v6087 = vcombine.low %v6079, %v6086
      %v6088 = vcombine.low %v4863, %v4867
      %v6089 = vcombine.low %v4871, %v4875
      %v6090 = vcombine.low %v4879, %v4883
      %v6091 = vcombine.low %v4887, %v4891
      %v6093 = vunpack.c.l.s4 1966171168
      %v6094 = vunpack.c.0.s8 %v6093
      %v6095 = vlaneseq
      %v6096 = vshrl.u32 %v6095, 7
      %v6097 = vsub.s32 %v6094, %v6096
      %v6098 = vrot.slane %v6088, %v6097
      %v6100 = vunpack.c.l.s4 1966171168
      %v6101 = vunpack.c.0.s8 %v6100
      %v6102 = vlaneseq
      %v6103 = vshrl.u32 %v6102, 7
      %v6104 = vsub.s32 %v6101, %v6103
      %v6105 = vrot.slane %v6089, %v6104
      %v6107 = vunpack.c.l.s4 1966171168
      %v6108 = vunpack.c.0.s8 %v6107
      %v6109 = vlaneseq
      %v6110 = vshrl.u32 %v6109, 7
      %v6111 = vsub.s32 %v6108, %v6110
      %v6112 = vrot.slane %v6090, %v6111
      %v6114 = vunpack.c.l.s4 1966171168
      %v6115 = vunpack.c.0.s8 %v6114
      %v6116 = vlaneseq
      %v6117 = vshrl.u32 %v6116, 7
      %v6118 = vsub.s32 %v6115, %v6117
      %v6119 = vrot.slane %v6091, %v6118
      %v6120 = vcombine.low %v6098, %v6105
      %v6121 = vcombine.low %v6112, %v6119
      %v6123 = vunpack.c.l.s4 1966171168
      %v6124 = vunpack.c.0.s8 %v6123
      %v6125 = vlaneseq
      %v6126 = vshrl.u32 %v6125, 7
      %v6127 = vsub.s32 %v6124, %v6126
      %v6128 = vrot.slane %v6120, %v6127
      %v6130 = vunpack.c.l.s4 1966171168
      %v6131 = vunpack.c.0.s8 %v6130
      %v6132 = vlaneseq
      %v6133 = vshrl.u32 %v6132, 7
      %v6134 = vsub.s32 %v6131, %v6133
      %v6135 = vrot.slane %v6121, %v6134
      %v6136 = vcombine.low %v6128, %v6135
      %v6137 = vcombine.low %v4895, %v4899
      %v6138 = vcombine.low %v4903, %v4907
      %v6139 = vcombine.low %v4911, %v4915
      %v6140 = vcombine.low %v4919, %v4923
      %v6142 = vunpack.c.l.s4 1966171168
      %v6143 = vunpack.c.0.s8 %v6142
      %v6144 = vlaneseq
      %v6145 = vshrl.u32 %v6144, 7
      %v6146 = vsub.s32 %v6143, %v6145
      %v6147 = vrot.slane %v6137, %v6146
      %v6149 = vunpack.c.l.s4 1966171168
      %v6150 = vunpack.c.0.s8 %v6149
      %v6151 = vlaneseq
      %v6152 = vshrl.u32 %v6151, 7
      %v6153 = vsub.s32 %v6150, %v6152
      %v6154 = vrot.slane %v6138, %v6153
      %v6156 = vunpack.c.l.s4 1966171168
      %v6157 = vunpack.c.0.s8 %v6156
      %v6158 = vlaneseq
      %v6159 = vshrl.u32 %v6158, 7
      %v6160 = vsub.s32 %v6157, %v6159
      %v6161 = vrot.slane %v6139, %v6160
      %v6163 = vunpack.c.l.s4 1966171168
      %v6164 = vunpack.c.0.s8 %v6163
      %v6165 = vlaneseq
      %v6166 = vshrl.u32 %v6165, 7
      %v6167 = vsub.s32 %v6164, %v6166
      %v6168 = vrot.slane %v6140, %v6167
      %v6169 = vcombine.low %v6147, %v6154
      %v6170 = vcombine.low %v6161, %v6168
      %v6172 = vunpack.c.l.s4 1966171168
      %v6173 = vunpack.c.0.s8 %v6172
      %v6174 = vlaneseq
      %v6175 = vshrl.u32 %v6174, 7
      %v6176 = vsub.s32 %v6173, %v6175
      %v6177 = vrot.slane %v6169, %v6176
      %v6179 = vunpack.c.l.s4 1966171168
      %v6180 = vunpack.c.0.s8 %v6179
      %v6181 = vlaneseq
      %v6182 = vshrl.u32 %v6181, 7
      %v6183 = vsub.s32 %v6180, %v6182
      %v6184 = vrot.slane %v6170, %v6183
      %v6185 = vcombine.low %v6177, %v6184
      %v6186 = vcombine.low %v4927, %v4931
      %v6187 = vcombine.low %v4935, %v4939
      %v6188 = vcombine.low %v4943, %v4947
      %v6189 = vcombine.low %v4951, %v4955
      %v6191 = vunpack.c.l.s4 1966171168
      %v6192 = vunpack.c.0.s8 %v6191
      %v6193 = vlaneseq
      %v6194 = vshrl.u32 %v6193, 7
      %v6195 = vsub.s32 %v6192, %v6194
      %v6196 = vrot.slane %v6186, %v6195
      %v6198 = vunpack.c.l.s4 1966171168
      %v6199 = vunpack.c.0.s8 %v6198
      %v6200 = vlaneseq
      %v6201 = vshrl.u32 %v6200, 7
      %v6202 = vsub.s32 %v6199, %v6201
      %v6203 = vrot.slane %v6187, %v6202
      %v6205 = vunpack.c.l.s4 1966171168
      %v6206 = vunpack.c.0.s8 %v6205
      %v6207 = vlaneseq
      %v6208 = vshrl.u32 %v6207, 7
      %v6209 = vsub.s32 %v6206, %v6208
      %v6210 = vrot.slane %v6188, %v6209
      %v6212 = vunpack.c.l.s4 1966171168
      %v6213 = vunpack.c.0.s8 %v6212
      %v6214 = vlaneseq
      %v6215 = vshrl.u32 %v6214, 7
      %v6216 = vsub.s32 %v6213, %v6215
      %v6217 = vrot.slane %v6189, %v6216
      %v6218 = vcombine.low %v6196, %v6203
      %v6219 = vcombine.low %v6210, %v6217
      %v6221 = vunpack.c.l.s4 1966171168
      %v6222 = vunpack.c.0.s8 %v6221
      %v6223 = vlaneseq
      %v6224 = vshrl.u32 %v6223, 7
      %v6225 = vsub.s32 %v6222, %v6224
      %v6226 = vrot.slane %v6218, %v6225
      %v6228 = vunpack.c.l.s4 1966171168
      %v6229 = vunpack.c.0.s8 %v6228
      %v6230 = vlaneseq
      %v6231 = vshrl.u32 %v6230, 7
      %v6232 = vsub.s32 %v6229, %v6231
      %v6233 = vrot.slane %v6219, %v6232
      %v6234 = vcombine.low %v6226, %v6233
      %v6235 = vcombine.low %v4959, %v4963
      %v6236 = vcombine.low %v4967, %v4971
      %v6237 = vcombine.low %v4975, %v4979
      %v6238 = vcombine.low %v4983, %v4987
      %v6240 = vunpack.c.l.s4 1966171168
      %v6241 = vunpack.c.0.s8 %v6240
      %v6242 = vlaneseq
      %v6243 = vshrl.u32 %v6242, 7
      %v6244 = vsub.s32 %v6241, %v6243
      %v6245 = vrot.slane %v6235, %v6244
      %v6247 = vunpack.c.l.s4 1966171168
      %v6248 = vunpack.c.0.s8 %v6247
      %v6249 = vlaneseq
      %v6250 = vshrl.u32 %v6249, 7
      %v6251 = vsub.s32 %v6248, %v6250
      %v6252 = vrot.slane %v6236, %v6251
      %v6254 = vunpack.c.l.s4 1966171168
      %v6255 = vunpack.c.0.s8 %v6254
      %v6256 = vlaneseq
      %v6257 = vshrl.u32 %v6256, 7
      %v6258 = vsub.s32 %v6255, %v6257
      %v6259 = vrot.slane %v6237, %v6258
      %v6261 = vunpack.c.l.s4 1966171168
      %v6262 = vunpack.c.0.s8 %v6261
      %v6263 = vlaneseq
      %v6264 = vshrl.u32 %v6263, 7
      %v6265 = vsub.s32 %v6262, %v6264
      %v6266 = vrot.slane %v6238, %v6265
      %v6267 = vcombine.low %v6245, %v6252
      %v6268 = vcombine.low %v6259, %v6266
      %v6270 = vunpack.c.l.s4 1966171168
      %v6271 = vunpack.c.0.s8 %v6270
      %v6272 = vlaneseq
      %v6273 = vshrl.u32 %v6272, 7
      %v6274 = vsub.s32 %v6271, %v6273
      %v6275 = vrot.slane %v6267, %v6274
      %v6277 = vunpack.c.l.s4 1966171168
      %v6278 = vunpack.c.0.s8 %v6277
      %v6279 = vlaneseq
      %v6280 = vshrl.u32 %v6279, 7
      %v6281 = vsub.s32 %v6278, %v6280
      %v6282 = vrot.slane %v6268, %v6281
      %v6283 = vcombine.low %v6275, %v6282
      %v6284 = vcombine.low %v4991, %v4995
      %v6285 = vcombine.low %v4999, %v5003
      %v6286 = vcombine.low %v5007, %v5011
      %v6287 = vcombine.low %v5015, %v5019
      %v6289 = vunpack.c.l.s4 1966171168
      %v6290 = vunpack.c.0.s8 %v6289
      %v6291 = vlaneseq
      %v6292 = vshrl.u32 %v6291, 7
      %v6293 = vsub.s32 %v6290, %v6292
      %v6294 = vrot.slane %v6284, %v6293
      %v6296 = vunpack.c.l.s4 1966171168
      %v6297 = vunpack.c.0.s8 %v6296
      %v6298 = vlaneseq
      %v6299 = vshrl.u32 %v6298, 7
      %v6300 = vsub.s32 %v6297, %v6299
      %v6301 = vrot.slane %v6285, %v6300
      %v6303 = vunpack.c.l.s4 1966171168
      %v6304 = vunpack.c.0.s8 %v6303
      %v6305 = vlaneseq
      %v6306 = vshrl.u32 %v6305, 7
      %v6307 = vsub.s32 %v6304, %v6306
      %v6308 = vrot.slane %v6286, %v6307
      %v6310 = vunpack.c.l.s4 1966171168
      %v6311 = vunpack.c.0.s8 %v6310
      %v6312 = vlaneseq
      %v6313 = vshrl.u32 %v6312, 7
      %v6314 = vsub.s32 %v6311, %v6313
      %v6315 = vrot.slane %v6287, %v6314
      %v6316 = vcombine.low %v6294, %v6301
      %v6317 = vcombine.low %v6308, %v6315
      %v6319 = vunpack.c.l.s4 1966171168
      %v6320 = vunpack.c.0.s8 %v6319
      %v6321 = vlaneseq
      %v6322 = vshrl.u32 %v6321, 7
      %v6323 = vsub.s32 %v6320, %v6322
      %v6324 = vrot.slane %v6316, %v6323
      %v6326 = vunpack.c.l.s4 1966171168
      %v6327 = vunpack.c.0.s8 %v6326
      %v6328 = vlaneseq
      %v6329 = vshrl.u32 %v6328, 7
      %v6330 = vsub.s32 %v6327, %v6329
      %v6331 = vrot.slane %v6317, %v6330
      %v6332 = vcombine.low %v6324, %v6331
      %v6333 = vcombine.low %v5023, %v5027
      %v6334 = vcombine.low %v5031, %v5035
      %v6335 = vcombine.low %v5039, %v5043
      %v6336 = vcombine.low %v5047, %v5051
      %v6338 = vunpack.c.l.s4 1966171168
      %v6339 = vunpack.c.0.s8 %v6338
      %v6340 = vlaneseq
      %v6341 = vshrl.u32 %v6340, 7
      %v6342 = vsub.s32 %v6339, %v6341
      %v6343 = vrot.slane %v6333, %v6342
      %v6345 = vunpack.c.l.s4 1966171168
      %v6346 = vunpack.c.0.s8 %v6345
      %v6347 = vlaneseq
      %v6348 = vshrl.u32 %v6347, 7
      %v6349 = vsub.s32 %v6346, %v6348
      %v6350 = vrot.slane %v6334, %v6349
      %v6352 = vunpack.c.l.s4 1966171168
      %v6353 = vunpack.c.0.s8 %v6352
      %v6354 = vlaneseq
      %v6355 = vshrl.u32 %v6354, 7
      %v6356 = vsub.s32 %v6353, %v6355
      %v6357 = vrot.slane %v6335, %v6356
      %v6359 = vunpack.c.l.s4 1966171168
      %v6360 = vunpack.c.0.s8 %v6359
      %v6361 = vlaneseq
      %v6362 = vshrl.u32 %v6361, 7
      %v6363 = vsub.s32 %v6360, %v6362
      %v6364 = vrot.slane %v6336, %v6363
      %v6365 = vcombine.low %v6343, %v6350
      %v6366 = vcombine.low %v6357, %v6364
      %v6368 = vunpack.c.l.s4 1966171168
      %v6369 = vunpack.c.0.s8 %v6368
      %v6370 = vlaneseq
      %v6371 = vshrl.u32 %v6370, 7
      %v6372 = vsub.s32 %v6369, %v6371
      %v6373 = vrot.slane %v6365, %v6372
      %v6375 = vunpack.c.l.s4 1966171168
      %v6376 = vunpack.c.0.s8 %v6375
      %v6377 = vlaneseq
      %v6378 = vshrl.u32 %v6377, 7
      %v6379 = vsub.s32 %v6376, %v6378
      %v6380 = vrot.slane %v6366, %v6379
      %v6381 = vcombine.low %v6373, %v6380
      %v6382 = vcombine.low %v5055, %v5059
      %v6383 = vcombine.low %v5063, %v5067
      %v6384 = vcombine.low %v5071, %v5075
      %v6385 = vcombine.low %v5079, %v5083
      %v6387 = vunpack.c.l.s4 1966171168
      %v6388 = vunpack.c.0.s8 %v6387
      %v6389 = vlaneseq
      %v6390 = vshrl.u32 %v6389, 7
      %v6391 = vsub.s32 %v6388, %v6390
      %v6392 = vrot.slane %v6382, %v6391
      %v6394 = vunpack.c.l.s4 1966171168
      %v6395 = vunpack.c.0.s8 %v6394
      %v6396 = vlaneseq
      %v6397 = vshrl.u32 %v6396, 7
      %v6398 = vsub.s32 %v6395, %v6397
      %v6399 = vrot.slane %v6383, %v6398
      %v6401 = vunpack.c.l.s4 1966171168
      %v6402 = vunpack.c.0.s8 %v6401
      %v6403 = vlaneseq
      %v6404 = vshrl.u32 %v6403, 7
      %v6405 = vsub.s32 %v6402, %v6404
      %v6406 = vrot.slane %v6384, %v6405
      %v6408 = vunpack.c.l.s4 1966171168
      %v6409 = vunpack.c.0.s8 %v6408
      %v6410 = vlaneseq
      %v6411 = vshrl.u32 %v6410, 7
      %v6412 = vsub.s32 %v6409, %v6411
      %v6413 = vrot.slane %v6385, %v6412
      %v6414 = vcombine.low %v6392, %v6399
      %v6415 = vcombine.low %v6406, %v6413
      %v6417 = vunpack.c.l.s4 1966171168
      %v6418 = vunpack.c.0.s8 %v6417
      %v6419 = vlaneseq
      %v6420 = vshrl.u32 %v6419, 7
      %v6421 = vsub.s32 %v6418, %v6420
      %v6422 = vrot.slane %v6414, %v6421
      %v6424 = vunpack.c.l.s4 1966171168
      %v6425 = vunpack.c.0.s8 %v6424
      %v6426 = vlaneseq
      %v6427 = vshrl.u32 %v6426, 7
      %v6428 = vsub.s32 %v6425, %v6427
      %v6429 = vrot.slane %v6415, %v6428
      %v6430 = vcombine.low %v6422, %v6429
      %v6431 = vcombine.low %v5087, %v5091
      %v6432 = vcombine.low %v5095, %v5099
      %v6433 = vcombine.low %v5103, %v5107
      %v6434 = vcombine.low %v5111, %v5115
      %v6436 = vunpack.c.l.s4 1966171168
      %v6437 = vunpack.c.0.s8 %v6436
      %v6438 = vlaneseq
      %v6439 = vshrl.u32 %v6438, 7
      %v6440 = vsub.s32 %v6437, %v6439
      %v6441 = vrot.slane %v6431, %v6440
      %v6443 = vunpack.c.l.s4 1966171168
      %v6444 = vunpack.c.0.s8 %v6443
      %v6445 = vlaneseq
      %v6446 = vshrl.u32 %v6445, 7
      %v6447 = vsub.s32 %v6444, %v6446
      %v6448 = vrot.slane %v6432, %v6447
      %v6450 = vunpack.c.l.s4 1966171168
      %v6451 = vunpack.c.0.s8 %v6450
      %v6452 = vlaneseq
      %v6453 = vshrl.u32 %v6452, 7
      %v6454 = vsub.s32 %v6451, %v6453
      %v6455 = vrot.slane %v6433, %v6454
      %v6457 = vunpack.c.l.s4 1966171168
      %v6458 = vunpack.c.0.s8 %v6457
      %v6459 = vlaneseq
      %v6460 = vshrl.u32 %v6459, 7
      %v6461 = vsub.s32 %v6458, %v6460
      %v6462 = vrot.slane %v6434, %v6461
      %v6463 = vcombine.low %v6441, %v6448
      %v6464 = vcombine.low %v6455, %v6462
      %v6466 = vunpack.c.l.s4 1966171168
      %v6467 = vunpack.c.0.s8 %v6466
      %v6468 = vlaneseq
      %v6469 = vshrl.u32 %v6468, 7
      %v6470 = vsub.s32 %v6467, %v6469
      %v6471 = vrot.slane %v6463, %v6470
      %v6473 = vunpack.c.l.s4 1966171168
      %v6474 = vunpack.c.0.s8 %v6473
      %v6475 = vlaneseq
      %v6476 = vshrl.u32 %v6475, 7
      %v6477 = vsub.s32 %v6474, %v6476
      %v6478 = vrot.slane %v6464, %v6477
      %v6479 = vcombine.low %v6471, %v6478
      %v6480 = vcombine.low %v5119, %v5123
      %v6481 = vcombine.low %v5127, %v5131
      %v6482 = vcombine.low %v5135, %v5139
      %v6483 = vcombine.low %v5143, %v5147
      %v6485 = vunpack.c.l.s4 1966171168
      %v6486 = vunpack.c.0.s8 %v6485
      %v6487 = vlaneseq
      %v6488 = vshrl.u32 %v6487, 7
      %v6489 = vsub.s32 %v6486, %v6488
      %v6490 = vrot.slane %v6480, %v6489
      %v6492 = vunpack.c.l.s4 1966171168
      %v6493 = vunpack.c.0.s8 %v6492
      %v6494 = vlaneseq
      %v6495 = vshrl.u32 %v6494, 7
      %v6496 = vsub.s32 %v6493, %v6495
      %v6497 = vrot.slane %v6481, %v6496
      %v6499 = vunpack.c.l.s4 1966171168
      %v6500 = vunpack.c.0.s8 %v6499
      %v6501 = vlaneseq
      %v6502 = vshrl.u32 %v6501, 7
      %v6503 = vsub.s32 %v6500, %v6502
      %v6504 = vrot.slane %v6482, %v6503
      %v6506 = vunpack.c.l.s4 1966171168
      %v6507 = vunpack.c.0.s8 %v6506
      %v6508 = vlaneseq
      %v6509 = vshrl.u32 %v6508, 7
      %v6510 = vsub.s32 %v6507, %v6509
      %v6511 = vrot.slane %v6483, %v6510
      %v6512 = vcombine.low %v6490, %v6497
      %v6513 = vcombine.low %v6504, %v6511
      %v6515 = vunpack.c.l.s4 1966171168
      %v6516 = vunpack.c.0.s8 %v6515
      %v6517 = vlaneseq
      %v6518 = vshrl.u32 %v6517, 7
      %v6519 = vsub.s32 %v6516, %v6518
      %v6520 = vrot.slane %v6512, %v6519
      %v6522 = vunpack.c.l.s4 1966171168
      %v6523 = vunpack.c.0.s8 %v6522
      %v6524 = vlaneseq
      %v6525 = vshrl.u32 %v6524, 7
      %v6526 = vsub.s32 %v6523, %v6525
      %v6527 = vrot.slane %v6513, %v6526
      %v6528 = vcombine.low %v6520, %v6527
      %v6529 = vcombine.low %v5151, %v5155
      %v6530 = vcombine.low %v5159, %v5163
      %v6531 = vcombine.low %v5167, %v5171
      %v6532 = vcombine.low %v5175, %v5179
      %v6534 = vunpack.c.l.s4 1966171168
      %v6535 = vunpack.c.0.s8 %v6534
      %v6536 = vlaneseq
      %v6537 = vshrl.u32 %v6536, 7
      %v6538 = vsub.s32 %v6535, %v6537
      %v6539 = vrot.slane %v6529, %v6538
      %v6541 = vunpack.c.l.s4 1966171168
      %v6542 = vunpack.c.0.s8 %v6541
      %v6543 = vlaneseq
      %v6544 = vshrl.u32 %v6543, 7
      %v6545 = vsub.s32 %v6542, %v6544
      %v6546 = vrot.slane %v6530, %v6545
      %v6548 = vunpack.c.l.s4 1966171168
      %v6549 = vunpack.c.0.s8 %v6548
      %v6550 = vlaneseq
      %v6551 = vshrl.u32 %v6550, 7
      %v6552 = vsub.s32 %v6549, %v6551
      %v6553 = vrot.slane %v6531, %v6552
      %v6555 = vunpack.c.l.s4 1966171168
      %v6556 = vunpack.c.0.s8 %v6555
      %v6557 = vlaneseq
      %v6558 = vshrl.u32 %v6557, 7
      %v6559 = vsub.s32 %v6556, %v6558
      %v6560 = vrot.slane %v6532, %v6559
      %v6561 = vcombine.low %v6539, %v6546
      %v6562 = vcombine.low %v6553, %v6560
      %v6564 = vunpack.c.l.s4 1966171168
      %v6565 = vunpack.c.0.s8 %v6564
      %v6566 = vlaneseq
      %v6567 = vshrl.u32 %v6566, 7
      %v6568 = vsub.s32 %v6565, %v6567
      %v6569 = vrot.slane %v6561, %v6568
      %v6571 = vunpack.c.l.s4 1966171168
      %v6572 = vunpack.c.0.s8 %v6571
      %v6573 = vlaneseq
      %v6574 = vshrl.u32 %v6573, 7
      %v6575 = vsub.s32 %v6572, %v6574
      %v6576 = vrot.slane %v6562, %v6575
      %v6577 = vcombine.low %v6569, %v6576
      %v6578 = vcombine.low %v5183, %v5187
      %v6579 = vcombine.low %v5191, %v5195
      %v6580 = vcombine.low %v5199, %v5203
      %v6581 = vcombine.low %v5207, %v5211
      %v6583 = vunpack.c.l.s4 1966171168
      %v6584 = vunpack.c.0.s8 %v6583
      %v6585 = vlaneseq
      %v6586 = vshrl.u32 %v6585, 7
      %v6587 = vsub.s32 %v6584, %v6586
      %v6588 = vrot.slane %v6578, %v6587
      %v6590 = vunpack.c.l.s4 1966171168
      %v6591 = vunpack.c.0.s8 %v6590
      %v6592 = vlaneseq
      %v6593 = vshrl.u32 %v6592, 7
      %v6594 = vsub.s32 %v6591, %v6593
      %v6595 = vrot.slane %v6579, %v6594
      %v6597 = vunpack.c.l.s4 1966171168
      %v6598 = vunpack.c.0.s8 %v6597
      %v6599 = vlaneseq
      %v6600 = vshrl.u32 %v6599, 7
      %v6601 = vsub.s32 %v6598, %v6600
      %v6602 = vrot.slane %v6580, %v6601
      %v6604 = vunpack.c.l.s4 1966171168
      %v6605 = vunpack.c.0.s8 %v6604
      %v6606 = vlaneseq
      %v6607 = vshrl.u32 %v6606, 7
      %v6608 = vsub.s32 %v6605, %v6607
      %v6609 = vrot.slane %v6581, %v6608
      %v6610 = vcombine.low %v6588, %v6595
      %v6611 = vcombine.low %v6602, %v6609
      %v6613 = vunpack.c.l.s4 1966171168
      %v6614 = vunpack.c.0.s8 %v6613
      %v6615 = vlaneseq
      %v6616 = vshrl.u32 %v6615, 7
      %v6617 = vsub.s32 %v6614, %v6616
      %v6618 = vrot.slane %v6610, %v6617
      %v6620 = vunpack.c.l.s4 1966171168
      %v6621 = vunpack.c.0.s8 %v6620
      %v6622 = vlaneseq
      %v6623 = vshrl.u32 %v6622, 7
      %v6624 = vsub.s32 %v6621, %v6623
      %v6625 = vrot.slane %v6611, %v6624
      %v6626 = vcombine.low %v6618, %v6625
      %v6627 = vcombine.low %v5215, %v5219
      %v6628 = vcombine.low %v5223, %v5227
      %v6629 = vcombine.low %v5231, %v5235
      %v6630 = vcombine.low %v5239, %v5243
      %v6632 = vunpack.c.l.s4 1966171168
      %v6633 = vunpack.c.0.s8 %v6632
      %v6634 = vlaneseq
      %v6635 = vshrl.u32 %v6634, 7
      %v6636 = vsub.s32 %v6633, %v6635
      %v6637 = vrot.slane %v6627, %v6636
      %v6639 = vunpack.c.l.s4 1966171168
      %v6640 = vunpack.c.0.s8 %v6639
      %v6641 = vlaneseq
      %v6642 = vshrl.u32 %v6641, 7
      %v6643 = vsub.s32 %v6640, %v6642
      %v6644 = vrot.slane %v6628, %v6643
      %v6646 = vunpack.c.l.s4 1966171168
      %v6647 = vunpack.c.0.s8 %v6646
      %v6648 = vlaneseq
      %v6649 = vshrl.u32 %v6648, 7
      %v6650 = vsub.s32 %v6647, %v6649
      %v6651 = vrot.slane %v6629, %v6650
      %v6653 = vunpack.c.l.s4 1966171168
      %v6654 = vunpack.c.0.s8 %v6653
      %v6655 = vlaneseq
      %v6656 = vshrl.u32 %v6655, 7
      %v6657 = vsub.s32 %v6654, %v6656
      %v6658 = vrot.slane %v6630, %v6657
      %v6659 = vcombine.low %v6637, %v6644
      %v6660 = vcombine.low %v6651, %v6658
      %v6662 = vunpack.c.l.s4 1966171168
      %v6663 = vunpack.c.0.s8 %v6662
      %v6664 = vlaneseq
      %v6665 = vshrl.u32 %v6664, 7
      %v6666 = vsub.s32 %v6663, %v6665
      %v6667 = vrot.slane %v6659, %v6666
      %v6669 = vunpack.c.l.s4 1966171168
      %v6670 = vunpack.c.0.s8 %v6669
      %v6671 = vlaneseq
      %v6672 = vshrl.u32 %v6671, 7
      %v6673 = vsub.s32 %v6670, %v6672
      %v6674 = vrot.slane %v6660, %v6673
      %v6675 = vcombine.low %v6667, %v6674
      %v6676 = vcombine.low %v5247, %v5251
      %v6677 = vcombine.low %v5255, %v5259
      %v6678 = vcombine.low %v5263, %v5267
      %v6679 = vcombine.low %v5271, %v5275
      %v6681 = vunpack.c.l.s4 1966171168
      %v6682 = vunpack.c.0.s8 %v6681
      %v6683 = vlaneseq
      %v6684 = vshrl.u32 %v6683, 7
      %v6685 = vsub.s32 %v6682, %v6684
      %v6686 = vrot.slane %v6676, %v6685
      %v6688 = vunpack.c.l.s4 1966171168
      %v6689 = vunpack.c.0.s8 %v6688
      %v6690 = vlaneseq
      %v6691 = vshrl.u32 %v6690, 7
      %v6692 = vsub.s32 %v6689, %v6691
      %v6693 = vrot.slane %v6677, %v6692
      %v6695 = vunpack.c.l.s4 1966171168
      %v6696 = vunpack.c.0.s8 %v6695
      %v6697 = vlaneseq
      %v6698 = vshrl.u32 %v6697, 7
      %v6699 = vsub.s32 %v6696, %v6698
      %v6700 = vrot.slane %v6678, %v6699
      %v6702 = vunpack.c.l.s4 1966171168
      %v6703 = vunpack.c.0.s8 %v6702
      %v6704 = vlaneseq
      %v6705 = vshrl.u32 %v6704, 7
      %v6706 = vsub.s32 %v6703, %v6705
      %v6707 = vrot.slane %v6679, %v6706
      %v6708 = vcombine.low %v6686, %v6693
      %v6709 = vcombine.low %v6700, %v6707
      %v6711 = vunpack.c.l.s4 1966171168
      %v6712 = vunpack.c.0.s8 %v6711
      %v6713 = vlaneseq
      %v6714 = vshrl.u32 %v6713, 7
      %v6715 = vsub.s32 %v6712, %v6714
      %v6716 = vrot.slane %v6708, %v6715
      %v6718 = vunpack.c.l.s4 1966171168
      %v6719 = vunpack.c.0.s8 %v6718
      %v6720 = vlaneseq
      %v6721 = vshrl.u32 %v6720, 7
      %v6722 = vsub.s32 %v6719, %v6721
      %v6723 = vrot.slane %v6709, %v6722
      %v6724 = vcombine.low %v6716, %v6723
      %v6725 = vcombine.low %v5279, %v5283
      %v6726 = vcombine.low %v5287, %v5291
      %v6727 = vcombine.low %v5295, %v5299
      %v6728 = vcombine.low %v5303, %v5307
      %v6730 = vunpack.c.l.s4 1966171168
      %v6731 = vunpack.c.0.s8 %v6730
      %v6732 = vlaneseq
      %v6733 = vshrl.u32 %v6732, 7
      %v6734 = vsub.s32 %v6731, %v6733
      %v6735 = vrot.slane %v6725, %v6734
      %v6737 = vunpack.c.l.s4 1966171168
      %v6738 = vunpack.c.0.s8 %v6737
      %v6739 = vlaneseq
      %v6740 = vshrl.u32 %v6739, 7
      %v6741 = vsub.s32 %v6738, %v6740
      %v6742 = vrot.slane %v6726, %v6741
      %v6744 = vunpack.c.l.s4 1966171168
      %v6745 = vunpack.c.0.s8 %v6744
      %v6746 = vlaneseq
      %v6747 = vshrl.u32 %v6746, 7
      %v6748 = vsub.s32 %v6745, %v6747
      %v6749 = vrot.slane %v6727, %v6748
      %v6751 = vunpack.c.l.s4 1966171168
      %v6752 = vunpack.c.0.s8 %v6751
      %v6753 = vlaneseq
      %v6754 = vshrl.u32 %v6753, 7
      %v6755 = vsub.s32 %v6752, %v6754
      %v6756 = vrot.slane %v6728, %v6755
      %v6757 = vcombine.low %v6735, %v6742
      %v6758 = vcombine.low %v6749, %v6756
      %v6760 = vunpack.c.l.s4 1966171168
      %v6761 = vunpack.c.0.s8 %v6760
      %v6762 = vlaneseq
      %v6763 = vshrl.u32 %v6762, 7
      %v6764 = vsub.s32 %v6761, %v6763
      %v6765 = vrot.slane %v6757, %v6764
      %v6767 = vunpack.c.l.s4 1966171168
      %v6768 = vunpack.c.0.s8 %v6767
      %v6769 = vlaneseq
      %v6770 = vshrl.u32 %v6769, 7
      %v6771 = vsub.s32 %v6768, %v6770
      %v6772 = vrot.slane %v6758, %v6771
      %v6773 = vcombine.low %v6765, %v6772
      %v6774 = vcombine.low %v5311, %v5315
      %v6775 = vcombine.low %v5319, %v5323
      %v6776 = vcombine.low %v5327, %v5331
      %v6777 = vcombine.low %v5335, %v5339
      %v6779 = vunpack.c.l.s4 1966171168
      %v6780 = vunpack.c.0.s8 %v6779
      %v6781 = vlaneseq
      %v6782 = vshrl.u32 %v6781, 7
      %v6783 = vsub.s32 %v6780, %v6782
      %v6784 = vrot.slane %v6774, %v6783
      %v6786 = vunpack.c.l.s4 1966171168
      %v6787 = vunpack.c.0.s8 %v6786
      %v6788 = vlaneseq
      %v6789 = vshrl.u32 %v6788, 7
      %v6790 = vsub.s32 %v6787, %v6789
      %v6791 = vrot.slane %v6775, %v6790
      %v6793 = vunpack.c.l.s4 1966171168
      %v6794 = vunpack.c.0.s8 %v6793
      %v6795 = vlaneseq
      %v6796 = vshrl.u32 %v6795, 7
      %v6797 = vsub.s32 %v6794, %v6796
      %v6798 = vrot.slane %v6776, %v6797
      %v6800 = vunpack.c.l.s4 1966171168
      %v6801 = vunpack.c.0.s8 %v6800
      %v6802 = vlaneseq
      %v6803 = vshrl.u32 %v6802, 7
      %v6804 = vsub.s32 %v6801, %v6803
      %v6805 = vrot.slane %v6777, %v6804
      %v6806 = vcombine.low %v6784, %v6791
      %v6807 = vcombine.low %v6798, %v6805
      %v6809 = vunpack.c.l.s4 1966171168
      %v6810 = vunpack.c.0.s8 %v6809
      %v6811 = vlaneseq
      %v6812 = vshrl.u32 %v6811, 7
      %v6813 = vsub.s32 %v6810, %v6812
      %v6814 = vrot.slane %v6806, %v6813
      %v6816 = vunpack.c.l.s4 1966171168
      %v6817 = vunpack.c.0.s8 %v6816
      %v6818 = vlaneseq
      %v6819 = vshrl.u32 %v6818, 7
      %v6820 = vsub.s32 %v6817, %v6819
      %v6821 = vrot.slane %v6807, %v6820
      %v6822 = vcombine.low %v6814, %v6821
      %v6823 = vcombine.low %v5343, %v5347
      %v6824 = vcombine.low %v5351, %v5355
      %v6825 = vcombine.low %v5359, %v5363
      %v6826 = vcombine.low %v5367, %v5371
      %v6828 = vunpack.c.l.s4 1966171168
      %v6829 = vunpack.c.0.s8 %v6828
      %v6830 = vlaneseq
      %v6831 = vshrl.u32 %v6830, 7
      %v6832 = vsub.s32 %v6829, %v6831
      %v6833 = vrot.slane %v6823, %v6832
      %v6835 = vunpack.c.l.s4 1966171168
      %v6836 = vunpack.c.0.s8 %v6835
      %v6837 = vlaneseq
      %v6838 = vshrl.u32 %v6837, 7
      %v6839 = vsub.s32 %v6836, %v6838
      %v6840 = vrot.slane %v6824, %v6839
      %v6842 = vunpack.c.l.s4 1966171168
      %v6843 = vunpack.c.0.s8 %v6842
      %v6844 = vlaneseq
      %v6845 = vshrl.u32 %v6844, 7
      %v6846 = vsub.s32 %v6843, %v6845
      %v6847 = vrot.slane %v6825, %v6846
      %v6849 = vunpack.c.l.s4 1966171168
      %v6850 = vunpack.c.0.s8 %v6849
      %v6851 = vlaneseq
      %v6852 = vshrl.u32 %v6851, 7
      %v6853 = vsub.s32 %v6850, %v6852
      %v6854 = vrot.slane %v6826, %v6853
      %v6855 = vcombine.low %v6833, %v6840
      %v6856 = vcombine.low %v6847, %v6854
      %v6858 = vunpack.c.l.s4 1966171168
      %v6859 = vunpack.c.0.s8 %v6858
      %v6860 = vlaneseq
      %v6861 = vshrl.u32 %v6860, 7
      %v6862 = vsub.s32 %v6859, %v6861
      %v6863 = vrot.slane %v6855, %v6862
      %v6865 = vunpack.c.l.s4 1966171168
      %v6866 = vunpack.c.0.s8 %v6865
      %v6867 = vlaneseq
      %v6868 = vshrl.u32 %v6867, 7
      %v6869 = vsub.s32 %v6866, %v6868
      %v6870 = vrot.slane %v6856, %v6869
      %v6871 = vcombine.low %v6863, %v6870
      %v6872 = vcombine.low %v5375, %v5379
      %v6873 = vcombine.low %v5383, %v5387
      %v6874 = vcombine.low %v5391, %v5395
      %v6875 = vcombine.low %v5399, %v5403
      %v6877 = vunpack.c.l.s4 1966171168
      %v6878 = vunpack.c.0.s8 %v6877
      %v6879 = vlaneseq
      %v6880 = vshrl.u32 %v6879, 7
      %v6881 = vsub.s32 %v6878, %v6880
      %v6882 = vrot.slane %v6872, %v6881
      %v6884 = vunpack.c.l.s4 1966171168
      %v6885 = vunpack.c.0.s8 %v6884
      %v6886 = vlaneseq
      %v6887 = vshrl.u32 %v6886, 7
      %v6888 = vsub.s32 %v6885, %v6887
      %v6889 = vrot.slane %v6873, %v6888
      %v6891 = vunpack.c.l.s4 1966171168
      %v6892 = vunpack.c.0.s8 %v6891
      %v6893 = vlaneseq
      %v6894 = vshrl.u32 %v6893, 7
      %v6895 = vsub.s32 %v6892, %v6894
      %v6896 = vrot.slane %v6874, %v6895
      %v6898 = vunpack.c.l.s4 1966171168
      %v6899 = vunpack.c.0.s8 %v6898
      %v6900 = vlaneseq
      %v6901 = vshrl.u32 %v6900, 7
      %v6902 = vsub.s32 %v6899, %v6901
      %v6903 = vrot.slane %v6875, %v6902
      %v6904 = vcombine.low %v6882, %v6889
      %v6905 = vcombine.low %v6896, %v6903
      %v6907 = vunpack.c.l.s4 1966171168
      %v6908 = vunpack.c.0.s8 %v6907
      %v6909 = vlaneseq
      %v6910 = vshrl.u32 %v6909, 7
      %v6911 = vsub.s32 %v6908, %v6910
      %v6912 = vrot.slane %v6904, %v6911
      %v6914 = vunpack.c.l.s4 1966171168
      %v6915 = vunpack.c.0.s8 %v6914
      %v6916 = vlaneseq
      %v6917 = vshrl.u32 %v6916, 7
      %v6918 = vsub.s32 %v6915, %v6917
      %v6919 = vrot.slane %v6905, %v6918
      %v6920 = vcombine.low %v6912, %v6919
      %v6921 = vcombine.low %v5407, %v5411
      %v6922 = vcombine.low %v5415, %v5419
      %v6923 = vcombine.low %v5423, %v5427
      %v6924 = vcombine.low %v5431, %v5435
      %v6926 = vunpack.c.l.s4 1966171168
      %v6927 = vunpack.c.0.s8 %v6926
      %v6928 = vlaneseq
      %v6929 = vshrl.u32 %v6928, 7
      %v6930 = vsub.s32 %v6927, %v6929
      %v6931 = vrot.slane %v6921, %v6930
      %v6933 = vunpack.c.l.s4 1966171168
      %v6934 = vunpack.c.0.s8 %v6933
      %v6935 = vlaneseq
      %v6936 = vshrl.u32 %v6935, 7
      %v6937 = vsub.s32 %v6934, %v6936
      %v6938 = vrot.slane %v6922, %v6937
      %v6940 = vunpack.c.l.s4 1966171168
      %v6941 = vunpack.c.0.s8 %v6940
      %v6942 = vlaneseq
      %v6943 = vshrl.u32 %v6942, 7
      %v6944 = vsub.s32 %v6941, %v6943
      %v6945 = vrot.slane %v6923, %v6944
      %v6947 = vunpack.c.l.s4 1966171168
      %v6948 = vunpack.c.0.s8 %v6947
      %v6949 = vlaneseq
      %v6950 = vshrl.u32 %v6949, 7
      %v6951 = vsub.s32 %v6948, %v6950
      %v6952 = vrot.slane %v6924, %v6951
      %v6953 = vcombine.low %v6931, %v6938
      %v6954 = vcombine.low %v6945, %v6952
      %v6956 = vunpack.c.l.s4 1966171168
      %v6957 = vunpack.c.0.s8 %v6956
      %v6958 = vlaneseq
      %v6959 = vshrl.u32 %v6958, 7
      %v6960 = vsub.s32 %v6957, %v6959
      %v6961 = vrot.slane %v6953, %v6960
      %v6963 = vunpack.c.l.s4 1966171168
      %v6964 = vunpack.c.0.s8 %v6963
      %v6965 = vlaneseq
      %v6966 = vshrl.u32 %v6965, 7
      %v6967 = vsub.s32 %v6964, %v6966
      %v6968 = vrot.slane %v6954, %v6967
      %v6969 = vcombine.low %v6961, %v6968
      %v6970 = vcombine.low %v5439, %v5443
      %v6971 = vcombine.low %v5447, %v5451
      %v6972 = vcombine.low %v5455, %v5459
      %v6973 = vcombine.low %v5463, %v5467
      %v6975 = vunpack.c.l.s4 1966171168
      %v6976 = vunpack.c.0.s8 %v6975
      %v6977 = vlaneseq
      %v6978 = vshrl.u32 %v6977, 7
      %v6979 = vsub.s32 %v6976, %v6978
      %v6980 = vrot.slane %v6970, %v6979
      %v6982 = vunpack.c.l.s4 1966171168
      %v6983 = vunpack.c.0.s8 %v6982
      %v6984 = vlaneseq
      %v6985 = vshrl.u32 %v6984, 7
      %v6986 = vsub.s32 %v6983, %v6985
      %v6987 = vrot.slane %v6971, %v6986
      %v6989 = vunpack.c.l.s4 1966171168
      %v6990 = vunpack.c.0.s8 %v6989
      %v6991 = vlaneseq
      %v6992 = vshrl.u32 %v6991, 7
      %v6993 = vsub.s32 %v6990, %v6992
      %v6994 = vrot.slane %v6972, %v6993
      %v6996 = vunpack.c.l.s4 1966171168
      %v6997 = vunpack.c.0.s8 %v6996
      %v6998 = vlaneseq
      %v6999 = vshrl.u32 %v6998, 7
      %v7000 = vsub.s32 %v6997, %v6999
      %v7001 = vrot.slane %v6973, %v7000
      %v7002 = vcombine.low %v6980, %v6987
      %v7003 = vcombine.low %v6994, %v7001
      %v7005 = vunpack.c.l.s4 1966171168
      %v7006 = vunpack.c.0.s8 %v7005
      %v7007 = vlaneseq
      %v7008 = vshrl.u32 %v7007, 7
      %v7009 = vsub.s32 %v7006, %v7008
      %v7010 = vrot.slane %v7002, %v7009
      %v7012 = vunpack.c.l.s4 1966171168
      %v7013 = vunpack.c.0.s8 %v7012
      %v7014 = vlaneseq
      %v7015 = vshrl.u32 %v7014, 7
      %v7016 = vsub.s32 %v7013, %v7015
      %v7017 = vrot.slane %v7003, %v7016
      %v7018 = vcombine.low %v7010, %v7017
      %v7019 = vcombine.low %v5471, %v5475
      %v7020 = vcombine.low %v5479, %v5483
      %v7021 = vcombine.low %v5487, %v5491
      %v7022 = vcombine.low %v5495, %v5499
      %v7024 = vunpack.c.l.s4 1966171168
      %v7025 = vunpack.c.0.s8 %v7024
      %v7026 = vlaneseq
      %v7027 = vshrl.u32 %v7026, 7
      %v7028 = vsub.s32 %v7025, %v7027
      %v7029 = vrot.slane %v7019, %v7028
      %v7031 = vunpack.c.l.s4 1966171168
      %v7032 = vunpack.c.0.s8 %v7031
      %v7033 = vlaneseq
      %v7034 = vshrl.u32 %v7033, 7
      %v7035 = vsub.s32 %v7032, %v7034
      %v7036 = vrot.slane %v7020, %v7035
      %v7038 = vunpack.c.l.s4 1966171168
      %v7039 = vunpack.c.0.s8 %v7038
      %v7040 = vlaneseq
      %v7041 = vshrl.u32 %v7040, 7
      %v7042 = vsub.s32 %v7039, %v7041
      %v7043 = vrot.slane %v7021, %v7042
      %v7045 = vunpack.c.l.s4 1966171168
      %v7046 = vunpack.c.0.s8 %v7045
      %v7047 = vlaneseq
      %v7048 = vshrl.u32 %v7047, 7
      %v7049 = vsub.s32 %v7046, %v7048
      %v7050 = vrot.slane %v7022, %v7049
      %v7051 = vcombine.low %v7029, %v7036
      %v7052 = vcombine.low %v7043, %v7050
      %v7054 = vunpack.c.l.s4 1966171168
      %v7055 = vunpack.c.0.s8 %v7054
      %v7056 = vlaneseq
      %v7057 = vshrl.u32 %v7056, 7
      %v7058 = vsub.s32 %v7055, %v7057
      %v7059 = vrot.slane %v7051, %v7058
      %v7061 = vunpack.c.l.s4 1966171168
      %v7062 = vunpack.c.0.s8 %v7061
      %v7063 = vlaneseq
      %v7064 = vshrl.u32 %v7063, 7
      %v7065 = vsub.s32 %v7062, %v7064
      %v7066 = vrot.slane %v7052, %v7065
      %v7067 = vcombine.low %v7059, %v7066
      %7068 = vset.pattern.permute.xlu0 0
      %7069 = vperm.xlu0 %7068, %v5548
      %v7070 = vpop.permute.xlu0 %7069
      %7071 = vset.pattern.permute.xlu0 0
      %7072 = vperm.xlu0 %7071, %v5597
      %v7073 = vpop.permute.xlu0 %7072
      %7074 = vset.pattern.permute.xlu0 0
      %7075 = vperm.xlu0 %7074, %v5646
      %v7076 = vpop.permute.xlu0 %7075
      %7077 = vset.pattern.permute.xlu0 0
      %7078 = vperm.xlu0 %7077, %v5695
      %v7079 = vpop.permute.xlu0 %7078
      %7080 = vset.pattern.permute.xlu0 0
      %7081 = vperm.xlu0 %7080, %v5744
      %v7082 = vpop.permute.xlu0 %7081
      %7083 = vset.pattern.permute.xlu0 0
      %7084 = vperm.xlu0 %7083, %v5793
      %v7085 = vpop.permute.xlu0 %7084
      %7086 = vset.pattern.permute.xlu0 0
      %7087 = vperm.xlu0 %7086, %v5842
      %v7088 = vpop.permute.xlu0 %7087
      %7089 = vset.pattern.permute.xlu0 0
      %7090 = vperm.xlu0 %7089, %v5891
      %v7091 = vpop.permute.xlu0 %7090
      %7092 = vset.pattern.permute.xlu0 0
      %7093 = vperm.xlu0 %7092, %v5940
      %v7094 = vpop.permute.xlu0 %7093
      %7095 = vset.pattern.permute.xlu0 0
      %7096 = vperm.xlu0 %7095, %v5989
      %v7097 = vpop.permute.xlu0 %7096
      %7098 = vset.pattern.permute.xlu0 0
      %7099 = vperm.xlu0 %7098, %v6038
      %v7100 = vpop.permute.xlu0 %7099
      %7101 = vset.pattern.permute.xlu0 0
      %7102 = vperm.xlu0 %7101, %v6087
      %v7103 = vpop.permute.xlu0 %7102
      %7104 = vset.pattern.permute.xlu0 0
      %7105 = vperm.xlu0 %7104, %v6136
      %v7106 = vpop.permute.xlu0 %7105
      %7107 = vset.pattern.permute.xlu0 0
      %7108 = vperm.xlu0 %7107, %v6185
      %v7109 = vpop.permute.xlu0 %7108
      %7110 = vset.pattern.permute.xlu0 0
      %7111 = vperm.xlu0 %7110, %v6234
      %v7112 = vpop.permute.xlu0 %7111
      %7113 = vset.pattern.permute.xlu0 0
      %7114 = vperm.xlu0 %7113, %v6283
      %v7115 = vpop.permute.xlu0 %7114
      %7116 = vset.pattern.permute.xlu0 0
      %7117 = vperm.xlu0 %7116, %v6332
      %v7118 = vpop.permute.xlu0 %7117
      %7119 = vset.pattern.permute.xlu0 0
      %7120 = vperm.xlu0 %7119, %v6381
      %v7121 = vpop.permute.xlu0 %7120
      %7122 = vset.pattern.permute.xlu0 0
      %7123 = vperm.xlu0 %7122, %v6430
      %v7124 = vpop.permute.xlu0 %7123
      %7125 = vset.pattern.permute.xlu0 0
      %7126 = vperm.xlu0 %7125, %v6479
      %v7127 = vpop.permute.xlu0 %7126
      %7128 = vset.pattern.permute.xlu0 0
      %7129 = vperm.xlu0 %7128, %v6528
      %v7130 = vpop.permute.xlu0 %7129
      %7131 = vset.pattern.permute.xlu0 0
      %7132 = vperm.xlu0 %7131, %v6577
      %v7133 = vpop.permute.xlu0 %7132
      %7134 = vset.pattern.permute.xlu0 0
      %7135 = vperm.xlu0 %7134, %v6626
      %v7136 = vpop.permute.xlu0 %7135
      %7137 = vset.pattern.permute.xlu0 0
      %7138 = vperm.xlu0 %7137, %v6675
      %v7139 = vpop.permute.xlu0 %7138
      %7140 = vset.pattern.permute.xlu0 0
      %7141 = vperm.xlu0 %7140, %v6724
      %v7142 = vpop.permute.xlu0 %7141
      %7143 = vset.pattern.permute.xlu0 0
      %7144 = vperm.xlu0 %7143, %v6773
      %v7145 = vpop.permute.xlu0 %7144
      %7146 = vset.pattern.permute.xlu0 0
      %7147 = vperm.xlu0 %7146, %v6822
      %v7148 = vpop.permute.xlu0 %7147
      %7149 = vset.pattern.permute.xlu0 0
      %7150 = vperm.xlu0 %7149, %v6871
      %v7151 = vpop.permute.xlu0 %7150
      %7152 = vset.pattern.permute.xlu0 0
      %7153 = vperm.xlu0 %7152, %v6920
      %v7154 = vpop.permute.xlu0 %7153
      %7155 = vset.pattern.permute.xlu0 0
      %7156 = vperm.xlu0 %7155, %v6969
      %v7157 = vpop.permute.xlu0 %7156
      %7158 = vset.pattern.permute.xlu0 0
      %7159 = vperm.xlu0 %7158, %v7018
      %v7160 = vpop.permute.xlu0 %7159
      %7161 = vset.pattern.permute.xlu0 0
      %7162 = vperm.xlu0 %7161, %v7067
      %v7163 = vpop.permute.xlu0 %7162
      %v7164 = vlaneseq
      %v7165 = vshrl.u32 %v7164, 7
      %v7166 = vsub.s32 %v713, %v7165
      %v7167 = vrot.slane %v7070, %v7166
      %v7168 = vlaneseq
      %v7169 = vshrl.u32 %v7168, 7
      %v7170 = vsub.s32 %v4112, %v7169
      %v7171 = vrot.slane %v7073, %v7170
      %v7172 = vsel %vm4117, %v7171, %v7167
      %v7173 = vlaneseq
      %v7174 = vshrl.u32 %v7173, 7
      %v7175 = vsub.s32 %v4119, %v7174
      %v7176 = vrot.slane %v7076, %v7175
      %v7177 = vsel %vm4124, %v7176, %v7172
      %v7178 = vlaneseq
      %v7179 = vshrl.u32 %v7178, 7
      %v7180 = vsub.s32 %v4126, %v7179
      %v7181 = vrot.slane %v7079, %v7180
      %v7182 = vsel %vm4131, %v7181, %v7177
      %v7183 = vlaneseq
      %v7184 = vshrl.u32 %v7183, 7
      %v7185 = vsub.s32 %v4133, %v7184
      %v7186 = vrot.slane %v7082, %v7185
      %v7187 = vsel %vm4138, %v7186, %v7182
      %v7188 = vlaneseq
      %v7189 = vshrl.u32 %v7188, 7
      %v7190 = vsub.s32 %v4140, %v7189
      %v7191 = vrot.slane %v7085, %v7190
      %v7192 = vsel %vm4145, %v7191, %v7187
      %v7193 = vlaneseq
      %v7194 = vshrl.u32 %v7193, 7
      %v7195 = vsub.s32 %v4147, %v7194
      %v7196 = vrot.slane %v7088, %v7195
      %v7197 = vsel %vm4152, %v7196, %v7192
      %v7198 = vlaneseq
      %v7199 = vshrl.u32 %v7198, 7
      %v7200 = vsub.s32 %v4154, %v7199
      %v7201 = vrot.slane %v7091, %v7200
      %v7202 = vsel %vm4159, %v7201, %v7197
      %v7203 = vlaneseq
      %v7204 = vshrl.u32 %v7203, 7
      %v7205 = vsub.s32 %v4161, %v7204
      %v7206 = vrot.slane %v7094, %v7205
      %v7207 = vsel %vm4166, %v7206, %v7202
      %v7208 = vlaneseq
      %v7209 = vshrl.u32 %v7208, 7
      %v7210 = vsub.s32 %v4168, %v7209
      %v7211 = vrot.slane %v7097, %v7210
      %v7212 = vsel %vm4173, %v7211, %v7207
      %v7213 = vlaneseq
      %v7214 = vshrl.u32 %v7213, 7
      %v7215 = vsub.s32 %v4175, %v7214
      %v7216 = vrot.slane %v7100, %v7215
      %v7217 = vsel %vm4180, %v7216, %v7212
      %v7218 = vlaneseq
      %v7219 = vshrl.u32 %v7218, 7
      %v7220 = vsub.s32 %v4182, %v7219
      %v7221 = vrot.slane %v7103, %v7220
      %v7222 = vsel %vm4187, %v7221, %v7217
      %v7223 = vlaneseq
      %v7224 = vshrl.u32 %v7223, 7
      %v7225 = vsub.s32 %v4189, %v7224
      %v7226 = vrot.slane %v7106, %v7225
      %v7227 = vsel %vm4194, %v7226, %v7222
      %v7228 = vlaneseq
      %v7229 = vshrl.u32 %v7228, 7
      %v7230 = vsub.s32 %v4196, %v7229
      %v7231 = vrot.slane %v7109, %v7230
      %v7232 = vsel %vm4201, %v7231, %v7227
      %v7233 = vlaneseq
      %v7234 = vshrl.u32 %v7233, 7
      %v7235 = vsub.s32 %v4203, %v7234
      %v7236 = vrot.slane %v7112, %v7235
      %v7237 = vsel %vm4208, %v7236, %v7232
      %v7238 = vlaneseq
      %v7239 = vshrl.u32 %v7238, 7
      %v7240 = vsub.s32 %v4210, %v7239
      %v7241 = vrot.slane %v7115, %v7240
      %v7242 = vsel %vm4215, %v7241, %v7237
      %v7243 = vlaneseq
      %v7244 = vshrl.u32 %v7243, 7
      %v7245 = vsub.s32 %v713, %v7244
      %v7246 = vrot.slane %v7118, %v7245
      %v7247 = vlaneseq
      %v7248 = vshrl.u32 %v7247, 7
      %v7249 = vsub.s32 %v4112, %v7248
      %v7250 = vrot.slane %v7121, %v7249
      %v7251 = vsel %vm4117, %v7250, %v7246
      %v7252 = vlaneseq
      %v7253 = vshrl.u32 %v7252, 7
      %v7254 = vsub.s32 %v4119, %v7253
      %v7255 = vrot.slane %v7124, %v7254
      %v7256 = vsel %vm4124, %v7255, %v7251
      %v7257 = vlaneseq
      %v7258 = vshrl.u32 %v7257, 7
      %v7259 = vsub.s32 %v4126, %v7258
      %v7260 = vrot.slane %v7127, %v7259
      %v7261 = vsel %vm4131, %v7260, %v7256
      %v7262 = vlaneseq
      %v7263 = vshrl.u32 %v7262, 7
      %v7264 = vsub.s32 %v4133, %v7263
      %v7265 = vrot.slane %v7130, %v7264
      %v7266 = vsel %vm4138, %v7265, %v7261
      %v7267 = vlaneseq
      %v7268 = vshrl.u32 %v7267, 7
      %v7269 = vsub.s32 %v4140, %v7268
      %v7270 = vrot.slane %v7133, %v7269
      %v7271 = vsel %vm4145, %v7270, %v7266
      %v7272 = vlaneseq
      %v7273 = vshrl.u32 %v7272, 7
      %v7274 = vsub.s32 %v4147, %v7273
      %v7275 = vrot.slane %v7136, %v7274
      %v7276 = vsel %vm4152, %v7275, %v7271
      %v7277 = vlaneseq
      %v7278 = vshrl.u32 %v7277, 7
      %v7279 = vsub.s32 %v4154, %v7278
      %v7280 = vrot.slane %v7139, %v7279
      %v7281 = vsel %vm4159, %v7280, %v7276
      %v7282 = vlaneseq
      %v7283 = vshrl.u32 %v7282, 7
      %v7284 = vsub.s32 %v4161, %v7283
      %v7285 = vrot.slane %v7142, %v7284
      %v7286 = vsel %vm4166, %v7285, %v7281
      %v7287 = vlaneseq
      %v7288 = vshrl.u32 %v7287, 7
      %v7289 = vsub.s32 %v4168, %v7288
      %v7290 = vrot.slane %v7145, %v7289
      %v7291 = vsel %vm4173, %v7290, %v7286
      %v7292 = vlaneseq
      %v7293 = vshrl.u32 %v7292, 7
      %v7294 = vsub.s32 %v4175, %v7293
      %v7295 = vrot.slane %v7148, %v7294
      %v7296 = vsel %vm4180, %v7295, %v7291
      %v7297 = vlaneseq
      %v7298 = vshrl.u32 %v7297, 7
      %v7299 = vsub.s32 %v4182, %v7298
      %v7300 = vrot.slane %v7151, %v7299
      %v7301 = vsel %vm4187, %v7300, %v7296
      %v7302 = vlaneseq
      %v7303 = vshrl.u32 %v7302, 7
      %v7304 = vsub.s32 %v4189, %v7303
      %v7305 = vrot.slane %v7154, %v7304
      %v7306 = vsel %vm4194, %v7305, %v7301
      %v7307 = vlaneseq
      %v7308 = vshrl.u32 %v7307, 7
      %v7309 = vsub.s32 %v4196, %v7308
      %v7310 = vrot.slane %v7157, %v7309
      %v7311 = vsel %vm4201, %v7310, %v7306
      %v7312 = vlaneseq
      %v7313 = vshrl.u32 %v7312, 7
      %v7314 = vsub.s32 %v4203, %v7313
      %v7315 = vrot.slane %v7160, %v7314
      %v7316 = vsel %vm4208, %v7315, %v7311
      %v7317 = vlaneseq
      %v7318 = vshrl.u32 %v7317, 7
      %v7319 = vsub.s32 %v4210, %v7318
      %v7320 = vrot.slane %v7163, %v7319
      %v7321 = vsel %vm4215, %v7320, %v7316
      %v7322 = vcombine.low %v7242, %v7321
      %v7324 = vunpack.c.l.s4 1966171168
      %v7325 = vunpack.c.0.s8 %v7324
      %v7326 = vlaneseq
      %v7327 = vshrl.u32 %v7326, 7
      %v7328 = vsub.s32 %v7325, %v7327
      %v7329 = vrot.slane %v7322, %v7328
      %v7331 = vunpack.c.l.s4 1966171168
      %v7332 = vunpack.c.0.s8 %v7331
      %v7333 = vlaneseq
      %v7334 = vshrl.u32 %v7333, 7
      %v7335 = vsub.s32 %v7332, %v7334
      %v7336 = vrot.slane %v7329, %v7335
      %7338 = vst.msk [vmem:[%s249] sm:$0x3] %vm4314, %v7336
      %s7339 = smul.u32 32, %s17
      %p7340 = scmp.lt.s32.totalorder %s7339, 63
      %s7341 = scalar_select %p7340, %s7339, 63
      %s7342 = smul.addr %s7341, 8
      %s7343 = scalar_lea.vmem %s3, %s7342
      %s7344 = smul.u32 2, %s17
      %p7345 = scmp.lt.s32.totalorder %s7344, 3
      %s7346 = scalar_select %p7345, %s7344, 3
      %s7347 = scalar_lea.vmem %s4, %s7346
      %s7348 = smul.u32 2, %s17
      %p7349 = scmp.lt.s32.totalorder %s7348, 3
      %s7350 = scalar_select %p7349, %s7348, 3
      %s7351 = scalar_lea.vmem %s5, %s7350
      // Predicated region
      $region33: #{codebook_forward.1} parent=31 // pred_check
        %p7352 = pneg %p103
      $region34: #{codebook_forward.1} parent=31 // pred_check_branch
        %7354 = sbr.rel (%p7352) target = $region36
      $region35: #{codebook_forward.1} parent=31 // pred_region
        %s7355 = smul.u32 32, %s17
      $region36: #{codebook_forward.1} parent=31 // pred_fallthru
        _
      // Predicated region
      $region37: #{codebook_forward.1} parent=31 // pred_check
        %p7356 = pneg %p129
      $region38: #{codebook_forward.1} parent=31 // pred_check_branch
        %7358 = sbr.rel (%p7356) target = $region40
      $region39: #{codebook_forward.1} parent=31 // pred_region
        %s7359 = smul.u32 2, %s17
      $region40: #{codebook_forward.1} parent=31 // pred_fallthru
        _
      // Predicated region
      $region41: #{codebook_forward.1} parent=31 // pred_check
        %p7360 = pneg %p155
      $region42: #{codebook_forward.1} parent=31 // pred_check_branch
        %7362 = sbr.rel (%p7360) target = $region44
      $region43: #{codebook_forward.1} parent=31 // pred_region
        %s7363 = smul.u32 2, %s17
      $region44: #{codebook_forward.1} parent=31 // pred_fallthru
        _
    $region32: #{codebook_forward.1} parent=5 // pred_fallthru
      _
    %p7364 = scmp.le.s32.totalorder 2, %s12
    // Predicated region
    $region45: #{codebook_forward.1} parent=5 // pred_check
      %p7365 = pneg %p7364
    $region46: #{codebook_forward.1} parent=5 // pred_check_branch
      %7367 = sbr.rel (%p7365) target = $region48
    $region47: #{codebook_forward.1} parent=5 // pred_region
      %s7368 = ssub.s32 %s12, 2
      // Predicated region
      $region49: #{codebook_forward.1} parent=47 // pred_check
        %p7369 = pneg %p109
      $region50: #{codebook_forward.1} parent=47 // pred_check_branch
        %7371 = sbr.rel (%p7369) target = $region52
      $region51: #{codebook_forward.1} parent=47 // pred_region
        %s7372 = smul.u32 32, %s18
        %p7373 = scmp.lt.s32.totalorder %s7372, 63
        %s7374 = scalar_select %p7373, %s7372, 63
        %s7375 = smul.addr %s7374, 8
        %s7376 = scalar_lea.vmem %s3, %s7375
      $region52: #{codebook_forward.1} parent=47 // pred_fallthru
        _
      // Predicated region
      $region53: #{codebook_forward.1} parent=47 // pred_check
        %p7377 = pneg %p135
      $region54: #{codebook_forward.1} parent=47 // pred_check_branch
        %7379 = sbr.rel (%p7377) target = $region56
      $region55: #{codebook_forward.1} parent=47 // pred_region
        %s7380 = smul.u32 2, %s18
        %p7381 = scmp.lt.s32.totalorder %s7380, 3
        %s7382 = scalar_select %p7381, %s7380, 3
        %s7383 = scalar_lea.vmem %s4, %s7382
      $region56: #{codebook_forward.1} parent=47 // pred_fallthru
        _
      // Predicated region
      $region57: #{codebook_forward.1} parent=47 // pred_check
        %p7384 = pneg %p161
      $region58: #{codebook_forward.1} parent=47 // pred_check_branch
        %7386 = sbr.rel (%p7384) target = $region60
      $region59: #{codebook_forward.1} parent=47 // pred_region
        %s7387 = smul.u32 2, %s18
        %p7388 = scmp.lt.s32.totalorder %s7387, 3
        %s7389 = scalar_select %p7388, %s7387, 3
        %s7390 = scalar_lea.vmem %s5, %s7389
      $region60: #{codebook_forward.1} parent=47 // pred_fallthru
        _
    $region48: #{codebook_forward.1} parent=5 // pred_fallthru
      _
  $region6: #{codebook_forward.1} parent=0 // loop_footer
    %s16 = sadd.s32 1, %s12
  $region7: #{codebook_forward.1} parent=0 // loop_footer_branch
    %11 = sbr.rel target = $region3
  $region8: #{codebook_forward.1} parent=0 // loop_exit
    _

</llo_original>
